<compile_context>
chip_gen: v7x
topology: tpu7x:2x2x1
jax: 0.10.0
libtpu: 0.0.40
codegen_flags: <defaults>
</compile_context>

<pallas_src>
import jax
import jax.numpy as jnp
from jax.experimental import pallas as pl
from jax.experimental.pallas import tpu as pltpu

EPS = 1e-5


# --------------------------------------------------------------------------
# Pass 1: direct conv3x3 (9 accumulating bf16 matmuls) + per-channel sum/sumsq
# --------------------------------------------------------------------------
def _conv3x3_stats_kernel(x_ref, w_ref, y_ref, sum_ref, ssq_ref):
    # x_ref:   (1, H+2, W+2, Cin_p)  bf16   (halo'd NHWC tile, one image per step)
    # w_ref:   (3, 3, Cin_p, Cout_p) bf16   (resident)
    # y_ref:   (1, H*W, Cout_p)      f32
    # sum_ref/ssq_ref: (1, Cout_p)   f32    (resident accumulators across the grid)
    @pl.when(pl.program_id(0) == 0)
    def _():
        sum_ref[...] = jnp.zeros_like(sum_ref)
        ssq_ref[...] = jnp.zeros_like(ssq_ref)

    xp = x_ref[0]                                   # (H+2, W+2, Cin_p) bf16
    hp, wp, cin = xp.shape
    h, w = hp - 2, wp - 2
    cout = y_ref.shape[-1]

    acc = jnp.zeros((h * w, cout), jnp.float32)
    for dy in range(3):                             # static unroll -> 9 MXU matmuls
        for dx in range(3):
            win = xp[dy:dy + h, dx:dx + w, :].reshape(h * w, cin)
            acc = acc + jnp.dot(win, w_ref[dy, dx],
                                preferred_element_type=jnp.float32)

    y_ref[0] = acc
    sum_ref[...] += jnp.sum(acc, axis=0, keepdims=True)
    ssq_ref[...] += jnp.sum(acc * acc, axis=0, keepdims=True)


def _conv3x3_with_stats(xpad_bf16, w_bf16):
    n, hp, wp, cin = xpad_bf16.shape
    h, w = hp - 2, wp - 2
    cout = w_bf16.shape[-1]
    hw = h * w
    return pl.pallas_call(
        _conv3x3_stats_kernel,
        out_shape=(
            jax.ShapeDtypeStruct((n, hw, cout), jnp.float32),
            jax.ShapeDtypeStruct((1, cout), jnp.float32),
            jax.ShapeDtypeStruct((1, cout), jnp.float32),
        ),
        grid=(n,),
        in_specs=[
            pl.BlockSpec((1, hp, wp, cin), lambda i: (i, 0, 0, 0)),
            pl.BlockSpec((3, 3, cin, cout), lambda i: (0, 0, 0, 0)),   # resident
        ],
        out_specs=(
            pl.BlockSpec((1, hw, cout), lambda i: (i, 0, 0)),
            pl.BlockSpec((1, cout), lambda i: (0, 0)),                 # resident accumulator
            pl.BlockSpec((1, cout), lambda i: (0, 0)),                 # resident accumulator
        ),
        compiler_params=pltpu.CompilerParams(
            dimension_semantics=("arbitrary",)),    # reduction across the batch axis
    )(xpad_bf16, w_bf16)


# --------------------------------------------------------------------------
# Pass 2: tiled  y*scale + shift (+ residual) + ReLU   (f32 epilogue)
# --------------------------------------------------------------------------
def _bn_relu_kernel(y_ref, sc_ref, sh_ref, o_ref):
    o_ref[...] = jnp.maximum(y_ref[...] * sc_ref[...] + sh_ref[...],
                             0.0).astype(o_ref.dtype)


def _bn_add_relu_kernel(y_ref, sc_ref, sh_ref, r_ref, o_ref):
    out = y_ref[...] * sc_ref[...] + sh_ref[...] + r_ref[...]
    o_ref[...] = jnp.maximum(out, 0.0).astype(o_ref.dtype)


def _pick_tile_m(m):
    for t in (2048, 1024, 512, 256, 128, 64, 32, 16, 8):
        if m % t == 0 and (m // t) >= 2:
            return t
    return m


def _bn_affine_relu(y2d, scale, shift, residual=None, out_dtype=jnp.float32):
    m, cp = y2d.shape
    tile_m = _pick_tile_m(m)
    in_specs = [
        pl.BlockSpec((tile_m, cp), lambda i: (i, 0)),
        pl.BlockSpec((1, cp), lambda i: (0, 0)),     # resident scale
        pl.BlockSpec((1, cp), lambda i: (0, 0)),     # resident shift
    ]
    args = [y2d, scale, shift]
    if residual is None:
        kernel = _bn_relu_kernel
    else:
        kernel = _bn_add_relu_kernel
        in_specs.append(pl.BlockSpec((tile_m, cp), lambda i: (i, 0)))
        args.append(residual)
    return pl.pallas_call(
        kernel,
        out_shape=jax.ShapeDtypeStruct((m, cp), out_dtype),
        grid=(m // tile_m,),
        in_specs=in_specs,
        out_specs=pl.BlockSpec((tile_m, cp), lambda i: (i, 0)),
        compiler_params=pltpu.CompilerParams(
            dimension_semantics=("parallel",)),
    )(*args)


# --------------------------------------------------------------------------
# Glue (tiny per-channel math + layout; no heavy XLA compute)
# --------------------------------------------------------------------------
def _round_up(x, m):
    return (x + m - 1) // m * m


def _prep_weight(w_oihw, cp):
    """(Cout, Cin, 3, 3) -> (3, 3, Cin_p, Cout_p) bf16 matching the kernel loop order."""
    cout, cin, _, _ = w_oihw.shape
    wm = jnp.transpose(w_oihw, (2, 3, 1, 0))
    wm = jnp.pad(wm, ((0, 0), (0, 0), (0, cp - cin), (0, cp - cout)))
    return wm.astype(jnp.bfloat16)


def _finalize_bn(s, ssq, gamma, beta, m_rows, cp):
    """Fold training-mode BN (biased var, eps=1e-5) into per-channel scale/shift (f32)."""
    c = gamma.shape[0]
    mean = s / float(m_rows)
    # single-pass variance in f32; clamp tiny negative values from cancellation
    var = jnp.maximum(ssq / float(m_rows) - mean * mean, 0.0)
    inv_std = jax.lax.rsqrt(var + EPS)
    gp = jnp.pad(gamma, (0, cp - c)).reshape(1, cp)   # padded channels: gamma=0 -> output 0
    bp = jnp.pad(beta, (0, cp - c)).reshape(1, cp)
    scale = gp * inv_std
    shift = bp - mean * scale
    return scale, shift


@jax.jit
def basic_block_forward(x_nchw, w1, g1, b1, w2, g2, b2):
    """BasicBlock forward.  x_nchw: (N, C, H, W) f32, stride=1, no downsample."""
    n, c, h, w = x_nchw.shape
    cout = w1.shape[0]                                  # inplanes == planes
    cp = _round_up(max(c, cout, 128), 128)              # lane-dense channel dim
    m = n * h * w

    x_nhwc = jnp.transpose(x_nchw, (0, 2, 3, 1))                    # NCHW -> NHWC (once)
    x_cp = jnp.pad(x_nhwc, ((0, 0), (0, 0), (0, 0), (0, cp - c)))   # channel pad
    residual = x_cp.reshape(m, cp)                                  # identity shortcut (same data)

    # conv1 -> bn1 -> relu
    # TODO(synk): fold the spatial halo pad into the kernel DMA (edge-masked loads)
    xpad1 = jnp.pad(x_cp.astype(jnp.bfloat16), ((0, 0), (1, 1), (1, 1), (0, 0)))
    y1, s1, q1 = _conv3x3_with_stats(xpad1, _prep_weight(w1, cp))
    scale1, shift1 = _finalize_bn(s1, q1, g1, b1, m, cp)
    out1 = _bn_affine_relu(y1.reshape(m, cp), scale1, shift1,
                           out_dtype=jnp.bfloat16)                  # bf16 feed for conv2

    # conv2 -> bn2 -> + residual -> relu
    xpad2 = jnp.pad(out1.reshape(n, h, w, cp), ((0, 0), (1, 1), (1, 1), (0, 0)))
    y2, s2, q2 = _conv3x3_with_stats(xpad2, _prep_weight(w2, cp))
    scale2, shift2 = _finalize_bn(s2, q2, g2, b2, m, cp)
    out2 = _bn_affine_relu(y2.reshape(m, cp), scale2, shift2,
                           residual=residual, out_dtype=jnp.float32)

    out = out2.reshape(n, h, w, cp)[..., :cout]
    return jnp.transpose(out, (0, 3, 1, 2))                         # back to NCHW


# --------------------------------------------------------------------------
# Pure-JAX references (correctness check only)
# --------------------------------------------------------------------------
def _ref_conv3x3(x_nchw, wt, compute_dtype):
    return jax.lax.conv_general_dilated(
        x_nchw.astype(compute_dtype), wt.astype(compute_dtype),
        window_strides=(1, 1), padding=((1, 1), (1, 1)),
        dimension_numbers=("NCHW", "OIHW", "NCHW"),
        preferred_element_type=jnp.float32)


def _ref_bn_train(y, g, b):
    mean = y.mean(axis=(0, 2, 3), keepdims=True)
    var = ((y - mean) ** 2).mean(axis=(0, 2, 3), keepdims=True)
    return (y - mean) / jnp.sqrt(var + EPS) * g.reshape(1, -1, 1, 1) + b.reshape(1, -1, 1, 1)


def _reference(x, w1, g1, b1, w2, g2, b2, compute_dtype=jnp.float32):
    out = jnp.maximum(_ref_bn_train(_ref_conv3x3(x, w1, compute_dtype), g1, b1), 0.0)
    out = _ref_bn_train(_ref_conv3x3(out, w2, compute_dtype), g2, b2) + x
    return jnp.maximum(out, 0.0)


# --------------------------------------------------------------------------
if __name__ == "__main__":
    N, C, H, W = 2, 8, 16, 16          # inplanes == planes == 8, stride=1
    key = jax.random.PRNGKey(0)
    kx, kw1, kw2 = jax.random.split(key, 3)

    x = jax.random.normal(kx, (N, C, H, W), dtype=jnp.float32)
    wscale = (2.0 / (C * 9)) ** 0.5
    w1 = wscale * jax.random.normal(kw1, (C, C, 3, 3), dtype=jnp.float32)
    w2 = wscale * jax.random.normal(kw2, (C, C, 3, 3), dtype=jnp.float32)
    # BatchNorm default init: weight=1, bias=0
    g1 = jnp.ones((C,), jnp.float32)
    b1 = jnp.zeros((C,), jnp.float32)
    g2 = jnp.ones((C,), jnp.float32)
    b2 = jnp.zeros((C,), jnp.float32)

    out = jax.block_until_ready(basic_block_forward(x, w1, g1, b1, w2, g2, b2))
    assert out.shape == (N, C, H, W), out.shape

    # bf16-matched reference (same MXU input precision, f32 accumulation + f32 BN)
    ref_bf16 = _reference(x, w1, g1, b1, w2, g2, b2, compute_dtype=jnp.bfloat16)
    err_bf16 = float(jnp.max(jnp.abs(out - ref_bf16)))
    assert jnp.allclose(out, ref_bf16, atol=1e-2, rtol=1e-2), err_bf16

    # f32 reference sanity check (loose: kernel deliberately feeds the MXU in bf16)
    ref_f32 = _reference(x, w1, g1, b1, w2, g2, b2, compute_dtype=jnp.float32)
    err_f32 = float(jnp.max(jnp.abs(out - ref_f32)))
    assert err_f32 < 0.3, err_f32

    print("KERNEL_OK")
</pallas_src>

<mosaic_0001>
module attributes {stable_mosaic.version = 11 : i64} {
  func.func @_conv3x3_stats_kernel(%arg0: i32, %arg1: memref<1x18x18x128xbf16, #tpu.memory_space<vmem>>, %arg2: memref<3x3x128x128xbf16, #tpu.memory_space<vmem>>, %arg3: memref<1x256x128xf32, #tpu.memory_space<vmem>>, %arg4: memref<1x128xf32, #tpu.memory_space<vmem>>, %arg5: memref<1x128xf32, #tpu.memory_space<vmem>>) attributes {dimension_semantics = [#tpu.dimension_semantics<arbitrary>], iteration_bounds = array<i64: 2>, scalar_prefetch = 0 : i64, scratch_operands = 0 : i64, tpu.core_type = #tpu.core_type<tc>, window_params = [{transform_indices = @transform_0, window_bounds = array<i64: 1, 18, 18, 128>}, {pipeline_mode = #tpu.pipeline_mode<synchronous>, transform_indices = @transform_1, window_bounds = array<i64: 3, 3, 128, 128>}, {transform_indices = @transform_2, window_bounds = array<i64: 1, 256, 128>}, {pipeline_mode = #tpu.pipeline_mode<synchronous>, transform_indices = @transform_3, window_bounds = array<i64: 1, 128>}, {pipeline_mode = #tpu.pipeline_mode<synchronous>, transform_indices = @transform_4, window_bounds = array<i64: 1, 128>}]} {
    %c0_i32 = arith.constant 0 : i32
    %0 = arith.cmpi eq, %arg0, %c0_i32 : i32
    %1 = arith.extui %0 : i1 to i32
    %c0_i32_0 = arith.constant 0 : i32
    %2 = arith.cmpi ne, %1, %c0_i32_0 : i32
    scf.if %2 {
      %cst_60 = arith.constant 0.000000e+00 : f32
      %74 = vector.broadcast %cst_60 : f32 to vector<1x128xf32>
      %c0_61 = arith.constant 0 : index
      %c0_62 = arith.constant 0 : index
      %75 = vector.load %arg4[%c0_61, %c0_62] : memref<1x128xf32, #tpu.memory_space<vmem>>, vector<1x128xf32>
      tpu.vector_store %arg4[%c0_61, %c0_62], %74 {strides = array<i32>} : memref<1x128xf32, #tpu.memory_space<vmem>>, vector<1x128xf32>,
      %cst_63 = arith.constant 0.000000e+00 : f32
      %76 = vector.broadcast %cst_63 : f32 to vector<1x128xf32>
      %c0_64 = arith.constant 0 : index
      %c0_65 = arith.constant 0 : index
      %77 = vector.load %arg5[%c0_64, %c0_65] : memref<1x128xf32, #tpu.memory_space<vmem>>, vector<1x128xf32>
      tpu.vector_store %arg5[%c0_64, %c0_65], %76 {strides = array<i32>} : memref<1x128xf32, #tpu.memory_space<vmem>>, vector<1x128xf32>,
    } else {
    }
    %c0 = arith.constant 0 : index
    %c0_1 = arith.constant 0 : index
    %c0_2 = arith.constant 0 : index
    %c0_3 = arith.constant 0 : index
    %3 = vector.load %arg1[%c0, %c0_1, %c0_2, %c0_3] : memref<1x18x18x128xbf16, #tpu.memory_space<vmem>>, vector<1x18x18x128xbf16>
    %4 = vector.shape_cast %3 : vector<1x18x18x128xbf16> to vector<18x18x128xbf16>
    %cst = arith.constant 0.000000e+00 : f32
    %5 = vector.broadcast %cst : f32 to vector<256x128xf32>
    %6 = vector.extract_strided_slice %4 {offsets = [0, 0, 0], sizes = [16, 16, 128], strides = [1, 1, 1]} : vector<18x18x128xbf16> to vector<16x16x128xbf16>
    %7 = vector.shape_cast %6 : vector<16x16x128xbf16> to vector<256x128xbf16>
    %c0_4 = arith.constant 0 : index
    %c0_5 = arith.constant 0 : index
    %c0_6 = arith.constant 0 : index
    %c0_7 = arith.constant 0 : index
    %8 = vector.load %arg2[%c0_4, %c0_5, %c0_6, %c0_7] : memref<3x3x128x128xbf16, #tpu.memory_space<vmem>>, vector<1x1x128x128xbf16>
    %9 = vector.shape_cast %8 : vector<1x1x128x128xbf16> to vector<128x128xbf16>
    %cst_8 = arith.constant dense<0.000000e+00> : vector<256x128xf32>
    %10 = tpu.matmul %7, %9, %cst_8 {dimension_numbers = #tpu.dot_dimension_numbers<[1], [0], [0], [1], [0, 0, 1, 1], [], []>} : vector<256x128xbf16>, vector<128x128xbf16>, vector<256x128xf32> -> vector<256x128xf32>
    %11 = arith.addf %5, %10 : vector<256x128xf32>
    %12 = vector.extract_strided_slice %4 {offsets = [0, 1, 0], sizes = [16, 16, 128], strides = [1, 1, 1]} : vector<18x18x128xbf16> to vector<16x16x128xbf16>
    %13 = vector.shape_cast %12 : vector<16x16x128xbf16> to vector<256x128xbf16>
    %c0_9 = arith.constant 0 : index
    %c1 = arith.constant 1 : index
    %c0_10 = arith.constant 0 : index
    %c0_11 = arith.constant 0 : index
    %14 = vector.load %arg2[%c0_9, %c1, %c0_10, %c0_11] : memref<3x3x128x128xbf16, #tpu.memory_space<vmem>>, vector<1x1x128x128xbf16>
    %15 = vector.shape_cast %14 : vector<1x1x128x128xbf16> to vector<128x128xbf16>
    %cst_12 = arith.constant dense<0.000000e+00> : vector<256x128xf32>
    %16 = tpu.matmul %13, %15, %cst_12 {dimension_numbers = #tpu.dot_dimension_numbers<[1], [0], [0], [1], [0, 0, 1, 1], [], []>} : vector<256x128xbf16>, vector<128x128xbf16>, vector<256x128xf32> -> vector<256x128xf32>
    %17 = arith.addf %11, %16 : vector<256x128xf32>
    %18 = vector.extract_strided_slice %4 {offsets = [0, 2, 0], sizes = [16, 16, 128], strides = [1, 1, 1]} : vector<18x18x128xbf16> to vector<16x16x128xbf16>
    %19 = vector.shape_cast %18 : vector<16x16x128xbf16> to vector<256x128xbf16>
    %c0_13 = arith.constant 0 : index
    %c2 = arith.constant 2 : index
    %c0_14 = arith.constant 0 : index
    %c0_15 = arith.constant 0 : index
    %20 = vector.load %arg2[%c0_13, %c2, %c0_14, %c0_15] : memref<3x3x128x128xbf16, #tpu.memory_space<vmem>>, vector<1x1x128x128xbf16>
    %21 = vector.shape_cast %20 : vector<1x1x128x128xbf16> to vector<128x128xbf16>
    %cst_16 = arith.constant dense<0.000000e+00> : vector<256x128xf32>
    %22 = tpu.matmul %19, %21, %cst_16 {dimension_numbers = #tpu.dot_dimension_numbers<[1], [0], [0], [1], [0, 0, 1, 1], [], []>} : vector<256x128xbf16>, vector<128x128xbf16>, vector<256x128xf32> -> vector<256x128xf32>
    %23 = arith.addf %17, %22 : vector<256x128xf32>
    %24 = vector.extract_strided_slice %4 {offsets = [1, 0, 0], sizes = [16, 16, 128], strides = [1, 1, 1]} : vector<18x18x128xbf16> to vector<16x16x128xbf16>
    %25 = vector.shape_cast %24 : vector<16x16x128xbf16> to vector<256x128xbf16>
    %c1_17 = arith.constant 1 : index
    %c0_18 = arith.constant 0 : index
    %c0_19 = arith.constant 0 : index
    %c0_20 = arith.constant 0 : index
    %26 = vector.load %arg2[%c1_17, %c0_18, %c0_19, %c0_20] : memref<3x3x128x128xbf16, #tpu.memory_space<vmem>>, vector<1x1x128x128xbf16>
    %27 = vector.shape_cast %26 : vector<1x1x128x128xbf16> to vector<128x128xbf16>
    %cst_21 = arith.constant dense<0.000000e+00> : vector<256x128xf32>
    %28 = tpu.matmul %25, %27, %cst_21 {dimension_numbers = #tpu.dot_dimension_numbers<[1], [0], [0], [1], [0, 0, 1, 1], [], []>} : vector<256x128xbf16>, vector<128x128xbf16>, vector<256x128xf32> -> vector<256x128xf32>
    %29 = arith.addf %23, %28 : vector<256x128xf32>
    %30 = vector.extract_strided_slice %4 {offsets = [1, 1, 0], sizes = [16, 16, 128], strides = [1, 1, 1]} : vector<18x18x128xbf16> to vector<16x16x128xbf16>
    %31 = vector.shape_cast %30 : vector<16x16x128xbf16> to vector<256x128xbf16>
    %c1_22 = arith.constant 1 : index
    %c1_23 = arith.constant 1 : index
    %c0_24 = arith.constant 0 : index
    %c0_25 = arith.constant 0 : index
    %32 = vector.load %arg2[%c1_22, %c1_23, %c0_24, %c0_25] : memref<3x3x128x128xbf16, #tpu.memory_space<vmem>>, vector<1x1x128x128xbf16>
    %33 = vector.shape_cast %32 : vector<1x1x128x128xbf16> to vector<128x128xbf16>
    %cst_26 = arith.constant dense<0.000000e+00> : vector<256x128xf32>
    %34 = tpu.matmul %31, %33, %cst_26 {dimension_numbers = #tpu.dot_dimension_numbers<[1], [0], [0], [1], [0, 0, 1, 1], [], []>} : vector<256x128xbf16>, vector<128x128xbf16>, vector<256x128xf32> -> vector<256x128xf32>
    %35 = arith.addf %29, %34 : vector<256x128xf32>
    %36 = vector.extract_strided_slice %4 {offsets = [1, 2, 0], sizes = [16, 16, 128], strides = [1, 1, 1]} : vector<18x18x128xbf16> to vector<16x16x128xbf16>
    %37 = vector.shape_cast %36 : vector<16x16x128xbf16> to vector<256x128xbf16>
    %c1_27 = arith.constant 1 : index
    %c2_28 = arith.constant 2 : index
    %c0_29 = arith.constant 0 : index
    %c0_30 = arith.constant 0 : index
    %38 = vector.load %arg2[%c1_27, %c2_28, %c0_29, %c0_30] : memref<3x3x128x128xbf16, #tpu.memory_space<vmem>>, vector<1x1x128x128xbf16>
    %39 = vector.shape_cast %38 : vector<1x1x128x128xbf16> to vector<128x128xbf16>
    %cst_31 = arith.constant dense<0.000000e+00> : vector<256x128xf32>
    %40 = tpu.matmul %37, %39, %cst_31 {dimension_numbers = #tpu.dot_dimension_numbers<[1], [0], [0], [1], [0, 0, 1, 1], [], []>} : vector<256x128xbf16>, vector<128x128xbf16>, vector<256x128xf32> -> vector<256x128xf32>
    %41 = arith.addf %35, %40 : vector<256x128xf32>
    %42 = vector.extract_strided_slice %4 {offsets = [2, 0, 0], sizes = [16, 16, 128], strides = [1, 1, 1]} : vector<18x18x128xbf16> to vector<16x16x128xbf16>
    %43 = vector.shape_cast %42 : vector<16x16x128xbf16> to vector<256x128xbf16>
    %c2_32 = arith.constant 2 : index
    %c0_33 = arith.constant 0 : index
    %c0_34 = arith.constant 0 : index
    %c0_35 = arith.constant 0 : index
    %44 = vector.load %arg2[%c2_32, %c0_33, %c0_34, %c0_35] : memref<3x3x128x128xbf16, #tpu.memory_space<vmem>>, vector<1x1x128x128xbf16>
    %45 = vector.shape_cast %44 : vector<1x1x128x128xbf16> to vector<128x128xbf16>
    %cst_36 = arith.constant dense<0.000000e+00> : vector<256x128xf32>
    %46 = tpu.matmul %43, %45, %cst_36 {dimension_numbers = #tpu.dot_dimension_numbers<[1], [0], [0], [1], [0, 0, 1, 1], [], []>} : vector<256x128xbf16>, vector<128x128xbf16>, vector<256x128xf32> -> vector<256x128xf32>
    %47 = arith.addf %41, %46 : vector<256x128xf32>
    %48 = vector.extract_strided_slice %4 {offsets = [2, 1, 0], sizes = [16, 16, 128], strides = [1, 1, 1]} : vector<18x18x128xbf16> to vector<16x16x128xbf16>
    %49 = vector.shape_cast %48 : vector<16x16x128xbf16> to vector<256x128xbf16>
    %c2_37 = arith.constant 2 : index
    %c1_38 = arith.constant 1 : index
    %c0_39 = arith.constant 0 : index
    %c0_40 = arith.constant 0 : index
    %50 = vector.load %arg2[%c2_37, %c1_38, %c0_39, %c0_40] : memref<3x3x128x128xbf16, #tpu.memory_space<vmem>>, vector<1x1x128x128xbf16>
    %51 = vector.shape_cast %50 : vector<1x1x128x128xbf16> to vector<128x128xbf16>
    %cst_41 = arith.constant dense<0.000000e+00> : vector<256x128xf32>
    %52 = tpu.matmul %49, %51, %cst_41 {dimension_numbers = #tpu.dot_dimension_numbers<[1], [0], [0], [1], [0, 0, 1, 1], [], []>} : vector<256x128xbf16>, vector<128x128xbf16>, vector<256x128xf32> -> vector<256x128xf32>
    %53 = arith.addf %47, %52 : vector<256x128xf32>
    %54 = vector.extract_strided_slice %4 {offsets = [2, 2, 0], sizes = [16, 16, 128], strides = [1, 1, 1]} : vector<18x18x128xbf16> to vector<16x16x128xbf16>
    %55 = vector.shape_cast %54 : vector<16x16x128xbf16> to vector<256x128xbf16>
    %c2_42 = arith.constant 2 : index
    %c2_43 = arith.constant 2 : index
    %c0_44 = arith.constant 0 : index
    %c0_45 = arith.constant 0 : index
    %56 = vector.load %arg2[%c2_42, %c2_43, %c0_44, %c0_45] : memref<3x3x128x128xbf16, #tpu.memory_space<vmem>>, vector<1x1x128x128xbf16>
    %57 = vector.shape_cast %56 : vector<1x1x128x128xbf16> to vector<128x128xbf16>
    %cst_46 = arith.constant dense<0.000000e+00> : vector<256x128xf32>
    %58 = tpu.matmul %55, %57, %cst_46 {dimension_numbers = #tpu.dot_dimension_numbers<[1], [0], [0], [1], [0, 0, 1, 1], [], []>} : vector<256x128xbf16>, vector<128x128xbf16>, vector<256x128xf32> -> vector<256x128xf32>
    %59 = arith.addf %53, %58 : vector<256x128xf32>
    %c0_47 = arith.constant 0 : index
    %c0_48 = arith.constant 0 : index
    %c0_49 = arith.constant 0 : index
    %60 = vector.load %arg3[%c0_47, %c0_48, %c0_49] : memref<1x256x128xf32, #tpu.memory_space<vmem>>, vector<1x256x128xf32>
    %61 = vector.shape_cast %60 : vector<1x256x128xf32> to vector<256x128xf32>
    %62 = vector.shape_cast %59 : vector<256x128xf32> to vector<1x256x128xf32>
    tpu.vector_store %arg3[%c0_47, %c0_48, %c0_49], %62 {strides = array<i32>} : memref<1x256x128xf32, #tpu.memory_space<vmem>>, vector<1x256x128xf32>,
    %c0_50 = arith.constant 0 : index
    %c0_51 = arith.constant 0 : index
    %63 = vector.load %arg4[%c0_50, %c0_51] : memref<1x128xf32, #tpu.memory_space<vmem>>, vector<1x128xf32>
    %cst_52 = arith.constant dense<0.000000e+00> : vector<128xf32>
    %64 = vector.multi_reduction <add>, %59, %cst_52 [0] : vector<256x128xf32> to vector<128xf32>
    %65 = vector.shape_cast %64 : vector<128xf32> to vector<1x128xf32>
    %66 = arith.addf %63, %65 : vector<1x128xf32>
    %c0_53 = arith.constant 0 : index
    %c0_54 = arith.constant 0 : index
    %67 = vector.load %arg4[%c0_53, %c0_54] : memref<1x128xf32, #tpu.memory_space<vmem>>, vector<1x128xf32>
    tpu.vector_store %arg4[%c0_53, %c0_54], %66 {strides = array<i32>} : memref<1x128xf32, #tpu.memory_space<vmem>>, vector<1x128xf32>,
    %c0_55 = arith.constant 0 : index
    %c0_56 = arith.constant 0 : index
    %68 = vector.load %arg5[%c0_55, %c0_56] : memref<1x128xf32, #tpu.memory_space<vmem>>, vector<1x128xf32>
    %69 = arith.mulf %59, %59 : vector<256x128xf32>
    %cst_57 = arith.constant dense<0.000000e+00> : vector<128xf32>
    %70 = vector.multi_reduction <add>, %69, %cst_57 [0] : vector<256x128xf32> to vector<128xf32>
    %71 = vector.shape_cast %70 : vector<128xf32> to vector<1x128xf32>
    %72 = arith.addf %68, %71 : vector<1x128xf32>
    %c0_58 = arith.constant 0 : index
    %c0_59 = arith.constant 0 : index
    %73 = vector.load %arg5[%c0_58, %c0_59] : memref<1x128xf32, #tpu.memory_space<vmem>>, vector<1x128xf32>
    tpu.vector_store %arg5[%c0_58, %c0_59], %72 {strides = array<i32>} : memref<1x128xf32, #tpu.memory_space<vmem>>, vector<1x128xf32>,
    return
  }
  func.func @transform_0(%arg0: i32) -> (i32, i32, i32, i32) {
    %c0_i32 = arith.constant 0 : i32
    %c0_i32_0 = arith.constant 0 : i32
    %c0_i32_1 = arith.constant 0 : i32
    %c0_i32_2 = arith.constant 0 : i32
    return %arg0, %c0_i32, %c0_i32_0, %c0_i32_1 : i32, i32, i32, i32
  }
  func.func @transform_1(%arg0: i32) -> (i32, i32, i32, i32) {
    %c0_i32 = arith.constant 0 : i32
    %c0_i32_0 = arith.constant 0 : i32
    %c0_i32_1 = arith.constant 0 : i32
    %c0_i32_2 = arith.constant 0 : i32
    %c0_i32_3 = arith.constant 0 : i32
    return %c0_i32, %c0_i32_0, %c0_i32_1, %c0_i32_2 : i32, i32, i32, i32
  }
  func.func @transform_2(%arg0: i32) -> (i32, i32, i32) {
    %c0_i32 = arith.constant 0 : i32
    %c0_i32_0 = arith.constant 0 : i32
    %c0_i32_1 = arith.constant 0 : i32
    return %arg0, %c0_i32, %c0_i32_0 : i32, i32, i32
  }
  func.func @transform_3(%arg0: i32) -> (i32, i32) {
    %c0_i32 = arith.constant 0 : i32
    %c0_i32_0 = arith.constant 0 : i32
    %c0_i32_1 = arith.constant 0 : i32
    return %c0_i32, %c0_i32_0 : i32, i32
  }
  func.func @transform_4(%arg0: i32) -> (i32, i32) {
    %c0_i32 = arith.constant 0 : i32
    %c0_i32_0 = arith.constant 0 : i32
    %c0_i32_1 = arith.constant 0 : i32
    return %c0_i32, %c0_i32_0 : i32, i32
  }
}

module attributes {stable_mosaic.version = 11 : i64} {
  func.func @_bn_relu_kernel(%arg0: i32, %arg1: memref<256x128xf32, #tpu.memory_space<vmem>>, %arg2: memref<1x128xf32, #tpu.memory_space<vmem>>, %arg3: memref<1x128xf32, #tpu.memory_space<vmem>>, %arg4: memref<256x128xbf16, #tpu.memory_space<vmem>>) attributes {dimension_semantics = [#tpu.dimension_semantics<parallel>], iteration_bounds = array<i64: 2>, scalar_prefetch = 0 : i64, scratch_operands = 0 : i64, tpu.core_type = #tpu.core_type<tc>, window_params = [{transform_indices = @transform_0, window_bounds = array<i64: 256, 128>}, {pipeline_mode = #tpu.pipeline_mode<synchronous>, transform_indices = @transform_1, window_bounds = array<i64: 1, 128>}, {pipeline_mode = #tpu.pipeline_mode<synchronous>, transform_indices = @transform_2, window_bounds = array<i64: 1, 128>}, {transform_indices = @transform_3, window_bounds = array<i64: 256, 128>}]} {
    %c0 = arith.constant 0 : index
    %c0_0 = arith.constant 0 : index
    %0 = vector.load %arg1[%c0, %c0_0] : memref<256x128xf32, #tpu.memory_space<vmem>>, vector<256x128xf32>
    %c0_1 = arith.constant 0 : index
    %c0_2 = arith.constant 0 : index
    %1 = vector.load %arg2[%c0_1, %c0_2] : memref<1x128xf32, #tpu.memory_space<vmem>>, vector<1x128xf32>
    %2 = vector.broadcast %1 : vector<1x128xf32> to vector<256x128xf32>
    %3 = arith.mulf %0, %2 : vector<256x128xf32>
    %c0_3 = arith.constant 0 : index
    %c0_4 = arith.constant 0 : index
    %4 = vector.load %arg3[%c0_3, %c0_4] : memref<1x128xf32, #tpu.memory_space<vmem>>, vector<1x128xf32>
    %5 = vector.broadcast %4 : vector<1x128xf32> to vector<256x128xf32>
    %6 = arith.addf %3, %5 : vector<256x128xf32>
    %cst = arith.constant 0.000000e+00 : f32
    %7 = vector.broadcast %cst : f32 to vector<256x128xf32>
    %8 = arith.maximumf %6, %7 : vector<256x128xf32>
    %9 = arith.truncf %8 : vector<256x128xf32> to vector<256x128xbf16>
    %c0_5 = arith.constant 0 : index
    %c0_6 = arith.constant 0 : index
    %10 = vector.load %arg4[%c0_5, %c0_6] : memref<256x128xbf16, #tpu.memory_space<vmem>>, vector<256x128xbf16>
    tpu.vector_store %arg4[%c0_5, %c0_6], %9 {strides = array<i32>} : memref<256x128xbf16, #tpu.memory_space<vmem>>, vector<256x128xbf16>,
    return
  }
  func.func @transform_0(%arg0: i32) -> (i32, i32) {
    %c0_i32 = arith.constant 0 : i32
    %c0_i32_0 = arith.constant 0 : i32
    return %arg0, %c0_i32 : i32, i32
  }
  func.func @transform_1(%arg0: i32) -> (i32, i32) {
    %c0_i32 = arith.constant 0 : i32
    %c0_i32_0 = arith.constant 0 : i32
    %c0_i32_1 = arith.constant 0 : i32
    return %c0_i32, %c0_i32_0 : i32, i32
  }
  func.func @transform_2(%arg0: i32) -> (i32, i32) {
    %c0_i32 = arith.constant 0 : i32
    %c0_i32_0 = arith.constant 0 : i32
    %c0_i32_1 = arith.constant 0 : i32
    return %c0_i32, %c0_i32_0 : i32, i32
  }
  func.func @transform_3(%arg0: i32) -> (i32, i32) {
    %c0_i32 = arith.constant 0 : i32
    %c0_i32_0 = arith.constant 0 : i32
    return %arg0, %c0_i32 : i32, i32
  }
}

module attributes {stable_mosaic.version = 11 : i64} {
  func.func @_bn_add_relu_kernel(%arg0: i32, %arg1: memref<256x128xf32, #tpu.memory_space<vmem>>, %arg2: memref<1x128xf32, #tpu.memory_space<vmem>>, %arg3: memref<1x128xf32, #tpu.memory_space<vmem>>, %arg4: memref<256x128xf32, #tpu.memory_space<vmem>>, %arg5: memref<256x128xf32, #tpu.memory_space<vmem>>) attributes {dimension_semantics = [#tpu.dimension_semantics<parallel>], iteration_bounds = array<i64: 2>, scalar_prefetch = 0 : i64, scratch_operands = 0 : i64, tpu.core_type = #tpu.core_type<tc>, window_params = [{transform_indices = @transform_0, window_bounds = array<i64: 256, 128>}, {pipeline_mode = #tpu.pipeline_mode<synchronous>, transform_indices = @transform_1, window_bounds = array<i64: 1, 128>}, {pipeline_mode = #tpu.pipeline_mode<synchronous>, transform_indices = @transform_2, window_bounds = array<i64: 1, 128>}, {transform_indices = @transform_3, window_bounds = array<i64: 256, 128>}, {transform_indices = @transform_4, window_bounds = array<i64: 256, 128>}]} {
    %c0 = arith.constant 0 : index
    %c0_0 = arith.constant 0 : index
    %0 = vector.load %arg1[%c0, %c0_0] : memref<256x128xf32, #tpu.memory_space<vmem>>, vector<256x128xf32>
    %c0_1 = arith.constant 0 : index
    %c0_2 = arith.constant 0 : index
    %1 = vector.load %arg2[%c0_1, %c0_2] : memref<1x128xf32, #tpu.memory_space<vmem>>, vector<1x128xf32>
    %2 = vector.broadcast %1 : vector<1x128xf32> to vector<256x128xf32>
    %3 = arith.mulf %0, %2 : vector<256x128xf32>
    %c0_3 = arith.constant 0 : index
    %c0_4 = arith.constant 0 : index
    %4 = vector.load %arg3[%c0_3, %c0_4] : memref<1x128xf32, #tpu.memory_space<vmem>>, vector<1x128xf32>
    %5 = vector.broadcast %4 : vector<1x128xf32> to vector<256x128xf32>
    %6 = arith.addf %3, %5 : vector<256x128xf32>
    %c0_5 = arith.constant 0 : index
    %c0_6 = arith.constant 0 : index
    %7 = vector.load %arg4[%c0_5, %c0_6] : memref<256x128xf32, #tpu.memory_space<vmem>>, vector<256x128xf32>
    %8 = arith.addf %6, %7 : vector<256x128xf32>
    %cst = arith.constant 0.000000e+00 : f32
    %9 = vector.broadcast %cst : f32 to vector<256x128xf32>
    %10 = arith.maximumf %8, %9 : vector<256x128xf32>
    %c0_7 = arith.constant 0 : index
    %c0_8 = arith.constant 0 : index
    %11 = vector.load %arg5[%c0_7, %c0_8] : memref<256x128xf32, #tpu.memory_space<vmem>>, vector<256x128xf32>
    tpu.vector_store %arg5[%c0_7, %c0_8], %10 {strides = array<i32>} : memref<256x128xf32, #tpu.memory_space<vmem>>, vector<256x128xf32>,
    return
  }
  func.func @transform_0(%arg0: i32) -> (i32, i32) {
    %c0_i32 = arith.constant 0 : i32
    %c0_i32_0 = arith.constant 0 : i32
    return %arg0, %c0_i32 : i32, i32
  }
  func.func @transform_1(%arg0: i32) -> (i32, i32) {
    %c0_i32 = arith.constant 0 : i32
    %c0_i32_0 = arith.constant 0 : i32
    %c0_i32_1 = arith.constant 0 : i32
    return %c0_i32, %c0_i32_0 : i32, i32
  }
  func.func @transform_2(%arg0: i32) -> (i32, i32) {
    %c0_i32 = arith.constant 0 : i32
    %c0_i32_0 = arith.constant 0 : i32
    %c0_i32_1 = arith.constant 0 : i32
    return %c0_i32, %c0_i32_0 : i32, i32
  }
  func.func @transform_3(%arg0: i32) -> (i32, i32) {
    %c0_i32 = arith.constant 0 : i32
    %c0_i32_0 = arith.constant 0 : i32
    return %arg0, %c0_i32 : i32, i32
  }
  func.func @transform_4(%arg0: i32) -> (i32, i32) {
    %c0_i32 = arith.constant 0 : i32
    %c0_i32_0 = arith.constant 0 : i32
    return %arg0, %c0_i32 : i32, i32
  }
}

</mosaic_0001>

<llo_original>
// kernel: basic_block_forward.5
$region0: #{basic_block_forward.5}
  #allocation0 [shape = 'u32[]', space=smem, size = 0x4, offset = 0x4, fixed_abs, tag = 'smem constant byte address 0x4 - core index']
  #allocation1 [shape = 'u32[144,128]{1,0:T(1,128)}', space=vmem, size = 0x12000, scoped, tag = 'internal scratch']
  %s0 = inlined_call_operand.vmem [shape: f32[512,128], index: 0, kind: input, shape index: {}]
  %s1 = inlined_call_operand.vmem [shape: f32[1,128], index: 1, kind: input, shape index: {}]
  %s2 = inlined_call_operand.vmem [shape: f32[1,128], index: 2, kind: input, shape index: {}]
  %s3 = inlined_call_operand.vmem [shape: bf16[512,128], index: 3, kind: output, shape index: {}]
  %s4 = sld [smem:[#allocation0]]
  $region45: #{basic_block_forward.5} parent=0
    _
  %s6 = ssub.s32 1, %s4
  %s7 = scalar_select 0, %s6, %s4
  loop: start=0, step=1, limit=4
  $region2: #{basic_block_forward.5} parent=0 // loop_pre_header
    _
  $region3: #{basic_block_forward.5} parent=0 // loop_header
    %s9 = sphi 0, %s13
    %p10 = scmp.ge.s32.totalorder %s9, 4
    %s19 = sphi 0, %s21
    %s22 = sphi 0, %s19
    %s23 = sphi 0, %s22
    %s39 = sphi 0, %s23
    %s43 = sphi 0, %s43
    %s45 = sphi 0, %s43
    %s46 = sphi 0, %s45
    %s60 = sphi 0, %s46
    %s64 = sphi 0, %s64
    %s66 = sphi 0, %s64
    %s67 = sphi 0, %s66
    %s81 = sphi 0, %s67
    %s87 = sphi 0, %s89
    %s90 = sphi 0, %s87
    %s91 = sphi 0, %s90
    %s107 = sphi 0, %s91
  $region4: #{basic_block_forward.5} parent=0 // loop_header_branch
    %12 = sbr.rel (%p10) target = $region8
  $region5: #{basic_block_forward.5} parent=0 // loop_body
    %s14 = ssub.s32 %s9, 1
    %s15 = ssub.s32 %s9, 2
    %s16 = sadd.s32 %s9, 1
    %s17 = ssub.s32 %s9, %s16
    %p18 = scmp.eq.s32.totalorder %s17, 0
    %s20 = sadd.s32 %s19, 1
    %s21 = scalar_select %p18, %s19, %s20
    %p24 = pneg %p18
    %p25 = scmp.eq.s32.totalorder %s9, 1
    %p26 = por %p24, %p25
    %p27 = scmp.ne.s32.totalorder %s19, %s22
    %p28 = scmp.eq.s32.totalorder %s9, 0
    %p29 = por %p27, %p28
    %p30 = scmp.ne.s32.totalorder %s19, %s22
    %p31 = scmp.eq.s32.totalorder %s14, 1
    %p32 = por %p30, %p31
    %p33 = scmp.ne.s32.totalorder %s22, %s23
    %p34 = scmp.eq.s32.totalorder %s14, 0
    %p35 = por %p33, %p34
    %p36 = scmp.ne.s32.totalorder %s22, %s23
    %p37 = scmp.eq.s32.totalorder %s15, 1
    %p38 = por %p36, %p37
    %p40 = scmp.ne.s32.totalorder %s23, %s39
    %p41 = scmp.eq.s32.totalorder %s15, 0
    %p42 = por %p40, %p41
    %s44 = sadd.s32 %s43, 1
    %p47 = scmp.eq.s32.totalorder %s9, 1
    %p48 = scmp.ne.s32.totalorder %s43, %s45
    %p49 = scmp.eq.s32.totalorder %s9, 0
    %p50 = por %p48, %p49
    %p51 = scmp.ne.s32.totalorder %s43, %s45
    %p52 = scmp.eq.s32.totalorder %s14, 1
    %p53 = por %p51, %p52
    %p54 = scmp.ne.s32.totalorder %s45, %s46
    %p55 = scmp.eq.s32.totalorder %s14, 0
    %p56 = por %p54, %p55
    %p57 = scmp.ne.s32.totalorder %s45, %s46
    %p58 = scmp.eq.s32.totalorder %s15, 1
    %p59 = por %p57, %p58
    %p61 = scmp.ne.s32.totalorder %s46, %s60
    %p62 = scmp.eq.s32.totalorder %s15, 0
    %p63 = por %p61, %p62
    %s65 = sadd.s32 %s64, 1
    %p68 = scmp.eq.s32.totalorder %s9, 1
    %p69 = scmp.ne.s32.totalorder %s64, %s66
    %p70 = scmp.eq.s32.totalorder %s9, 0
    %p71 = por %p69, %p70
    %p72 = scmp.ne.s32.totalorder %s64, %s66
    %p73 = scmp.eq.s32.totalorder %s14, 1
    %p74 = por %p72, %p73
    %p75 = scmp.ne.s32.totalorder %s66, %s67
    %p76 = scmp.eq.s32.totalorder %s14, 0
    %p77 = por %p75, %p76
    %p78 = scmp.ne.s32.totalorder %s66, %s67
    %p79 = scmp.eq.s32.totalorder %s15, 1
    %p80 = por %p78, %p79
    %p82 = scmp.ne.s32.totalorder %s67, %s81
    %p83 = scmp.eq.s32.totalorder %s15, 0
    %p84 = por %p82, %p83
    %s85 = ssub.s32 %s9, %s16
    %p86 = scmp.eq.s32.totalorder %s85, 0
    %s88 = sadd.s32 %s87, 1
    %s89 = scalar_select %p86, %s87, %s88
    %p92 = pneg %p86
    %p93 = scmp.eq.s32.totalorder %s9, 1
    %p94 = por %p92, %p93
    %p95 = scmp.ne.s32.totalorder %s87, %s90
    %p96 = scmp.eq.s32.totalorder %s9, 0
    %p97 = por %p95, %p96
    %p98 = scmp.ne.s32.totalorder %s87, %s90
    %p99 = scmp.eq.s32.totalorder %s14, 1
    %p100 = por %p98, %p99
    %p101 = scmp.ne.s32.totalorder %s90, %s91
    %p102 = scmp.eq.s32.totalorder %s14, 0
    %p103 = por %p101, %p102
    %p104 = scmp.ne.s32.totalorder %s90, %s91
    %p105 = scmp.eq.s32.totalorder %s15, 1
    %p106 = por %p104, %p105
    %p108 = scmp.ne.s32.totalorder %s91, %s107
    %p109 = scmp.eq.s32.totalorder %s15, 0
    %p110 = por %p108, %p109
    %p111 = scmp.le.s32.totalorder 1, %s9
    %p112 = scmp.lt.s32.totalorder %s9, 3
    %p113 = pnand %p111, %p112
    %p114 = pneg %p113
    // Predicated region
    $region9: #{basic_block_forward.5} parent=5 // pred_check
      _
    $region10: #{basic_block_forward.5} parent=5 // pred_check_branch
      %116 = sbr.rel (%p113) target = $region12
    $region11: #{basic_block_forward.5} parent=5 // pred_region
      %s117 = ssub.s32 %s9, 1
      // Predicated region
      $region13: #{basic_block_forward.5} parent=11 // pred_check
        %p118 = pneg %p56
      $region14: #{basic_block_forward.5} parent=11 // pred_check_branch
        %120 = sbr.rel (%p118) target = $region16
      $region15: #{basic_block_forward.5} parent=11 // pred_region
        _
      $region16: #{basic_block_forward.5} parent=11 // pred_fallthru
        _
      // Predicated region
      $region17: #{basic_block_forward.5} parent=11 // pred_check
        %p121 = pneg %p77
      $region18: #{basic_block_forward.5} parent=11 // pred_check_branch
        %123 = sbr.rel (%p121) target = $region20
      $region19: #{basic_block_forward.5} parent=11 // pred_region
        _
      $region20: #{basic_block_forward.5} parent=11 // pred_fallthru
        _
    $region12: #{basic_block_forward.5} parent=5 // pred_fallthru
      _
    %p124 = scmp.lt.s32.totalorder %s9, 2
    // Predicated region
    $region21: #{basic_block_forward.5} parent=5 // pred_check
      %p125 = pneg %p124
    $region22: #{basic_block_forward.5} parent=5 // pred_check_branch
      %127 = sbr.rel (%p125) target = $region24
    $region23: #{basic_block_forward.5} parent=5 // pred_region
      // Predicated region
      $region25: #{basic_block_forward.5} parent=23 // pred_check
        %p128 = pneg %p29
      $region26: #{basic_block_forward.5} parent=23 // pred_check_branch
        %130 = sbr.rel (%p128) target = $region28
      $region27: #{basic_block_forward.5} parent=23 // pred_region
        %s131 = smul.u32 32, %s9
        %p132 = scmp.lt.s32.totalorder %s131, 63
        %s133 = scalar_select %p132, %s131, 63
        %s134 = smul.addr %s133, 8
        %s135 = scalar_lea.vmem %s0, %s134
        %s136 = smul.u32 32, %s9
      $region28: #{basic_block_forward.5} parent=23 // pred_fallthru
        _
    $region24: #{basic_block_forward.5} parent=5 // pred_fallthru
      _
    %p137 = scmp.le.s32.totalorder 1, %s9
    %p138 = scmp.lt.s32.totalorder %s9, 3
    %p139 = pnand %p137, %p138
    %p140 = pneg %p139
    // Predicated region
    $region29: #{basic_block_forward.5} parent=5 // pred_check
      _
    $region30: #{basic_block_forward.5} parent=5 // pred_check_branch
      %142 = sbr.rel (%p139) target = $region32
    $region31: #{basic_block_forward.5} parent=5 // pred_region
      %s143 = ssub.s32 %s9, 1
      %s144 = smul.u32 32, %s14
      %p145 = scmp.lt.s32.totalorder %s144, 63
      %s146 = scalar_select %p145, %s144, 63
      %s147 = smul.addr %s146, 8
      %s148 = scalar_lea.vmem %s0, %s147
      %p149 = pneg %p35
      %p150 = pneg %p32
      %p151 = pneg %p56
      %p152 = pneg %p53
      %p153 = pneg %p77
      %p154 = pneg %p74
      %p155 = pneg %p103
      %p156 = pneg %p100
      %s157 = smul.u32 32, %s14
      %p158 = scmp.lt.s32.totalorder %s157, 63
      %s159 = scalar_select %p158, %s157, 63
      %s160 = smul.addr %s159, 4
      %s161 = scalar_lea.vmem %s3, %s160
      %s162 = smul.u32 32, %s14
      %p163 = scmp.lt.s32.totalorder %s162, 63
      %s164 = scalar_select %p163, %s162, 63
      %s165 = smul.addr %s164, 8
      %s166 = scalar_lea.vmem %s0, %s165
      %s167 = smul.u32 32, %s14
      %s168 = smul.u32 32, %s14
      %p169 = scmp.lt.s32.totalorder %s168, 63
      %s170 = scalar_select %p169, %s168, 63
      %s171 = smul.addr %s170, 4
      %s172 = scalar_lea.vmem %s3, %s171
      %s173 = smul.u32 32, %s14
      %v174 = vld [vmem:[%s166] sm:$0xff]
      %v175 = vld [vmem:[%s166 + $0x8] sm:$0xff]
      %v176 = vld [vmem:[%s166 + $0x10] sm:$0xff]
      %v177 = vld [vmem:[%s166 + $0x18] sm:$0xff]
      %v178 = vld [vmem:[%s166 + $0x20] sm:$0xff]
      %v179 = vld [vmem:[%s166 + $0x28] sm:$0xff]
      %v180 = vld [vmem:[%s166 + $0x30] sm:$0xff]
      %v181 = vld [vmem:[%s166 + $0x38] sm:$0xff]
      %v182 = vld [vmem:[%s166 + $0x40] sm:$0xff]
      %v183 = vld [vmem:[%s166 + $0x48] sm:$0xff]
      %v184 = vld [vmem:[%s166 + $0x50] sm:$0xff]
      %v185 = vld [vmem:[%s166 + $0x58] sm:$0xff]
      %v186 = vld [vmem:[%s166 + $0x60] sm:$0xff]
      %v187 = vld [vmem:[%s166 + $0x68] sm:$0xff]
      %v188 = vld [vmem:[%s166 + $0x70] sm:$0xff]
      %v189 = vld [vmem:[%s166 + $0x78] sm:$0xff]
      %v190 = vld [vmem:[%s166 + $0x80] sm:$0xff]
      %v191 = vld [vmem:[%s166 + $0x88] sm:$0xff]
      %v192 = vld [vmem:[%s166 + $0x90] sm:$0xff]
      %v193 = vld [vmem:[%s166 + $0x98] sm:$0xff]
      %v194 = vld [vmem:[%s166 + $0xa0] sm:$0xff]
      %v195 = vld [vmem:[%s166 + $0xa8] sm:$0xff]
      %v196 = vld [vmem:[%s166 + $0xb0] sm:$0xff]
      %v197 = vld [vmem:[%s166 + $0xb8] sm:$0xff]
      %v198 = vld [vmem:[%s166 + $0xc0] sm:$0xff]
      %v199 = vld [vmem:[%s166 + $0xc8] sm:$0xff]
      %v200 = vld [vmem:[%s166 + $0xd0] sm:$0xff]
      %v201 = vld [vmem:[%s166 + $0xd8] sm:$0xff]
      %v202 = vld [vmem:[%s166 + $0xe0] sm:$0xff]
      %v203 = vld [vmem:[%s166 + $0xe8] sm:$0xff]
      %v204 = vld [vmem:[%s166 + $0xf0] sm:$0xff]
      %v205 = vld [vmem:[%s166 + $0xf8] sm:$0xff]
      %v206 = vld [vmem:[%s1] sm:$0x1]
      %v208 = vlaneseq
      %v209 = vshrl.u32 %v208, 7
      %v210 = vsub.s32 0, %v209
      %v211 = vrot.slane %v206, %v210
      %v213 = vmul.f32 %v174, %v211
      %v214 = vmul.f32 %v175, %v211
      %v215 = vmul.f32 %v176, %v211
      %v216 = vmul.f32 %v177, %v211
      %v217 = vmul.f32 %v178, %v211
      %v218 = vmul.f32 %v179, %v211
      %v219 = vmul.f32 %v180, %v211
      %v220 = vmul.f32 %v181, %v211
      %v221 = vmul.f32 %v182, %v211
      %v222 = vmul.f32 %v183, %v211
      %v223 = vmul.f32 %v184, %v211
      %v224 = vmul.f32 %v185, %v211
      %v225 = vmul.f32 %v186, %v211
      %v226 = vmul.f32 %v187, %v211
      %v227 = vmul.f32 %v188, %v211
      %v228 = vmul.f32 %v189, %v211
      %v229 = vmul.f32 %v190, %v211
      %v230 = vmul.f32 %v191, %v211
      %v231 = vmul.f32 %v192, %v211
      %v232 = vmul.f32 %v193, %v211
      %v233 = vmul.f32 %v194, %v211
      %v234 = vmul.f32 %v195, %v211
      %v235 = vmul.f32 %v196, %v211
      %v236 = vmul.f32 %v197, %v211
      %v237 = vmul.f32 %v198, %v211
      %v238 = vmul.f32 %v199, %v211
      %v239 = vmul.f32 %v200, %v211
      %v240 = vmul.f32 %v201, %v211
      %v241 = vmul.f32 %v202, %v211
      %v242 = vmul.f32 %v203, %v211
      %v243 = vmul.f32 %v204, %v211
      %v244 = vmul.f32 %v205, %v211
      %v245 = vld [vmem:[%s2] sm:$0x1]
      %v247 = vlaneseq
      %v248 = vshrl.u32 %v247, 7
      %v249 = vsub.s32 0, %v248
      %v250 = vrot.slane %v245, %v249
      %v252 = vadd.f32 %v213, %v250
      %v253 = vadd.f32 %v214, %v250
      %v254 = vadd.f32 %v215, %v250
      %v255 = vadd.f32 %v216, %v250
      %v256 = vadd.f32 %v217, %v250
      %v257 = vadd.f32 %v218, %v250
      %v258 = vadd.f32 %v219, %v250
      %v259 = vadd.f32 %v220, %v250
      %v260 = vadd.f32 %v221, %v250
      %v261 = vadd.f32 %v222, %v250
      %v262 = vadd.f32 %v223, %v250
      %v263 = vadd.f32 %v224, %v250
      %v264 = vadd.f32 %v225, %v250
      %v265 = vadd.f32 %v226, %v250
      %v266 = vadd.f32 %v227, %v250
      %v267 = vadd.f32 %v228, %v250
      %v268 = vadd.f32 %v229, %v250
      %v269 = vadd.f32 %v230, %v250
      %v270 = vadd.f32 %v231, %v250
      %v271 = vadd.f32 %v232, %v250
      %v272 = vadd.f32 %v233, %v250
      %v273 = vadd.f32 %v234, %v250
      %v274 = vadd.f32 %v235, %v250
      %v275 = vadd.f32 %v236, %v250
      %v276 = vadd.f32 %v237, %v250
      %v277 = vadd.f32 %v238, %v250
      %v278 = vadd.f32 %v239, %v250
      %v279 = vadd.f32 %v240, %v250
      %v280 = vadd.f32 %v241, %v250
      %v281 = vadd.f32 %v242, %v250
      %v282 = vadd.f32 %v243, %v250
      %v283 = vadd.f32 %v244, %v250
      %v284 = vmax.f32 %v252, 0.0
      %v285 = vmax.f32 %v253, 0.0
      %v286 = vmax.f32 %v254, 0.0
      %v287 = vmax.f32 %v255, 0.0
      %v288 = vmax.f32 %v256, 0.0
      %v289 = vmax.f32 %v257, 0.0
      %v290 = vmax.f32 %v258, 0.0
      %v291 = vmax.f32 %v259, 0.0
      %v292 = vmax.f32 %v260, 0.0
      %v293 = vmax.f32 %v261, 0.0
      %v294 = vmax.f32 %v262, 0.0
      %v295 = vmax.f32 %v263, 0.0
      %v296 = vmax.f32 %v264, 0.0
      %v297 = vmax.f32 %v265, 0.0
      %v298 = vmax.f32 %v266, 0.0
      %v299 = vmax.f32 %v267, 0.0
      %v300 = vmax.f32 %v268, 0.0
      %v301 = vmax.f32 %v269, 0.0
      %v302 = vmax.f32 %v270, 0.0
      %v303 = vmax.f32 %v271, 0.0
      %v304 = vmax.f32 %v272, 0.0
      %v305 = vmax.f32 %v273, 0.0
      %v306 = vmax.f32 %v274, 0.0
      %v307 = vmax.f32 %v275, 0.0
      %v308 = vmax.f32 %v276, 0.0
      %v309 = vmax.f32 %v277, 0.0
      %v310 = vmax.f32 %v278, 0.0
      %v311 = vmax.f32 %v279, 0.0
      %v312 = vmax.f32 %v280, 0.0
      %v313 = vmax.f32 %v281, 0.0
      %v314 = vmax.f32 %v282, 0.0
      %v315 = vmax.f32 %v283, 0.0
      %v316 = vpack.c.bf16 %v285, %v284
      %v317 = vpack.c.bf16 %v287, %v286
      %v318 = vpack.c.bf16 %v289, %v288
      %v319 = vpack.c.bf16 %v291, %v290
      %v320 = vpack.c.bf16 %v293, %v292
      %v321 = vpack.c.bf16 %v295, %v294
      %v322 = vpack.c.bf16 %v297, %v296
      %v323 = vpack.c.bf16 %v299, %v298
      %v324 = vpack.c.bf16 %v301, %v300
      %v325 = vpack.c.bf16 %v303, %v302
      %v326 = vpack.c.bf16 %v305, %v304
      %v327 = vpack.c.bf16 %v307, %v306
      %v328 = vpack.c.bf16 %v309, %v308
      %v329 = vpack.c.bf16 %v311, %v310
      %v330 = vpack.c.bf16 %v313, %v312
      %v331 = vpack.c.bf16 %v315, %v314
      %v348 = vunpack.c.l.b16 %v316
      %v349 = vunpack.c.h.b16 %v316
      %v350 = vunpack.c.l.b16 %v317
      %v351 = vunpack.c.h.b16 %v317
      %v352 = vunpack.c.l.b16 %v318
      %v353 = vunpack.c.h.b16 %v318
      %v354 = vunpack.c.l.b16 %v319
      %v355 = vunpack.c.h.b16 %v319
      %v356 = vunpack.c.l.b16 %v320
      %v357 = vunpack.c.h.b16 %v320
      %v358 = vunpack.c.l.b16 %v321
      %v359 = vunpack.c.h.b16 %v321
      %v360 = vunpack.c.l.b16 %v322
      %v361 = vunpack.c.h.b16 %v322
      %v362 = vunpack.c.l.b16 %v323
      %v363 = vunpack.c.h.b16 %v323
      %v364 = vunpack.c.l.b16 %v324
      %v365 = vunpack.c.h.b16 %v324
      %v366 = vunpack.c.l.b16 %v325
      %v367 = vunpack.c.h.b16 %v325
      %v368 = vunpack.c.l.b16 %v326
      %v369 = vunpack.c.h.b16 %v326
      %v370 = vunpack.c.l.b16 %v327
      %v371 = vunpack.c.h.b16 %v327
      %v372 = vunpack.c.l.b16 %v328
      %v373 = vunpack.c.h.b16 %v328
      %v374 = vunpack.c.l.b16 %v329
      %v375 = vunpack.c.h.b16 %v329
      %v376 = vunpack.c.l.b16 %v330
      %v377 = vunpack.c.h.b16 %v330
      %v378 = vunpack.c.l.b16 %v331
      %v379 = vunpack.c.h.b16 %v331
      %v380 = vpack.c.b16 %v348, %v348
      %v381 = vpack.c.b16 %v349, %v349
      %v382 = vpack.c.b16 %v350, %v350
      %v383 = vpack.c.b16 %v351, %v351
      %v384 = vpack.c.b16 %v352, %v352
      %v385 = vpack.c.b16 %v353, %v353
      %v386 = vpack.c.b16 %v354, %v354
      %v387 = vpack.c.b16 %v355, %v355
      %v388 = vpack.c.b16 %v356, %v356
      %v389 = vpack.c.b16 %v357, %v357
      %v390 = vpack.c.b16 %v358, %v358
      %v391 = vpack.c.b16 %v359, %v359
      %v392 = vpack.c.b16 %v360, %v360
      %v393 = vpack.c.b16 %v361, %v361
      %v394 = vpack.c.b16 %v362, %v362
      %v395 = vpack.c.b16 %v363, %v363
      %v396 = vpack.c.b16 %v364, %v364
      %v397 = vpack.c.b16 %v365, %v365
      %v398 = vpack.c.b16 %v366, %v366
      %v399 = vpack.c.b16 %v367, %v367
      %v400 = vpack.c.b16 %v368, %v368
      %v401 = vpack.c.b16 %v369, %v369
      %v402 = vpack.c.b16 %v370, %v370
      %v403 = vpack.c.b16 %v371, %v371
      %v404 = vpack.c.b16 %v372, %v372
      %v405 = vpack.c.b16 %v373, %v373
      %v406 = vpack.c.b16 %v374, %v374
      %v407 = vpack.c.b16 %v375, %v375
      %v408 = vpack.c.b16 %v376, %v376
      %v409 = vpack.c.b16 %v377, %v377
      %v410 = vpack.c.b16 %v378, %v378
      %v411 = vpack.c.b16 %v379, %v379
      %444 = vst [vmem:[%s172] sm:$0xf] %v380
      %445 = vst [vmem:[%s172 + $0x4] sm:$0xf] %v381
      %446 = vst [vmem:[%s172 + $0x8] sm:$0xf] %v382
      %447 = vst [vmem:[%s172 + $0xc] sm:$0xf] %v383
      %448 = vst [vmem:[%s172 + $0x10] sm:$0xf] %v384
      %449 = vst [vmem:[%s172 + $0x14] sm:$0xf] %v385
      %450 = vst [vmem:[%s172 + $0x18] sm:$0xf] %v386
      %451 = vst [vmem:[%s172 + $0x1c] sm:$0xf] %v387
      %452 = vst [vmem:[%s172 + $0x20] sm:$0xf] %v388
      %453 = vst [vmem:[%s172 + $0x24] sm:$0xf] %v389
      %454 = vst [vmem:[%s172 + $0x28] sm:$0xf] %v390
      %455 = vst [vmem:[%s172 + $0x2c] sm:$0xf] %v391
      %456 = vst [vmem:[%s172 + $0x30] sm:$0xf] %v392
      %457 = vst [vmem:[%s172 + $0x34] sm:$0xf] %v393
      %458 = vst [vmem:[%s172 + $0x38] sm:$0xf] %v394
      %459 = vst [vmem:[%s172 + $0x3c] sm:$0xf] %v395
      %460 = vst [vmem:[%s172 + $0x40] sm:$0xf] %v396
      %461 = vst [vmem:[%s172 + $0x44] sm:$0xf] %v397
      %462 = vst [vmem:[%s172 + $0x48] sm:$0xf] %v398
      %463 = vst [vmem:[%s172 + $0x4c] sm:$0xf] %v399
      %464 = vst [vmem:[%s172 + $0x50] sm:$0xf] %v400
      %465 = vst [vmem:[%s172 + $0x54] sm:$0xf] %v401
      %466 = vst [vmem:[%s172 + $0x58] sm:$0xf] %v402
      %467 = vst [vmem:[%s172 + $0x5c] sm:$0xf] %v403
      %468 = vst [vmem:[%s172 + $0x60] sm:$0xf] %v404
      %469 = vst [vmem:[%s172 + $0x64] sm:$0xf] %v405
      %470 = vst [vmem:[%s172 + $0x68] sm:$0xf] %v406
      %471 = vst [vmem:[%s172 + $0x6c] sm:$0xf] %v407
      %472 = vst [vmem:[%s172 + $0x70] sm:$0xf] %v408
      %473 = vst [vmem:[%s172 + $0x74] sm:$0xf] %v409
      %474 = vst [vmem:[%s172 + $0x78] sm:$0xf] %v410
      %475 = vst [vmem:[%s172 + $0x7c] sm:$0xf] %v411
      %s476 = smul.u32 32, %s14
      %p477 = scmp.lt.s32.totalorder %s476, 63
      %s478 = scalar_select %p477, %s476, 63
      %s479 = smul.addr %s478, 4
      %s480 = scalar_lea.vmem %s3, %s479
      // Predicated region
      $region33: #{basic_block_forward.5} parent=31 // pred_check
        %p481 = pneg %p100
      $region34: #{basic_block_forward.5} parent=31 // pred_check_branch
        %483 = sbr.rel (%p481) target = $region36
      $region35: #{basic_block_forward.5} parent=31 // pred_region
        %s484 = smul.u32 32, %s14
      $region36: #{basic_block_forward.5} parent=31 // pred_fallthru
        _
    $region32: #{basic_block_forward.5} parent=5 // pred_fallthru
      _
    %p485 = scmp.le.s32.totalorder 2, %s9
    // Predicated region
    $region37: #{basic_block_forward.5} parent=5 // pred_check
      %p486 = pneg %p485
    $region38: #{basic_block_forward.5} parent=5 // pred_check_branch
      %488 = sbr.rel (%p486) target = $region40
    $region39: #{basic_block_forward.5} parent=5 // pred_region
      %s489 = ssub.s32 %s9, 2
      // Predicated region
      $region41: #{basic_block_forward.5} parent=39 // pred_check
        %p490 = pneg %p106
      $region42: #{basic_block_forward.5} parent=39 // pred_check_branch
        %492 = sbr.rel (%p490) target = $region44
      $region43: #{basic_block_forward.5} parent=39 // pred_region
        %s493 = smul.u32 32, %s15
        %p494 = scmp.lt.s32.totalorder %s493, 63
        %s495 = scalar_select %p494, %s493, 63
        %s496 = smul.addr %s495, 4
        %s497 = scalar_lea.vmem %s3, %s496
      $region44: #{basic_block_forward.5} parent=39 // pred_fallthru
        _
    $region40: #{basic_block_forward.5} parent=5 // pred_fallthru
      _
  $region6: #{basic_block_forward.5} parent=0 // loop_footer
    %s13 = sadd.s32 1, %s9
  $region7: #{basic_block_forward.5} parent=0 // loop_footer_branch
    %8 = sbr.rel target = $region3
  $region8: #{basic_block_forward.5} parent=0 // loop_exit
    _

// kernel: basic_block_forward.7
$region0: #{basic_block_forward.7}
  #allocation0 [shape = 'u32[]', space=smem, size = 0x4, offset = 0x4, fixed_abs, tag = 'smem constant byte address 0x4 - core index']
  #allocation1 [shape = 'u32[144,128]{1,0:T(1,128)}', space=vmem, size = 0x12000, scoped, tag = 'internal scratch']
  %s0 = inlined_call_operand.vmem [shape: f32[512,128], index: 0, kind: input, shape index: {}]
  %s1 = inlined_call_operand.vmem [shape: f32[1,128], index: 1, kind: input, shape index: {}]
  %s2 = inlined_call_operand.vmem [shape: f32[1,128], index: 2, kind: input, shape index: {}]
  %s3 = inlined_call_operand.vmem [shape: f32[512,128], index: 3, kind: input, shape index: {}]
  %s4 = inlined_call_operand.vmem [shape: f32[512,128], index: 4, kind: output, shape index: {}]
  %s5 = sld [smem:[#allocation0]]
  $region49: #{basic_block_forward.7} parent=0
    _
  %s7 = ssub.s32 1, %s5
  %s8 = scalar_select 0, %s7, %s5
  loop: start=0, step=1, limit=4
  $region2: #{basic_block_forward.7} parent=0 // loop_pre_header
    _
  $region3: #{basic_block_forward.7} parent=0 // loop_header
    %s10 = sphi 0, %s14
    %p11 = scmp.ge.s32.totalorder %s10, 4
    %s20 = sphi 0, %s22
    %s23 = sphi 0, %s20
    %s24 = sphi 0, %s23
    %s40 = sphi 0, %s24
    %s44 = sphi 0, %s44
    %s46 = sphi 0, %s44
    %s47 = sphi 0, %s46
    %s61 = sphi 0, %s47
    %s65 = sphi 0, %s65
    %s67 = sphi 0, %s65
    %s68 = sphi 0, %s67
    %s82 = sphi 0, %s68
    %s88 = sphi 0, %s90
    %s91 = sphi 0, %s88
    %s92 = sphi 0, %s91
    %s108 = sphi 0, %s92
    %s114 = sphi 0, %s116
    %s117 = sphi 0, %s114
    %s118 = sphi 0, %s117
    %s134 = sphi 0, %s118
  $region4: #{basic_block_forward.7} parent=0 // loop_header_branch
    %13 = sbr.rel (%p11) target = $region8
  $region5: #{basic_block_forward.7} parent=0 // loop_body
    %s15 = ssub.s32 %s10, 1
    %s16 = ssub.s32 %s10, 2
    %s17 = sadd.s32 %s10, 1
    %s18 = ssub.s32 %s10, %s17
    %p19 = scmp.eq.s32.totalorder %s18, 0
    %s21 = sadd.s32 %s20, 1
    %s22 = scalar_select %p19, %s20, %s21
    %p25 = pneg %p19
    %p26 = scmp.eq.s32.totalorder %s10, 1
    %p27 = por %p25, %p26
    %p28 = scmp.ne.s32.totalorder %s20, %s23
    %p29 = scmp.eq.s32.totalorder %s10, 0
    %p30 = por %p28, %p29
    %p31 = scmp.ne.s32.totalorder %s20, %s23
    %p32 = scmp.eq.s32.totalorder %s15, 1
    %p33 = por %p31, %p32
    %p34 = scmp.ne.s32.totalorder %s23, %s24
    %p35 = scmp.eq.s32.totalorder %s15, 0
    %p36 = por %p34, %p35
    %p37 = scmp.ne.s32.totalorder %s23, %s24
    %p38 = scmp.eq.s32.totalorder %s16, 1
    %p39 = por %p37, %p38
    %p41 = scmp.ne.s32.totalorder %s24, %s40
    %p42 = scmp.eq.s32.totalorder %s16, 0
    %p43 = por %p41, %p42
    %s45 = sadd.s32 %s44, 1
    %p48 = scmp.eq.s32.totalorder %s10, 1
    %p49 = scmp.ne.s32.totalorder %s44, %s46
    %p50 = scmp.eq.s32.totalorder %s10, 0
    %p51 = por %p49, %p50
    %p52 = scmp.ne.s32.totalorder %s44, %s46
    %p53 = scmp.eq.s32.totalorder %s15, 1
    %p54 = por %p52, %p53
    %p55 = scmp.ne.s32.totalorder %s46, %s47
    %p56 = scmp.eq.s32.totalorder %s15, 0
    %p57 = por %p55, %p56
    %p58 = scmp.ne.s32.totalorder %s46, %s47
    %p59 = scmp.eq.s32.totalorder %s16, 1
    %p60 = por %p58, %p59
    %p62 = scmp.ne.s32.totalorder %s47, %s61
    %p63 = scmp.eq.s32.totalorder %s16, 0
    %p64 = por %p62, %p63
    %s66 = sadd.s32 %s65, 1
    %p69 = scmp.eq.s32.totalorder %s10, 1
    %p70 = scmp.ne.s32.totalorder %s65, %s67
    %p71 = scmp.eq.s32.totalorder %s10, 0
    %p72 = por %p70, %p71
    %p73 = scmp.ne.s32.totalorder %s65, %s67
    %p74 = scmp.eq.s32.totalorder %s15, 1
    %p75 = por %p73, %p74
    %p76 = scmp.ne.s32.totalorder %s67, %s68
    %p77 = scmp.eq.s32.totalorder %s15, 0
    %p78 = por %p76, %p77
    %p79 = scmp.ne.s32.totalorder %s67, %s68
    %p80 = scmp.eq.s32.totalorder %s16, 1
    %p81 = por %p79, %p80
    %p83 = scmp.ne.s32.totalorder %s68, %s82
    %p84 = scmp.eq.s32.totalorder %s16, 0
    %p85 = por %p83, %p84
    %s86 = ssub.s32 %s10, %s17
    %p87 = scmp.eq.s32.totalorder %s86, 0
    %s89 = sadd.s32 %s88, 1
    %s90 = scalar_select %p87, %s88, %s89
    %p93 = pneg %p87
    %p94 = scmp.eq.s32.totalorder %s10, 1
    %p95 = por %p93, %p94
    %p96 = scmp.ne.s32.totalorder %s88, %s91
    %p97 = scmp.eq.s32.totalorder %s10, 0
    %p98 = por %p96, %p97
    %p99 = scmp.ne.s32.totalorder %s88, %s91
    %p100 = scmp.eq.s32.totalorder %s15, 1
    %p101 = por %p99, %p100
    %p102 = scmp.ne.s32.totalorder %s91, %s92
    %p103 = scmp.eq.s32.totalorder %s15, 0
    %p104 = por %p102, %p103
    %p105 = scmp.ne.s32.totalorder %s91, %s92
    %p106 = scmp.eq.s32.totalorder %s16, 1
    %p107 = por %p105, %p106
    %p109 = scmp.ne.s32.totalorder %s92, %s108
    %p110 = scmp.eq.s32.totalorder %s16, 0
    %p111 = por %p109, %p110
    %s112 = ssub.s32 %s10, %s17
    %p113 = scmp.eq.s32.totalorder %s112, 0
    %s115 = sadd.s32 %s114, 1
    %s116 = scalar_select %p113, %s114, %s115
    %p119 = pneg %p113
    %p120 = scmp.eq.s32.totalorder %s10, 1
    %p121 = por %p119, %p120
    %p122 = scmp.ne.s32.totalorder %s114, %s117
    %p123 = scmp.eq.s32.totalorder %s10, 0
    %p124 = por %p122, %p123
    %p125 = scmp.ne.s32.totalorder %s114, %s117
    %p126 = scmp.eq.s32.totalorder %s15, 1
    %p127 = por %p125, %p126
    %p128 = scmp.ne.s32.totalorder %s117, %s118
    %p129 = scmp.eq.s32.totalorder %s15, 0
    %p130 = por %p128, %p129
    %p131 = scmp.ne.s32.totalorder %s117, %s118
    %p132 = scmp.eq.s32.totalorder %s16, 1
    %p133 = por %p131, %p132
    %p135 = scmp.ne.s32.totalorder %s118, %s134
    %p136 = scmp.eq.s32.totalorder %s16, 0
    %p137 = por %p135, %p136
    %p138 = scmp.le.s32.totalorder 1, %s10
    %p139 = scmp.lt.s32.totalorder %s10, 3
    %p140 = pnand %p138, %p139
    %p141 = pneg %p140
    // Predicated region
    $region9: #{basic_block_forward.7} parent=5 // pred_check
      _
    $region10: #{basic_block_forward.7} parent=5 // pred_check_branch
      %143 = sbr.rel (%p140) target = $region12
    $region11: #{basic_block_forward.7} parent=5 // pred_region
      %s144 = ssub.s32 %s10, 1
      // Predicated region
      $region13: #{basic_block_forward.7} parent=11 // pred_check
        %p145 = pneg %p57
      $region14: #{basic_block_forward.7} parent=11 // pred_check_branch
        %147 = sbr.rel (%p145) target = $region16
      $region15: #{basic_block_forward.7} parent=11 // pred_region
        _
      $region16: #{basic_block_forward.7} parent=11 // pred_fallthru
        _
      // Predicated region
      $region17: #{basic_block_forward.7} parent=11 // pred_check
        %p148 = pneg %p78
      $region18: #{basic_block_forward.7} parent=11 // pred_check_branch
        %150 = sbr.rel (%p148) target = $region20
      $region19: #{basic_block_forward.7} parent=11 // pred_region
        _
      $region20: #{basic_block_forward.7} parent=11 // pred_fallthru
        _
    $region12: #{basic_block_forward.7} parent=5 // pred_fallthru
      _
    %p151 = scmp.lt.s32.totalorder %s10, 2
    // Predicated region
    $region21: #{basic_block_forward.7} parent=5 // pred_check
      %p152 = pneg %p151
    $region22: #{basic_block_forward.7} parent=5 // pred_check_branch
      %154 = sbr.rel (%p152) target = $region24
    $region23: #{basic_block_forward.7} parent=5 // pred_region
      // Predicated region
      $region25: #{basic_block_forward.7} parent=23 // pred_check
        %p155 = pneg %p30
      $region26: #{basic_block_forward.7} parent=23 // pred_check_branch
        %157 = sbr.rel (%p155) target = $region28
      $region27: #{basic_block_forward.7} parent=23 // pred_region
        %s158 = smul.u32 32, %s10
        %p159 = scmp.lt.s32.totalorder %s158, 63
        %s160 = scalar_select %p159, %s158, 63
        %s161 = smul.addr %s160, 8
        %s162 = scalar_lea.vmem %s0, %s161
        %s163 = smul.u32 32, %s10
      $region28: #{basic_block_forward.7} parent=23 // pred_fallthru
        _
      // Predicated region
      $region29: #{basic_block_forward.7} parent=23 // pred_check
        %p164 = pneg %p98
      $region30: #{basic_block_forward.7} parent=23 // pred_check_branch
        %166 = sbr.rel (%p164) target = $region32
      $region31: #{basic_block_forward.7} parent=23 // pred_region
        %s167 = smul.u32 32, %s10
        %p168 = scmp.lt.s32.totalorder %s167, 63
        %s169 = scalar_select %p168, %s167, 63
        %s170 = smul.addr %s169, 8
        %s171 = scalar_lea.vmem %s3, %s170
        %s172 = smul.u32 32, %s10
      $region32: #{basic_block_forward.7} parent=23 // pred_fallthru
        _
    $region24: #{basic_block_forward.7} parent=5 // pred_fallthru
      _
    %p173 = scmp.le.s32.totalorder 1, %s10
    %p174 = scmp.lt.s32.totalorder %s10, 3
    %p175 = pnand %p173, %p174
    %p176 = pneg %p175
    // Predicated region
    $region33: #{basic_block_forward.7} parent=5 // pred_check
      _
    $region34: #{basic_block_forward.7} parent=5 // pred_check_branch
      %178 = sbr.rel (%p175) target = $region36
    $region35: #{basic_block_forward.7} parent=5 // pred_region
      %s179 = ssub.s32 %s10, 1
      %s180 = smul.u32 32, %s15
      %p181 = scmp.lt.s32.totalorder %s180, 63
      %s182 = scalar_select %p181, %s180, 63
      %s183 = smul.addr %s182, 8
      %s184 = scalar_lea.vmem %s0, %s183
      %p185 = pneg %p36
      %p186 = pneg %p33
      %p187 = pneg %p57
      %p188 = pneg %p54
      %p189 = pneg %p78
      %p190 = pneg %p75
      %s191 = smul.u32 32, %s15
      %p192 = scmp.lt.s32.totalorder %s191, 63
      %s193 = scalar_select %p192, %s191, 63
      %s194 = smul.addr %s193, 8
      %s195 = scalar_lea.vmem %s3, %s194
      %p196 = pneg %p104
      %p197 = pneg %p101
      %p198 = pneg %p130
      %p199 = pneg %p127
      %s200 = smul.u32 32, %s15
      %p201 = scmp.lt.s32.totalorder %s200, 63
      %s202 = scalar_select %p201, %s200, 63
      %s203 = smul.addr %s202, 8
      %s204 = scalar_lea.vmem %s4, %s203
      %s205 = smul.u32 32, %s15
      %p206 = scmp.lt.s32.totalorder %s205, 63
      %s207 = scalar_select %p206, %s205, 63
      %s208 = smul.addr %s207, 8
      %s209 = scalar_lea.vmem %s0, %s208
      %s210 = smul.u32 32, %s15
      %s211 = smul.u32 32, %s15
      %p212 = scmp.lt.s32.totalorder %s211, 63
      %s213 = scalar_select %p212, %s211, 63
      %s214 = smul.addr %s213, 8
      %s215 = scalar_lea.vmem %s3, %s214
      %s216 = smul.u32 32, %s15
      %s217 = smul.u32 32, %s15
      %p218 = scmp.lt.s32.totalorder %s217, 63
      %s219 = scalar_select %p218, %s217, 63
      %s220 = smul.addr %s219, 8
      %s221 = scalar_lea.vmem %s4, %s220
      %s222 = smul.u32 32, %s15
      %v223 = vld [vmem:[%s209] sm:$0xff]
      %v224 = vld [vmem:[%s209 + $0x8] sm:$0xff]
      %v225 = vld [vmem:[%s209 + $0x10] sm:$0xff]
      %v226 = vld [vmem:[%s209 + $0x18] sm:$0xff]
      %v227 = vld [vmem:[%s209 + $0x20] sm:$0xff]
      %v228 = vld [vmem:[%s209 + $0x28] sm:$0xff]
      %v229 = vld [vmem:[%s209 + $0x30] sm:$0xff]
      %v230 = vld [vmem:[%s209 + $0x38] sm:$0xff]
      %v231 = vld [vmem:[%s209 + $0x40] sm:$0xff]
      %v232 = vld [vmem:[%s209 + $0x48] sm:$0xff]
      %v233 = vld [vmem:[%s209 + $0x50] sm:$0xff]
      %v234 = vld [vmem:[%s209 + $0x58] sm:$0xff]
      %v235 = vld [vmem:[%s209 + $0x60] sm:$0xff]
      %v236 = vld [vmem:[%s209 + $0x68] sm:$0xff]
      %v237 = vld [vmem:[%s209 + $0x70] sm:$0xff]
      %v238 = vld [vmem:[%s209 + $0x78] sm:$0xff]
      %v239 = vld [vmem:[%s209 + $0x80] sm:$0xff]
      %v240 = vld [vmem:[%s209 + $0x88] sm:$0xff]
      %v241 = vld [vmem:[%s209 + $0x90] sm:$0xff]
      %v242 = vld [vmem:[%s209 + $0x98] sm:$0xff]
      %v243 = vld [vmem:[%s209 + $0xa0] sm:$0xff]
      %v244 = vld [vmem:[%s209 + $0xa8] sm:$0xff]
      %v245 = vld [vmem:[%s209 + $0xb0] sm:$0xff]
      %v246 = vld [vmem:[%s209 + $0xb8] sm:$0xff]
      %v247 = vld [vmem:[%s209 + $0xc0] sm:$0xff]
      %v248 = vld [vmem:[%s209 + $0xc8] sm:$0xff]
      %v249 = vld [vmem:[%s209 + $0xd0] sm:$0xff]
      %v250 = vld [vmem:[%s209 + $0xd8] sm:$0xff]
      %v251 = vld [vmem:[%s209 + $0xe0] sm:$0xff]
      %v252 = vld [vmem:[%s209 + $0xe8] sm:$0xff]
      %v253 = vld [vmem:[%s209 + $0xf0] sm:$0xff]
      %v254 = vld [vmem:[%s209 + $0xf8] sm:$0xff]
      %v255 = vld [vmem:[%s1] sm:$0x1]
      %v257 = vlaneseq
      %v258 = vshrl.u32 %v257, 7
      %v259 = vsub.s32 0, %v258
      %v260 = vrot.slane %v255, %v259
      %v262 = vmul.f32 %v223, %v260
      %v263 = vmul.f32 %v224, %v260
      %v264 = vmul.f32 %v225, %v260
      %v265 = vmul.f32 %v226, %v260
      %v266 = vmul.f32 %v227, %v260
      %v267 = vmul.f32 %v228, %v260
      %v268 = vmul.f32 %v229, %v260
      %v269 = vmul.f32 %v230, %v260
      %v270 = vmul.f32 %v231, %v260
      %v271 = vmul.f32 %v232, %v260
      %v272 = vmul.f32 %v233, %v260
      %v273 = vmul.f32 %v234, %v260
      %v274 = vmul.f32 %v235, %v260
      %v275 = vmul.f32 %v236, %v260
      %v276 = vmul.f32 %v237, %v260
      %v277 = vmul.f32 %v238, %v260
      %v278 = vmul.f32 %v239, %v260
      %v279 = vmul.f32 %v240, %v260
      %v280 = vmul.f32 %v241, %v260
      %v281 = vmul.f32 %v242, %v260
      %v282 = vmul.f32 %v243, %v260
      %v283 = vmul.f32 %v244, %v260
      %v284 = vmul.f32 %v245, %v260
      %v285 = vmul.f32 %v246, %v260
      %v286 = vmul.f32 %v247, %v260
      %v287 = vmul.f32 %v248, %v260
      %v288 = vmul.f32 %v249, %v260
      %v289 = vmul.f32 %v250, %v260
      %v290 = vmul.f32 %v251, %v260
      %v291 = vmul.f32 %v252, %v260
      %v292 = vmul.f32 %v253, %v260
      %v293 = vmul.f32 %v254, %v260
      %v294 = vld [vmem:[%s2] sm:$0x1]
      %v296 = vlaneseq
      %v297 = vshrl.u32 %v296, 7
      %v298 = vsub.s32 0, %v297
      %v299 = vrot.slane %v294, %v298
      %v301 = vadd.f32 %v262, %v299
      %v302 = vadd.f32 %v263, %v299
      %v303 = vadd.f32 %v264, %v299
      %v304 = vadd.f32 %v265, %v299
      %v305 = vadd.f32 %v266, %v299
      %v306 = vadd.f32 %v267, %v299
      %v307 = vadd.f32 %v268, %v299
      %v308 = vadd.f32 %v269, %v299
      %v309 = vadd.f32 %v270, %v299
      %v310 = vadd.f32 %v271, %v299
      %v311 = vadd.f32 %v272, %v299
      %v312 = vadd.f32 %v273, %v299
      %v313 = vadd.f32 %v274, %v299
      %v314 = vadd.f32 %v275, %v299
      %v315 = vadd.f32 %v276, %v299
      %v316 = vadd.f32 %v277, %v299
      %v317 = vadd.f32 %v278, %v299
      %v318 = vadd.f32 %v279, %v299
      %v319 = vadd.f32 %v280, %v299
      %v320 = vadd.f32 %v281, %v299
      %v321 = vadd.f32 %v282, %v299
      %v322 = vadd.f32 %v283, %v299
      %v323 = vadd.f32 %v284, %v299
      %v324 = vadd.f32 %v285, %v299
      %v325 = vadd.f32 %v286, %v299
      %v326 = vadd.f32 %v287, %v299
      %v327 = vadd.f32 %v288, %v299
      %v328 = vadd.f32 %v289, %v299
      %v329 = vadd.f32 %v290, %v299
      %v330 = vadd.f32 %v291, %v299
      %v331 = vadd.f32 %v292, %v299
      %v332 = vadd.f32 %v293, %v299
      %v333 = vld [vmem:[%s215] sm:$0xff]
      %v334 = vld [vmem:[%s215 + $0x8] sm:$0xff]
      %v335 = vld [vmem:[%s215 + $0x10] sm:$0xff]
      %v336 = vld [vmem:[%s215 + $0x18] sm:$0xff]
      %v337 = vld [vmem:[%s215 + $0x20] sm:$0xff]
      %v338 = vld [vmem:[%s215 + $0x28] sm:$0xff]
      %v339 = vld [vmem:[%s215 + $0x30] sm:$0xff]
      %v340 = vld [vmem:[%s215 + $0x38] sm:$0xff]
      %v341 = vld [vmem:[%s215 + $0x40] sm:$0xff]
      %v342 = vld [vmem:[%s215 + $0x48] sm:$0xff]
      %v343 = vld [vmem:[%s215 + $0x50] sm:$0xff]
      %v344 = vld [vmem:[%s215 + $0x58] sm:$0xff]
      %v345 = vld [vmem:[%s215 + $0x60] sm:$0xff]
      %v346 = vld [vmem:[%s215 + $0x68] sm:$0xff]
      %v347 = vld [vmem:[%s215 + $0x70] sm:$0xff]
      %v348 = vld [vmem:[%s215 + $0x78] sm:$0xff]
      %v349 = vld [vmem:[%s215 + $0x80] sm:$0xff]
      %v350 = vld [vmem:[%s215 + $0x88] sm:$0xff]
      %v351 = vld [vmem:[%s215 + $0x90] sm:$0xff]
      %v352 = vld [vmem:[%s215 + $0x98] sm:$0xff]
      %v353 = vld [vmem:[%s215 + $0xa0] sm:$0xff]
      %v354 = vld [vmem:[%s215 + $0xa8] sm:$0xff]
      %v355 = vld [vmem:[%s215 + $0xb0] sm:$0xff]
      %v356 = vld [vmem:[%s215 + $0xb8] sm:$0xff]
      %v357 = vld [vmem:[%s215 + $0xc0] sm:$0xff]
      %v358 = vld [vmem:[%s215 + $0xc8] sm:$0xff]
      %v359 = vld [vmem:[%s215 + $0xd0] sm:$0xff]
      %v360 = vld [vmem:[%s215 + $0xd8] sm:$0xff]
      %v361 = vld [vmem:[%s215 + $0xe0] sm:$0xff]
      %v362 = vld [vmem:[%s215 + $0xe8] sm:$0xff]
      %v363 = vld [vmem:[%s215 + $0xf0] sm:$0xff]
      %v364 = vld [vmem:[%s215 + $0xf8] sm:$0xff]
      %v365 = vadd.f32 %v301, %v333
      %v366 = vadd.f32 %v302, %v334
      %v367 = vadd.f32 %v303, %v335
      %v368 = vadd.f32 %v304, %v336
      %v369 = vadd.f32 %v305, %v337
      %v370 = vadd.f32 %v306, %v338
      %v371 = vadd.f32 %v307, %v339
      %v372 = vadd.f32 %v308, %v340
      %v373 = vadd.f32 %v309, %v341
      %v374 = vadd.f32 %v310, %v342
      %v375 = vadd.f32 %v311, %v343
      %v376 = vadd.f32 %v312, %v344
      %v377 = vadd.f32 %v313, %v345
      %v378 = vadd.f32 %v314, %v346
      %v379 = vadd.f32 %v315, %v347
      %v380 = vadd.f32 %v316, %v348
      %v381 = vadd.f32 %v317, %v349
      %v382 = vadd.f32 %v318, %v350
      %v383 = vadd.f32 %v319, %v351
      %v384 = vadd.f32 %v320, %v352
      %v385 = vadd.f32 %v321, %v353
      %v386 = vadd.f32 %v322, %v354
      %v387 = vadd.f32 %v323, %v355
      %v388 = vadd.f32 %v324, %v356
      %v389 = vadd.f32 %v325, %v357
      %v390 = vadd.f32 %v326, %v358
      %v391 = vadd.f32 %v327, %v359
      %v392 = vadd.f32 %v328, %v360
      %v393 = vadd.f32 %v329, %v361
      %v394 = vadd.f32 %v330, %v362
      %v395 = vadd.f32 %v331, %v363
      %v396 = vadd.f32 %v332, %v364
      %v397 = vmax.f32 %v365, 0.0
      %v398 = vmax.f32 %v366, 0.0
      %v399 = vmax.f32 %v367, 0.0
      %v400 = vmax.f32 %v368, 0.0
      %v401 = vmax.f32 %v369, 0.0
      %v402 = vmax.f32 %v370, 0.0
      %v403 = vmax.f32 %v371, 0.0
      %v404 = vmax.f32 %v372, 0.0
      %v405 = vmax.f32 %v373, 0.0
      %v406 = vmax.f32 %v374, 0.0
      %v407 = vmax.f32 %v375, 0.0
      %v408 = vmax.f32 %v376, 0.0
      %v409 = vmax.f32 %v377, 0.0
      %v410 = vmax.f32 %v378, 0.0
      %v411 = vmax.f32 %v379, 0.0
      %v412 = vmax.f32 %v380, 0.0
      %v413 = vmax.f32 %v381, 0.0
      %v414 = vmax.f32 %v382, 0.0
      %v415 = vmax.f32 %v383, 0.0
      %v416 = vmax.f32 %v384, 0.0
      %v417 = vmax.f32 %v385, 0.0
      %v418 = vmax.f32 %v386, 0.0
      %v419 = vmax.f32 %v387, 0.0
      %v420 = vmax.f32 %v388, 0.0
      %v421 = vmax.f32 %v389, 0.0
      %v422 = vmax.f32 %v390, 0.0
      %v423 = vmax.f32 %v391, 0.0
      %v424 = vmax.f32 %v392, 0.0
      %v425 = vmax.f32 %v393, 0.0
      %v426 = vmax.f32 %v394, 0.0
      %v427 = vmax.f32 %v395, 0.0
      %v428 = vmax.f32 %v396, 0.0
      %429 = vst [vmem:[%s221] sm:$0xff] %v397
      %430 = vst [vmem:[%s221 + $0x8] sm:$0xff] %v398
      %431 = vst [vmem:[%s221 + $0x10] sm:$0xff] %v399
      %432 = vst [vmem:[%s221 + $0x18] sm:$0xff] %v400
      %433 = vst [vmem:[%s221 + $0x20] sm:$0xff] %v401
      %434 = vst [vmem:[%s221 + $0x28] sm:$0xff] %v402
      %435 = vst [vmem:[%s221 + $0x30] sm:$0xff] %v403
      %436 = vst [vmem:[%s221 + $0x38] sm:$0xff] %v404
      %437 = vst [vmem:[%s221 + $0x40] sm:$0xff] %v405
      %438 = vst [vmem:[%s221 + $0x48] sm:$0xff] %v406
      %439 = vst [vmem:[%s221 + $0x50] sm:$0xff] %v407
      %440 = vst [vmem:[%s221 + $0x58] sm:$0xff] %v408
      %441 = vst [vmem:[%s221 + $0x60] sm:$0xff] %v409
      %442 = vst [vmem:[%s221 + $0x68] sm:$0xff] %v410
      %443 = vst [vmem:[%s221 + $0x70] sm:$0xff] %v411
      %444 = vst [vmem:[%s221 + $0x78] sm:$0xff] %v412
      %445 = vst [vmem:[%s221 + $0x80] sm:$0xff] %v413
      %446 = vst [vmem:[%s221 + $0x88] sm:$0xff] %v414
      %447 = vst [vmem:[%s221 + $0x90] sm:$0xff] %v415
      %448 = vst [vmem:[%s221 + $0x98] sm:$0xff] %v416
      %449 = vst [vmem:[%s221 + $0xa0] sm:$0xff] %v417
      %450 = vst [vmem:[%s221 + $0xa8] sm:$0xff] %v418
      %451 = vst [vmem:[%s221 + $0xb0] sm:$0xff] %v419
      %452 = vst [vmem:[%s221 + $0xb8] sm:$0xff] %v420
      %453 = vst [vmem:[%s221 + $0xc0] sm:$0xff] %v421
      %454 = vst [vmem:[%s221 + $0xc8] sm:$0xff] %v422
      %455 = vst [vmem:[%s221 + $0xd0] sm:$0xff] %v423
      %456 = vst [vmem:[%s221 + $0xd8] sm:$0xff] %v424
      %457 = vst [vmem:[%s221 + $0xe0] sm:$0xff] %v425
      %458 = vst [vmem:[%s221 + $0xe8] sm:$0xff] %v426
      %459 = vst [vmem:[%s221 + $0xf0] sm:$0xff] %v427
      %460 = vst [vmem:[%s221 + $0xf8] sm:$0xff] %v428
      %s461 = smul.u32 32, %s15
      %p462 = scmp.lt.s32.totalorder %s461, 63
      %s463 = scalar_select %p462, %s461, 63
      %s464 = smul.addr %s463, 8
      %s465 = scalar_lea.vmem %s4, %s464
      // Predicated region
      $region37: #{basic_block_forward.7} parent=35 // pred_check
        %p466 = pneg %p127
      $region38: #{basic_block_forward.7} parent=35 // pred_check_branch
        %468 = sbr.rel (%p466) target = $region40
      $region39: #{basic_block_forward.7} parent=35 // pred_region
        %s469 = smul.u32 32, %s15
      $region40: #{basic_block_forward.7} parent=35 // pred_fallthru
        _
    $region36: #{basic_block_forward.7} parent=5 // pred_fallthru
      _
    %p470 = scmp.le.s32.totalorder 2, %s10
    // Predicated region
    $region41: #{basic_block_forward.7} parent=5 // pred_check
      %p471 = pneg %p470
    $region42: #{basic_block_forward.7} parent=5 // pred_check_branch
      %473 = sbr.rel (%p471) target = $region44
    $region43: #{basic_block_forward.7} parent=5 // pred_region
      %s474 = ssub.s32 %s10, 2
      // Predicated region
      $region45: #{basic_block_forward.7} parent=43 // pred_check
        %p475 = pneg %p133
      $region46: #{basic_block_forward.7} parent=43 // pred_check_branch
        %477 = sbr.rel (%p475) target = $region48
      $region47: #{basic_block_forward.7} parent=43 // pred_region
        %s478 = smul.u32 32, %s16
        %p479 = scmp.lt.s32.totalorder %s478, 63
        %s480 = scalar_select %p479, %s478, 63
        %s481 = smul.addr %s480, 8
        %s482 = scalar_lea.vmem %s4, %s481
      $region48: #{basic_block_forward.7} parent=43 // pred_fallthru
        _
    $region44: #{basic_block_forward.7} parent=5 // pred_fallthru
      _
  $region6: #{basic_block_forward.7} parent=0 // loop_footer
    %s14 = sadd.s32 1, %s10
  $region7: #{basic_block_forward.7} parent=0 // loop_footer_branch
    %9 = sbr.rel target = $region3
  $region8: #{basic_block_forward.7} parent=0 // loop_exit
    _

// kernel: basic_block_forward.4
$region0: #{basic_block_forward.4}
  #allocation0 [shape = 'u32[]', space=smem, size = 0x4, offset = 0x4, fixed_abs, tag = 'smem constant byte address 0x4 - core index']
  #allocation1 [shape = 'u32[144,128]{1,0:T(1,128)}', space=vmem, size = 0x12000, scoped, tag = 'internal scratch']
  %s0 = inlined_call_operand.vmem [shape: bf16[2,18,18,128], index: 0, kind: input, shape index: {}]
  %s1 = inlined_call_operand.vmem [shape: bf16[3,3,128,128], index: 1, kind: input, shape index: {}]
  %s2 = inlined_call_operand.vmem [shape: f32[2,256,128], index: 2, kind: output, shape index: {0}]
  %s3 = inlined_call_operand.vmem [shape: f32[1,128], index: 3, kind: output, shape index: {1}]
  %s4 = inlined_call_operand.vmem [shape: f32[1,128], index: 4, kind: output, shape index: {2}]
  %5 = xla_tuple %s2, %s3, %s4
  %s6 = sld [smem:[#allocation0]]
  $region61: #{basic_block_forward.4} parent=0
    _
  %s8 = ssub.s32 1, %s6
  %s9 = scalar_select 0, %s8, %s6
  loop: start=0, step=1, limit=4
  $region2: #{basic_block_forward.4} parent=0 // loop_pre_header
    _
  $region3: #{basic_block_forward.4} parent=0 // loop_header
    %s11 = sphi 0, %s15
    %p12 = scmp.ge.s32.totalorder %s11, 4
    %s21 = sphi 0, %s23
    %s24 = sphi 0, %s21
    %s25 = sphi 0, %s24
    %s41 = sphi 0, %s25
    %s45 = sphi 0, %s45
    %s47 = sphi 0, %s45
    %s48 = sphi 0, %s47
    %s62 = sphi 0, %s48
    %s68 = sphi 0, %s70
    %s71 = sphi 0, %s68
    %s72 = sphi 0, %s71
    %s88 = sphi 0, %s72
    %s92 = sphi 0, %s92
    %s94 = sphi 0, %s92
    %s95 = sphi 0, %s94
    %s109 = sphi 0, %s95
    %s113 = sphi 0, %s113
    %s115 = sphi 0, %s113
    %s116 = sphi 0, %s115
    %s130 = sphi 0, %s116
  $region4: #{basic_block_forward.4} parent=0 // loop_header_branch
    %14 = sbr.rel (%p12) target = $region8
  $region5: #{basic_block_forward.4} parent=0 // loop_body
    %s16 = ssub.s32 %s11, 1
    %s17 = ssub.s32 %s11, 2
    %s18 = sadd.s32 %s11, 1
    %s19 = ssub.s32 %s11, %s18
    %p20 = scmp.eq.s32.totalorder %s19, 0
    %s22 = sadd.s32 %s21, 1
    %s23 = scalar_select %p20, %s21, %s22
    %p26 = pneg %p20
    %p27 = scmp.eq.s32.totalorder %s11, 1
    %p28 = por %p26, %p27
    %p29 = scmp.ne.s32.totalorder %s21, %s24
    %p30 = scmp.eq.s32.totalorder %s11, 0
    %p31 = por %p29, %p30
    %p32 = scmp.ne.s32.totalorder %s21, %s24
    %p33 = scmp.eq.s32.totalorder %s16, 1
    %p34 = por %p32, %p33
    %p35 = scmp.ne.s32.totalorder %s24, %s25
    %p36 = scmp.eq.s32.totalorder %s16, 0
    %p37 = por %p35, %p36
    %p38 = scmp.ne.s32.totalorder %s24, %s25
    %p39 = scmp.eq.s32.totalorder %s17, 1
    %p40 = por %p38, %p39
    %p42 = scmp.ne.s32.totalorder %s25, %s41
    %p43 = scmp.eq.s32.totalorder %s17, 0
    %p44 = por %p42, %p43
    %s46 = sadd.s32 %s45, 1
    %p49 = scmp.eq.s32.totalorder %s11, 1
    %p50 = scmp.ne.s32.totalorder %s45, %s47
    %p51 = scmp.eq.s32.totalorder %s11, 0
    %p52 = por %p50, %p51
    %p53 = scmp.ne.s32.totalorder %s45, %s47
    %p54 = scmp.eq.s32.totalorder %s16, 1
    %p55 = por %p53, %p54
    %p56 = scmp.ne.s32.totalorder %s47, %s48
    %p57 = scmp.eq.s32.totalorder %s16, 0
    %p58 = por %p56, %p57
    %p59 = scmp.ne.s32.totalorder %s47, %s48
    %p60 = scmp.eq.s32.totalorder %s17, 1
    %p61 = por %p59, %p60
    %p63 = scmp.ne.s32.totalorder %s48, %s62
    %p64 = scmp.eq.s32.totalorder %s17, 0
    %p65 = por %p63, %p64
    %s66 = ssub.s32 %s11, %s18
    %p67 = scmp.eq.s32.totalorder %s66, 0
    %s69 = sadd.s32 %s68, 1
    %s70 = scalar_select %p67, %s68, %s69
    %p73 = pneg %p67
    %p74 = scmp.eq.s32.totalorder %s11, 1
    %p75 = por %p73, %p74
    %p76 = scmp.ne.s32.totalorder %s68, %s71
    %p77 = scmp.eq.s32.totalorder %s11, 0
    %p78 = por %p76, %p77
    %p79 = scmp.ne.s32.totalorder %s68, %s71
    %p80 = scmp.eq.s32.totalorder %s16, 1
    %p81 = por %p79, %p80
    %p82 = scmp.ne.s32.totalorder %s71, %s72
    %p83 = scmp.eq.s32.totalorder %s16, 0
    %p84 = por %p82, %p83
    %p85 = scmp.ne.s32.totalorder %s71, %s72
    %p86 = scmp.eq.s32.totalorder %s17, 1
    %p87 = por %p85, %p86
    %p89 = scmp.ne.s32.totalorder %s72, %s88
    %p90 = scmp.eq.s32.totalorder %s17, 0
    %p91 = por %p89, %p90
    %s93 = sadd.s32 %s92, 1
    %p96 = scmp.eq.s32.totalorder %s11, 1
    %p97 = scmp.ne.s32.totalorder %s92, %s94
    %p98 = scmp.eq.s32.totalorder %s11, 0
    %p99 = por %p97, %p98
    %p100 = scmp.ne.s32.totalorder %s92, %s94
    %p101 = scmp.eq.s32.totalorder %s16, 1
    %p102 = por %p100, %p101
    %p103 = scmp.ne.s32.totalorder %s94, %s95
    %p104 = scmp.eq.s32.totalorder %s16, 0
    %p105 = por %p103, %p104
    %p106 = scmp.ne.s32.totalorder %s94, %s95
    %p107 = scmp.eq.s32.totalorder %s17, 1
    %p108 = por %p106, %p107
    %p110 = scmp.ne.s32.totalorder %s95, %s109
    %p111 = scmp.eq.s32.totalorder %s17, 0
    %p112 = por %p110, %p111
    %s114 = sadd.s32 %s113, 1
    %p117 = scmp.eq.s32.totalorder %s11, 1
    %p118 = scmp.ne.s32.totalorder %s113, %s115
    %p119 = scmp.eq.s32.totalorder %s11, 0
    %p120 = por %p118, %p119
    %p121 = scmp.ne.s32.totalorder %s113, %s115
    %p122 = scmp.eq.s32.totalorder %s16, 1
    %p123 = por %p121, %p122
    %p124 = scmp.ne.s32.totalorder %s115, %s116
    %p125 = scmp.eq.s32.totalorder %s16, 0
    %p126 = por %p124, %p125
    %p127 = scmp.ne.s32.totalorder %s115, %s116
    %p128 = scmp.eq.s32.totalorder %s17, 1
    %p129 = por %p127, %p128
    %p131 = scmp.ne.s32.totalorder %s116, %s130
    %p132 = scmp.eq.s32.totalorder %s17, 0
    %p133 = por %p131, %p132
    %p134 = scmp.le.s32.totalorder 1, %s11
    %p135 = scmp.lt.s32.totalorder %s11, 3
    %p136 = pnand %p134, %p135
    %p137 = pneg %p136
    // Predicated region
    $region9: #{basic_block_forward.4} parent=5 // pred_check
      _
    $region10: #{basic_block_forward.4} parent=5 // pred_check_branch
      %139 = sbr.rel (%p136) target = $region12
    $region11: #{basic_block_forward.4} parent=5 // pred_region
      %s140 = ssub.s32 %s11, 1
      // Predicated region
      $region13: #{basic_block_forward.4} parent=11 // pred_check
        %p141 = pneg %p58
      $region14: #{basic_block_forward.4} parent=11 // pred_check_branch
        %143 = sbr.rel (%p141) target = $region16
      $region15: #{basic_block_forward.4} parent=11 // pred_region
        _
      $region16: #{basic_block_forward.4} parent=11 // pred_fallthru
        _
    $region12: #{basic_block_forward.4} parent=5 // pred_fallthru
      _
    %p144 = scmp.lt.s32.totalorder %s11, 2
    // Predicated region
    $region17: #{basic_block_forward.4} parent=5 // pred_check
      %p145 = pneg %p144
    $region18: #{basic_block_forward.4} parent=5 // pred_check_branch
      %147 = sbr.rel (%p145) target = $region20
    $region19: #{basic_block_forward.4} parent=5 // pred_region
      // Predicated region
      $region21: #{basic_block_forward.4} parent=19 // pred_check
        %p148 = pneg %p31
      $region22: #{basic_block_forward.4} parent=19 // pred_check_branch
        %150 = sbr.rel (%p148) target = $region24
      $region23: #{basic_block_forward.4} parent=19 // pred_region
        %p151 = scmp.lt.s32.totalorder %s11, 1
        %s152 = scalar_select %p151, %s11, 1
        %s153 = smul.addr %s152, 54
        %s154 = smul.addr %s153, 4
        %s155 = scalar_lea.vmem %s0, %s154
      $region24: #{basic_block_forward.4} parent=19 // pred_fallthru
        _
    $region20: #{basic_block_forward.4} parent=5 // pred_fallthru
      _
    %p156 = scmp.le.s32.totalorder 1, %s11
    %p157 = scmp.lt.s32.totalorder %s11, 3
    %p158 = pnand %p156, %p157
    %p159 = pneg %p158
    // Predicated region
    $region25: #{basic_block_forward.4} parent=5 // pred_check
      _
    $region26: #{basic_block_forward.4} parent=5 // pred_check_branch
      %161 = sbr.rel (%p158) target = $region28
    $region27: #{basic_block_forward.4} parent=5 // pred_region
      %s162 = ssub.s32 %s11, 1
      %p163 = scmp.lt.s32.totalorder %s16, 1
      %s164 = scalar_select %p163, %s16, 1
      %s165 = smul.addr %s164, 54
      %s166 = smul.addr %s165, 4
      %s167 = scalar_lea.vmem %s0, %s166
      %p168 = pneg %p37
      %p169 = pneg %p34
      %p170 = pneg %p58
      %p171 = pneg %p55
      %p172 = pneg %p84
      %p173 = pneg %p81
      %p174 = scmp.lt.s32.totalorder %s16, 1
      %s175 = scalar_select %p174, %s16, 1
      %s176 = smul.addr %s175, 32
      %s177 = smul.addr %s176, 8
      %s178 = scalar_lea.vmem %s2, %s177
      %p179 = pneg %p105
      %p180 = pneg %p102
      %p181 = pneg %p126
      %p182 = pneg %p123
      %p183 = scmp.lt.s32.totalorder %s16, 1
      %s184 = scalar_select %p183, %s16, 1
      %s185 = smul.addr %s184, 54
      %s186 = smul.addr %s185, 4
      %s187 = scalar_lea.vmem %s0, %s186
      %p188 = scmp.lt.s32.totalorder %s16, 1
      %s189 = scalar_select %p188, %s16, 1
      %s190 = smul.addr %s189, 32
      %s191 = smul.addr %s190, 8
      %s192 = scalar_lea.vmem %s2, %s191
      %p194 = scmp.eq.s32.totalorder %s16, 0
      // Predicated region
      $region29: #{basic_block_forward.4} parent=27 // pred_check
        %p195 = pneg %p194
      $region30: #{basic_block_forward.4} parent=27 // pred_check_branch
        %197 = sbr.rel (%p195) target = $region32
      $region31: #{basic_block_forward.4} parent=27 // pred_region
        %198 = vst [vmem:[%s3] sm:$0x1] 0.0
        %199 = vst [vmem:[%s4] sm:$0x1] 0.0
      $region32: #{basic_block_forward.4} parent=27 // pred_fallthru
        _
      %v200 = vld [vmem:[%s187] sm:$0xf]
      %v201 = vld [vmem:[%s187 + $0x4] sm:$0xf]
      %v202 = vld [vmem:[%s187 + $0x8] sm:$0x1]
      %v203 = vld [vmem:[%s187 + $0xc] sm:$0xf]
      %v204 = vld [vmem:[%s187 + $0x10] sm:$0xf]
      %v205 = vld [vmem:[%s187 + $0x14] sm:$0x1]
      %v206 = vld [vmem:[%s187 + $0x18] sm:$0xf]
      %v207 = vld [vmem:[%s187 + $0x1c] sm:$0xf]
      %v208 = vld [vmem:[%s187 + $0x20] sm:$0x1]
      %v209 = vld [vmem:[%s187 + $0x24] sm:$0xf]
      %v210 = vld [vmem:[%s187 + $0x28] sm:$0xf]
      %v211 = vld [vmem:[%s187 + $0x2c] sm:$0x1]
      %v212 = vld [vmem:[%s187 + $0x30] sm:$0xf]
      %v213 = vld [vmem:[%s187 + $0x34] sm:$0xf]
      %v214 = vld [vmem:[%s187 + $0x38] sm:$0x1]
      %v215 = vld [vmem:[%s187 + $0x3c] sm:$0xf]
      %v216 = vld [vmem:[%s187 + $0x40] sm:$0xf]
      %v217 = vld [vmem:[%s187 + $0x44] sm:$0x1]
      %v218 = vld [vmem:[%s187 + $0x48] sm:$0xf]
      %v219 = vld [vmem:[%s187 + $0x4c] sm:$0xf]
      %v220 = vld [vmem:[%s187 + $0x50] sm:$0x1]
      %v221 = vld [vmem:[%s187 + $0x54] sm:$0xf]
      %v222 = vld [vmem:[%s187 + $0x58] sm:$0xf]
      %v223 = vld [vmem:[%s187 + $0x5c] sm:$0x1]
      %v224 = vld [vmem:[%s187 + $0x60] sm:$0xf]
      %v225 = vld [vmem:[%s187 + $0x64] sm:$0xf]
      %v226 = vld [vmem:[%s187 + $0x68] sm:$0x1]
      %v227 = vld [vmem:[%s187 + $0x6c] sm:$0xf]
      %v228 = vld [vmem:[%s187 + $0x70] sm:$0xf]
      %v229 = vld [vmem:[%s187 + $0x74] sm:$0x1]
      %v230 = vld [vmem:[%s187 + $0x78] sm:$0xf]
      %v231 = vld [vmem:[%s187 + $0x7c] sm:$0xf]
      %v232 = vld [vmem:[%s187 + $0x80] sm:$0x1]
      %v233 = vld [vmem:[%s187 + $0x84] sm:$0xf]
      %v234 = vld [vmem:[%s187 + $0x88] sm:$0xf]
      %v235 = vld [vmem:[%s187 + $0x8c] sm:$0x1]
      %v236 = vld [vmem:[%s187 + $0x90] sm:$0xf]
      %v237 = vld [vmem:[%s187 + $0x94] sm:$0xf]
      %v238 = vld [vmem:[%s187 + $0x98] sm:$0x1]
      %v239 = vld [vmem:[%s187 + $0x9c] sm:$0xf]
      %v240 = vld [vmem:[%s187 + $0xa0] sm:$0xf]
      %v241 = vld [vmem:[%s187 + $0xa4] sm:$0x1]
      %v242 = vld [vmem:[%s187 + $0xa8] sm:$0xf]
      %v243 = vld [vmem:[%s187 + $0xac] sm:$0xf]
      %v244 = vld [vmem:[%s187 + $0xb0] sm:$0x1]
      %v245 = vld [vmem:[%s187 + $0xb4] sm:$0xf]
      %v246 = vld [vmem:[%s187 + $0xb8] sm:$0xf]
      %v247 = vld [vmem:[%s187 + $0xbc] sm:$0x1]
      %v248 = vld [vmem:[%s187 + $0xc0] sm:$0xf]
      %v249 = vld [vmem:[%s187 + $0xc4] sm:$0xf]
      %v250 = vld [vmem:[%s187 + $0xc8] sm:$0x1]
      %v251 = vld [vmem:[%s187 + $0xcc] sm:$0xf]
      %v252 = vld [vmem:[%s187 + $0xd0] sm:$0xf]
      %v253 = vld [vmem:[%s187 + $0xd4] sm:$0x1]
      %v254 = vld [vmem:[%s1] sm:$0xf]
      %v255 = vld [vmem:[%s1 + $0x4] sm:$0xf]
      %v256 = vld [vmem:[%s1 + $0x8] sm:$0xf]
      %v257 = vld [vmem:[%s1 + $0xc] sm:$0xf]
      %v258 = vld [vmem:[%s1 + $0x10] sm:$0xf]
      %v259 = vld [vmem:[%s1 + $0x14] sm:$0xf]
      %v260 = vld [vmem:[%s1 + $0x18] sm:$0xf]
      %v261 = vld [vmem:[%s1 + $0x1c] sm:$0xf]
      %v262 = vld [vmem:[%s1 + $0x20] sm:$0xf]
      %v263 = vld [vmem:[%s1 + $0x24] sm:$0xf]
      %v264 = vld [vmem:[%s1 + $0x28] sm:$0xf]
      %v265 = vld [vmem:[%s1 + $0x2c] sm:$0xf]
      %v266 = vld [vmem:[%s1 + $0x30] sm:$0xf]
      %v267 = vld [vmem:[%s1 + $0x34] sm:$0xf]
      %v268 = vld [vmem:[%s1 + $0x38] sm:$0xf]
      %v269 = vld [vmem:[%s1 + $0x3c] sm:$0xf]
      %vm270 = vsmask.f32 3328
      %vm271 = vsmask.f32 7440
      %vm272 = vmor %vm270, %vm271
      %v274 = vshrl.u32 %v200, 16
      %v276 = vrot.slane %v274, 4
      %v277 = vshll.u32 %v200, 16
      %v279 = vrot.slane %v277, 5
      %v280 = vor.u32 %v276, %v279
      %v281 = vrot.slane %v280, 4
      %v283 = vshll.u32 %v201, 16
      %v285 = vrot.slane %v283, 5
      %v286 = vsel %vm272, %v281, %v285
      %v287 = vshrl.u32 %v201, 16
      %v289 = vrot.slane %v287, 4
      %v290 = vor.u32 %v289, %v285
      %v291 = vrot.slane %v290, 4
      %v293 = vshll.u32 %v202, 16
      %v295 = vrot.slane %v293, 5
      %v296 = vsel %vm272, %v291, %v295
      %v298 = vshrl.u32 %v203, 16
      %v300 = vrot.slane %v298, 4
      %v301 = vshll.u32 %v203, 16
      %v303 = vrot.slane %v301, 5
      %v304 = vor.u32 %v300, %v303
      %v305 = vrot.slane %v304, 4
      %v307 = vshll.u32 %v204, 16
      %v309 = vrot.slane %v307, 5
      %v310 = vsel %vm272, %v305, %v309
      %v311 = vshrl.u32 %v204, 16
      %v313 = vrot.slane %v311, 4
      %v314 = vor.u32 %v313, %v309
      %v315 = vrot.slane %v314, 4
      %v317 = vshll.u32 %v205, 16
      %v319 = vrot.slane %v317, 5
      %v320 = vsel %vm272, %v315, %v319
      %v322 = vshrl.u32 %v206, 16
      %v324 = vrot.slane %v322, 4
      %v325 = vshll.u32 %v206, 16
      %v327 = vrot.slane %v325, 5
      %v328 = vor.u32 %v324, %v327
      %v329 = vrot.slane %v328, 4
      %v331 = vshll.u32 %v207, 16
      %v333 = vrot.slane %v331, 5
      %v334 = vsel %vm272, %v329, %v333
      %v335 = vshrl.u32 %v207, 16
      %v337 = vrot.slane %v335, 4
      %v338 = vor.u32 %v337, %v333
      %v339 = vrot.slane %v338, 4
      %v341 = vshll.u32 %v208, 16
      %v343 = vrot.slane %v341, 5
      %v344 = vsel %vm272, %v339, %v343
      %v346 = vshrl.u32 %v209, 16
      %v348 = vrot.slane %v346, 4
      %v349 = vshll.u32 %v209, 16
      %v351 = vrot.slane %v349, 5
      %v352 = vor.u32 %v348, %v351
      %v353 = vrot.slane %v352, 4
      %v355 = vshll.u32 %v210, 16
      %v357 = vrot.slane %v355, 5
      %v358 = vsel %vm272, %v353, %v357
      %v359 = vshrl.u32 %v210, 16
      %v361 = vrot.slane %v359, 4
      %v362 = vor.u32 %v361, %v357
      %v363 = vrot.slane %v362, 4
      %v365 = vshll.u32 %v211, 16
      %v367 = vrot.slane %v365, 5
      %v368 = vsel %vm272, %v363, %v367
      %v370 = vshrl.u32 %v212, 16
      %v372 = vrot.slane %v370, 4
      %v373 = vshll.u32 %v212, 16
      %v375 = vrot.slane %v373, 5
      %v376 = vor.u32 %v372, %v375
      %v377 = vrot.slane %v376, 4
      %v379 = vshll.u32 %v213, 16
      %v381 = vrot.slane %v379, 5
      %v382 = vsel %vm272, %v377, %v381
      %v383 = vshrl.u32 %v213, 16
      %v385 = vrot.slane %v383, 4
      %v386 = vor.u32 %v385, %v381
      %v387 = vrot.slane %v386, 4
      %v389 = vshll.u32 %v214, 16
      %v391 = vrot.slane %v389, 5
      %v392 = vsel %vm272, %v387, %v391
      %v394 = vshrl.u32 %v215, 16
      %v396 = vrot.slane %v394, 4
      %v397 = vshll.u32 %v215, 16
      %v399 = vrot.slane %v397, 5
      %v400 = vor.u32 %v396, %v399
      %v401 = vrot.slane %v400, 4
      %v403 = vshll.u32 %v216, 16
      %v405 = vrot.slane %v403, 5
      %v406 = vsel %vm272, %v401, %v405
      %v407 = vshrl.u32 %v216, 16
      %v409 = vrot.slane %v407, 4
      %v410 = vor.u32 %v409, %v405
      %v411 = vrot.slane %v410, 4
      %v413 = vshll.u32 %v217, 16
      %v415 = vrot.slane %v413, 5
      %v416 = vsel %vm272, %v411, %v415
      %v418 = vshrl.u32 %v218, 16
      %v420 = vrot.slane %v418, 4
      %v421 = vshll.u32 %v218, 16
      %v423 = vrot.slane %v421, 5
      %v424 = vor.u32 %v420, %v423
      %v425 = vrot.slane %v424, 4
      %v427 = vshll.u32 %v219, 16
      %v429 = vrot.slane %v427, 5
      %v430 = vsel %vm272, %v425, %v429
      %v431 = vshrl.u32 %v219, 16
      %v433 = vrot.slane %v431, 4
      %v434 = vor.u32 %v433, %v429
      %v435 = vrot.slane %v434, 4
      %v437 = vshll.u32 %v220, 16
      %v439 = vrot.slane %v437, 5
      %v440 = vsel %vm272, %v435, %v439
      %v442 = vshrl.u32 %v221, 16
      %v444 = vrot.slane %v442, 4
      %v445 = vshll.u32 %v221, 16
      %v447 = vrot.slane %v445, 5
      %v448 = vor.u32 %v444, %v447
      %v449 = vrot.slane %v448, 4
      %v451 = vshll.u32 %v222, 16
      %v453 = vrot.slane %v451, 5
      %v454 = vsel %vm272, %v449, %v453
      %v455 = vshrl.u32 %v222, 16
      %v457 = vrot.slane %v455, 4
      %v458 = vor.u32 %v457, %v453
      %v459 = vrot.slane %v458, 4
      %v461 = vshll.u32 %v223, 16
      %v463 = vrot.slane %v461, 5
      %v464 = vsel %vm272, %v459, %v463
      %v466 = vshrl.u32 %v224, 16
      %v468 = vrot.slane %v466, 4
      %v469 = vshll.u32 %v224, 16
      %v471 = vrot.slane %v469, 5
      %v472 = vor.u32 %v468, %v471
      %v473 = vrot.slane %v472, 4
      %v475 = vshll.u32 %v225, 16
      %v477 = vrot.slane %v475, 5
      %v478 = vsel %vm272, %v473, %v477
      %v479 = vshrl.u32 %v225, 16
      %v481 = vrot.slane %v479, 4
      %v482 = vor.u32 %v481, %v477
      %v483 = vrot.slane %v482, 4
      %v485 = vshll.u32 %v226, 16
      %v487 = vrot.slane %v485, 5
      %v488 = vsel %vm272, %v483, %v487
      %v490 = vshrl.u32 %v227, 16
      %v492 = vrot.slane %v490, 4
      %v493 = vshll.u32 %v227, 16
      %v495 = vrot.slane %v493, 5
      %v496 = vor.u32 %v492, %v495
      %v497 = vrot.slane %v496, 4
      %v499 = vshll.u32 %v228, 16
      %v501 = vrot.slane %v499, 5
      %v502 = vsel %vm272, %v497, %v501
      %v503 = vshrl.u32 %v228, 16
      %v505 = vrot.slane %v503, 4
      %v506 = vor.u32 %v505, %v501
      %v507 = vrot.slane %v506, 4
      %v509 = vshll.u32 %v229, 16
      %v511 = vrot.slane %v509, 5
      %v512 = vsel %vm272, %v507, %v511
      %v514 = vshrl.u32 %v230, 16
      %v516 = vrot.slane %v514, 4
      %v517 = vshll.u32 %v230, 16
      %v519 = vrot.slane %v517, 5
      %v520 = vor.u32 %v516, %v519
      %v521 = vrot.slane %v520, 4
      %v523 = vshll.u32 %v231, 16
      %v525 = vrot.slane %v523, 5
      %v526 = vsel %vm272, %v521, %v525
      %v527 = vshrl.u32 %v231, 16
      %v529 = vrot.slane %v527, 4
      %v530 = vor.u32 %v529, %v525
      %v531 = vrot.slane %v530, 4
      %v533 = vshll.u32 %v232, 16
      %v535 = vrot.slane %v533, 5
      %v536 = vsel %vm272, %v531, %v535
      %v538 = vshrl.u32 %v233, 16
      %v540 = vrot.slane %v538, 4
      %v541 = vshll.u32 %v233, 16
      %v543 = vrot.slane %v541, 5
      %v544 = vor.u32 %v540, %v543
      %v545 = vrot.slane %v544, 4
      %v547 = vshll.u32 %v234, 16
      %v549 = vrot.slane %v547, 5
      %v550 = vsel %vm272, %v545, %v549
      %v551 = vshrl.u32 %v234, 16
      %v553 = vrot.slane %v551, 4
      %v554 = vor.u32 %v553, %v549
      %v555 = vrot.slane %v554, 4
      %v557 = vshll.u32 %v235, 16
      %v559 = vrot.slane %v557, 5
      %v560 = vsel %vm272, %v555, %v559
      %v562 = vshrl.u32 %v236, 16
      %v564 = vrot.slane %v562, 4
      %v565 = vshll.u32 %v236, 16
      %v567 = vrot.slane %v565, 5
      %v568 = vor.u32 %v564, %v567
      %v569 = vrot.slane %v568, 4
      %v571 = vshll.u32 %v237, 16
      %v573 = vrot.slane %v571, 5
      %v574 = vsel %vm272, %v569, %v573
      %v575 = vshrl.u32 %v237, 16
      %v577 = vrot.slane %v575, 4
      %v578 = vor.u32 %v577, %v573
      %v579 = vrot.slane %v578, 4
      %v581 = vshll.u32 %v238, 16
      %v583 = vrot.slane %v581, 5
      %v584 = vsel %vm272, %v579, %v583
      %v586 = vshrl.u32 %v239, 16
      %v588 = vrot.slane %v586, 4
      %v589 = vshll.u32 %v239, 16
      %v591 = vrot.slane %v589, 5
      %v592 = vor.u32 %v588, %v591
      %v593 = vrot.slane %v592, 4
      %v595 = vshll.u32 %v240, 16
      %v597 = vrot.slane %v595, 5
      %v598 = vsel %vm272, %v593, %v597
      %v599 = vshrl.u32 %v240, 16
      %v601 = vrot.slane %v599, 4
      %v602 = vor.u32 %v601, %v597
      %v603 = vrot.slane %v602, 4
      %v605 = vshll.u32 %v241, 16
      %v607 = vrot.slane %v605, 5
      %v608 = vsel %vm272, %v603, %v607
      %v610 = vshrl.u32 %v242, 16
      %v612 = vrot.slane %v610, 4
      %v613 = vshll.u32 %v242, 16
      %v615 = vrot.slane %v613, 5
      %v616 = vor.u32 %v612, %v615
      %v617 = vrot.slane %v616, 4
      %v619 = vshll.u32 %v243, 16
      %v621 = vrot.slane %v619, 5
      %v622 = vsel %vm272, %v617, %v621
      %v623 = vshrl.u32 %v243, 16
      %v625 = vrot.slane %v623, 4
      %v626 = vor.u32 %v625, %v621
      %v627 = vrot.slane %v626, 4
      %v629 = vshll.u32 %v244, 16
      %v631 = vrot.slane %v629, 5
      %v632 = vsel %vm272, %v627, %v631
      %v634 = vshrl.u32 %v245, 16
      %v636 = vrot.slane %v634, 4
      %v637 = vshll.u32 %v245, 16
      %v639 = vrot.slane %v637, 5
      %v640 = vor.u32 %v636, %v639
      %v641 = vrot.slane %v640, 4
      %v643 = vshll.u32 %v246, 16
      %v645 = vrot.slane %v643, 5
      %v646 = vsel %vm272, %v641, %v645
      %v647 = vshrl.u32 %v246, 16
      %v649 = vrot.slane %v647, 4
      %v650 = vor.u32 %v649, %v645
      %v651 = vrot.slane %v650, 4
      %v653 = vshll.u32 %v247, 16
      %v655 = vrot.slane %v653, 5
      %v656 = vsel %vm272, %v651, %v655
      %s657 = scalar_lea.vmem %s1, 64
      %v658 = vld [vmem:[%s657] sm:$0xf]
      %v659 = vld [vmem:[%s657 + $0x4] sm:$0xf]
      %v660 = vld [vmem:[%s657 + $0x8] sm:$0xf]
      %v661 = vld [vmem:[%s657 + $0xc] sm:$0xf]
      %v662 = vld [vmem:[%s657 + $0x10] sm:$0xf]
      %v663 = vld [vmem:[%s657 + $0x14] sm:$0xf]
      %v664 = vld [vmem:[%s657 + $0x18] sm:$0xf]
      %v665 = vld [vmem:[%s657 + $0x1c] sm:$0xf]
      %v666 = vld [vmem:[%s657 + $0x20] sm:$0xf]
      %v667 = vld [vmem:[%s657 + $0x24] sm:$0xf]
      %v668 = vld [vmem:[%s657 + $0x28] sm:$0xf]
      %v669 = vld [vmem:[%s657 + $0x2c] sm:$0xf]
      %v670 = vld [vmem:[%s657 + $0x30] sm:$0xf]
      %v671 = vld [vmem:[%s657 + $0x34] sm:$0xf]
      %v672 = vld [vmem:[%s657 + $0x38] sm:$0xf]
      %v673 = vld [vmem:[%s657 + $0x3c] sm:$0xf]
      %v674 = vunpack.c.l.b16 %v286
      %v675 = vunpack.c.l.b16 %v296
      %v676 = vunpack.c.l.b16 %v310
      %v677 = vunpack.c.l.b16 %v320
      %v678 = vunpack.c.l.b16 %v334
      %v679 = vunpack.c.l.b16 %v344
      %v680 = vunpack.c.l.b16 %v358
      %v681 = vunpack.c.l.b16 %v368
      %v682 = vunpack.c.l.b16 %v382
      %v683 = vunpack.c.l.b16 %v392
      %v684 = vunpack.c.l.b16 %v406
      %v685 = vunpack.c.l.b16 %v416
      %v686 = vunpack.c.l.b16 %v430
      %v687 = vunpack.c.l.b16 %v440
      %v688 = vunpack.c.l.b16 %v454
      %v689 = vunpack.c.l.b16 %v464
      %v690 = vunpack.c.l.b16 %v478
      %v691 = vunpack.c.l.b16 %v488
      %v692 = vunpack.c.l.b16 %v502
      %v693 = vunpack.c.l.b16 %v512
      %v694 = vunpack.c.l.b16 %v526
      %v695 = vunpack.c.l.b16 %v536
      %v696 = vunpack.c.l.b16 %v550
      %v697 = vunpack.c.l.b16 %v560
      %v698 = vunpack.c.l.b16 %v574
      %v699 = vunpack.c.l.b16 %v584
      %v700 = vunpack.c.l.b16 %v598
      %v701 = vunpack.c.l.b16 %v608
      %v702 = vunpack.c.l.b16 %v622
      %v703 = vunpack.c.l.b16 %v632
      %v704 = vunpack.c.l.b16 %v646
      %v705 = vunpack.c.l.b16 %v656
      %v706 = vpack.c.b16 %v675, %v674
      %v707 = vpack.c.b16 %v677, %v676
      %v708 = vpack.c.b16 %v679, %v678
      %v709 = vpack.c.b16 %v681, %v680
      %v710 = vpack.c.b16 %v683, %v682
      %v711 = vpack.c.b16 %v685, %v684
      %v712 = vpack.c.b16 %v687, %v686
      %v713 = vpack.c.b16 %v689, %v688
      %v714 = vpack.c.b16 %v691, %v690
      %v715 = vpack.c.b16 %v693, %v692
      %v716 = vpack.c.b16 %v695, %v694
      %v717 = vpack.c.b16 %v697, %v696
      %v718 = vpack.c.b16 %v699, %v698
      %v719 = vpack.c.b16 %v701, %v700
      %v720 = vpack.c.b16 %v703, %v702
      %v721 = vpack.c.b16 %v705, %v704
      %v754 = vunpack.c.l.b16 %v658
      %v755 = vunpack.c.l.b16 %v659
      %v756 = vunpack.c.l.b16 %v660
      %v757 = vunpack.c.l.b16 %v661
      %v758 = vunpack.c.l.b16 %v662
      %v759 = vunpack.c.l.b16 %v663
      %v760 = vunpack.c.l.b16 %v664
      %v761 = vunpack.c.l.b16 %v665
      %v762 = vunpack.c.l.b16 %v666
      %v763 = vunpack.c.l.b16 %v667
      %v764 = vunpack.c.l.b16 %v668
      %v765 = vunpack.c.l.b16 %v669
      %v766 = vunpack.c.l.b16 %v670
      %v767 = vunpack.c.l.b16 %v671
      %v768 = vunpack.c.l.b16 %v672
      %v769 = vunpack.c.l.b16 %v673
      %v770 = vpack.c.b16 %v755, %v754
      %v771 = vpack.c.b16 %v757, %v756
      %v772 = vpack.c.b16 %v759, %v758
      %v773 = vpack.c.b16 %v761, %v760
      %v774 = vpack.c.b16 %v763, %v762
      %v775 = vpack.c.b16 %v765, %v764
      %v776 = vpack.c.b16 %v767, %v766
      %v777 = vpack.c.b16 %v769, %v768
      %786 = vmatprep.subr.bf16.mxu0 0
      %787 = vmatpush1.bf16.msra.mxu0 %v770
      %788 = vmatprep.subr.bf16.mxu0 0
      %789 = vmatpush1.bf16.msra.mxu0 %v771
      %790 = vmatprep.subr.bf16.mxu0 0
      %791 = vmatpush1.bf16.msra.mxu0 %v772
      %792 = vmatprep.subr.bf16.mxu0 0
      %793 = vmatpush1.bf16.msra.mxu0 %v773
      %794 = vmatprep.subr.bf16.mxu0 0
      %795 = vmatpush1.bf16.msra.mxu0 %v774
      %796 = vmatprep.subr.bf16.mxu0 0
      %797 = vmatpush1.bf16.msra.mxu0 %v775
      %798 = vmatprep.subr.bf16.mxu0 0
      %799 = vmatpush1.bf16.msra.mxu0 %v776
      %800 = vmatprep.subr.bf16.mxu0 0
      %801 = vmatpush1.bf16.msra.mxu0 %v777
      %802 = vmatprep.subr.bf16.mxu0 0
      %803 = vmatpush1.bf16.msra.mxu0 0
      %804 = vmatprep.subr.bf16.mxu0 0
      %805 = vmatpush1.bf16.msra.mxu0 0
      %806 = vmatprep.subr.bf16.mxu0 0
      %807 = vmatpush1.bf16.msra.mxu0 0
      %808 = vmatprep.subr.bf16.mxu0 0
      %809 = vmatpush1.bf16.msra.mxu0 0
      %810 = vmatprep.subr.bf16.mxu0 0
      %811 = vmatpush1.bf16.msra.mxu0 0
      %812 = vmatprep.subr.bf16.mxu0 0
      %813 = vmatpush1.bf16.msra.mxu0 0
      %814 = vmatprep.subr.bf16.mxu0 0
      %815 = vmatpush1.bf16.msra.mxu0 0
      %816 = vmatprep.subr.bf16.mxu0 0
      %817 = vmatpush1.bf16.msra.mxu0 0
      %818 = vmatprep.mubr.bf16.mxu0 0
      %819 = vmatmul.mubr.bf16.gmra.mrb[0].mxu0 %v706
      %v820 = vpop.f32.mrb[0].mxu0
      %v821 = vadd.f32 0.0, %v820
      %v822 = vpop.f32.mrb[0].mxu0
      %v823 = vpop.f32.mrb[0].mxu0
      %v824 = vadd.f32 0.0, %v823
      %v825 = vpop.f32.mrb[0].mxu0
      %826 = vmatprep.mubr.bf16.mxu0 0
      %827 = vmatmul.mubr.bf16.gmra.mrb[0].mxu0 %v707
      %v828 = vpop.f32.mrb[0].mxu0
      %v829 = vadd.f32 0.0, %v828
      %v830 = vpop.f32.mrb[0].mxu0
      %v831 = vpop.f32.mrb[0].mxu0
      %v832 = vadd.f32 0.0, %v831
      %v833 = vpop.f32.mrb[0].mxu0
      %834 = vmatprep.mubr.bf16.mxu0 0
      %835 = vmatmul.mubr.bf16.gmra.mrb[0].mxu0 %v708
      %v836 = vpop.f32.mrb[0].mxu0
      %v837 = vadd.f32 0.0, %v836
      %v838 = vpop.f32.mrb[0].mxu0
      %v839 = vpop.f32.mrb[0].mxu0
      %v840 = vadd.f32 0.0, %v839
      %v841 = vpop.f32.mrb[0].mxu0
      %842 = vmatprep.mubr.bf16.mxu0 0
      %843 = vmatmul.mubr.bf16.gmra.mrb[0].mxu0 %v709
      %v844 = vpop.f32.mrb[0].mxu0
      %v845 = vadd.f32 0.0, %v844
      %v846 = vpop.f32.mrb[0].mxu0
      %v847 = vpop.f32.mrb[0].mxu0
      %v848 = vadd.f32 0.0, %v847
      %v849 = vpop.f32.mrb[0].mxu0
      %850 = vmatprep.mubr.bf16.mxu0 0
      %851 = vmatmul.mubr.bf16.gmra.mrb[0].mxu0 %v710
      %v852 = vpop.f32.mrb[0].mxu0
      %v853 = vadd.f32 0.0, %v852
      %v854 = vpop.f32.mrb[0].mxu0
      %v855 = vpop.f32.mrb[0].mxu0
      %v856 = vadd.f32 0.0, %v855
      %v857 = vpop.f32.mrb[0].mxu0
      %858 = vmatprep.mubr.bf16.mxu0 0
      %859 = vmatmul.mubr.bf16.gmra.mrb[0].mxu0 %v711
      %v860 = vpop.f32.mrb[0].mxu0
      %v861 = vadd.f32 0.0, %v860
      %v862 = vpop.f32.mrb[0].mxu0
      %v863 = vpop.f32.mrb[0].mxu0
      %v864 = vadd.f32 0.0, %v863
      %v865 = vpop.f32.mrb[0].mxu0
      %866 = vmatprep.mubr.bf16.mxu0 0
      %867 = vmatmul.mubr.bf16.gmra.mrb[0].mxu0 %v712
      %v868 = vpop.f32.mrb[0].mxu0
      %v869 = vadd.f32 0.0, %v868
      %v870 = vpop.f32.mrb[0].mxu0
      %v871 = vpop.f32.mrb[0].mxu0
      %v872 = vadd.f32 0.0, %v871
      %v873 = vpop.f32.mrb[0].mxu0
      %874 = vmatprep.mubr.bf16.mxu0 0
      %875 = vmatmul.mubr.bf16.gmra.mrb[0].mxu0 %v713
      %v876 = vpop.f32.mrb[0].mxu0
      %v877 = vadd.f32 0.0, %v876
      %v878 = vpop.f32.mrb[0].mxu0
      %v879 = vpop.f32.mrb[0].mxu0
      %v880 = vadd.f32 0.0, %v879
      %v881 = vpop.f32.mrb[0].mxu0
      %882 = vmatprep.mubr.bf16.mxu0 0
      %883 = vmatmul.mubr.bf16.gmra.mrb[0].mxu0 %v714
      %v884 = vpop.f32.mrb[0].mxu0
      %v885 = vadd.f32 0.0, %v884
      %v886 = vpop.f32.mrb[0].mxu0
      %v887 = vpop.f32.mrb[0].mxu0
      %v888 = vadd.f32 0.0, %v887
      %v889 = vpop.f32.mrb[0].mxu0
      %890 = vmatprep.mubr.bf16.mxu0 0
      %891 = vmatmul.mubr.bf16.gmra.mrb[0].mxu0 %v715
      %v892 = vpop.f32.mrb[0].mxu0
      %v893 = vadd.f32 0.0, %v892
      %v894 = vpop.f32.mrb[0].mxu0
      %v895 = vpop.f32.mrb[0].mxu0
      %v896 = vadd.f32 0.0, %v895
      %v897 = vpop.f32.mrb[0].mxu0
      %898 = vmatprep.mubr.bf16.mxu0 0
      %899 = vmatmul.mubr.bf16.gmra.mrb[0].mxu0 %v716
      %v900 = vpop.f32.mrb[0].mxu0
      %v901 = vadd.f32 0.0, %v900
      %v902 = vpop.f32.mrb[0].mxu0
      %v903 = vpop.f32.mrb[0].mxu0
      %v904 = vadd.f32 0.0, %v903
      %v905 = vpop.f32.mrb[0].mxu0
      %906 = vmatprep.mubr.bf16.mxu0 0
      %907 = vmatmul.mubr.bf16.gmra.mrb[0].mxu0 %v717
      %v908 = vpop.f32.mrb[0].mxu0
      %v909 = vadd.f32 0.0, %v908
      %v910 = vpop.f32.mrb[0].mxu0
      %v911 = vpop.f32.mrb[0].mxu0
      %v912 = vadd.f32 0.0, %v911
      %v913 = vpop.f32.mrb[0].mxu0
      %914 = vmatprep.mubr.bf16.mxu0 0
      %915 = vmatmul.mubr.bf16.gmra.mrb[0].mxu0 %v718
      %v916 = vpop.f32.mrb[0].mxu0
      %v917 = vadd.f32 0.0, %v916
      %v918 = vpop.f32.mrb[0].mxu0
      %v919 = vpop.f32.mrb[0].mxu0
      %v920 = vadd.f32 0.0, %v919
      %v921 = vpop.f32.mrb[0].mxu0
      %922 = vmatprep.mubr.bf16.mxu0 0
      %923 = vmatmul.mubr.bf16.gmra.mrb[0].mxu0 %v719
      %v924 = vpop.f32.mrb[0].mxu0
      %v925 = vadd.f32 0.0, %v924
      %v926 = vpop.f32.mrb[0].mxu0
      %v927 = vpop.f32.mrb[0].mxu0
      %v928 = vadd.f32 0.0, %v927
      %v929 = vpop.f32.mrb[0].mxu0
      %930 = vmatprep.mubr.bf16.mxu0 0
      %931 = vmatmul.mubr.bf16.gmra.mrb[0].mxu0 %v720
      %v932 = vpop.f32.mrb[0].mxu0
      %v933 = vadd.f32 0.0, %v932
      %v934 = vpop.f32.mrb[0].mxu0
      %v935 = vpop.f32.mrb[0].mxu0
      %v936 = vadd.f32 0.0, %v935
      %v937 = vpop.f32.mrb[0].mxu0
      %938 = vmatprep.mubr.bf16.mxu0 0
      %939 = vmatmul.mubr.bf16.gmra.mrb[0].mxu0 %v721
      %v940 = vpop.f32.mrb[0].mxu0
      %v941 = vadd.f32 0.0, %v940
      %v942 = vpop.f32.mrb[0].mxu0
      %v943 = vpop.f32.mrb[0].mxu0
      %v944 = vadd.f32 0.0, %v943
      %v945 = vpop.f32.mrb[0].mxu0
      %946 = vdwg.mxu0
      %v979 = vunpack.c.l.b16 %v200
      %v980 = vunpack.c.l.b16 %v201
      %v981 = vunpack.c.l.b16 %v203
      %v982 = vunpack.c.l.b16 %v204
      %v983 = vunpack.c.l.b16 %v206
      %v984 = vunpack.c.l.b16 %v207
      %v985 = vunpack.c.l.b16 %v209
      %v986 = vunpack.c.l.b16 %v210
      %v987 = vunpack.c.l.b16 %v212
      %v988 = vunpack.c.l.b16 %v213
      %v989 = vunpack.c.l.b16 %v215
      %v990 = vunpack.c.l.b16 %v216
      %v991 = vunpack.c.l.b16 %v218
      %v992 = vunpack.c.l.b16 %v219
      %v993 = vunpack.c.l.b16 %v221
      %v994 = vunpack.c.l.b16 %v222
      %v995 = vunpack.c.l.b16 %v224
      %v996 = vunpack.c.l.b16 %v225
      %v997 = vunpack.c.l.b16 %v227
      %v998 = vunpack.c.l.b16 %v228
      %v999 = vunpack.c.l.b16 %v230
      %v1000 = vunpack.c.l.b16 %v231
      %v1001 = vunpack.c.l.b16 %v233
      %v1002 = vunpack.c.l.b16 %v234
      %v1003 = vunpack.c.l.b16 %v236
      %v1004 = vunpack.c.l.b16 %v237
      %v1005 = vunpack.c.l.b16 %v239
      %v1006 = vunpack.c.l.b16 %v240
      %v1007 = vunpack.c.l.b16 %v242
      %v1008 = vunpack.c.l.b16 %v243
      %v1009 = vunpack.c.l.b16 %v245
      %v1010 = vunpack.c.l.b16 %v246
      %v1011 = vpack.c.b16 %v980, %v979
      %v1012 = vpack.c.b16 %v982, %v981
      %v1013 = vpack.c.b16 %v984, %v983
      %v1014 = vpack.c.b16 %v986, %v985
      %v1015 = vpack.c.b16 %v988, %v987
      %v1016 = vpack.c.b16 %v990, %v989
      %v1017 = vpack.c.b16 %v992, %v991
      %v1018 = vpack.c.b16 %v994, %v993
      %v1019 = vpack.c.b16 %v996, %v995
      %v1020 = vpack.c.b16 %v998, %v997
      %v1021 = vpack.c.b16 %v1000, %v999
      %v1022 = vpack.c.b16 %v1002, %v1001
      %v1023 = vpack.c.b16 %v1004, %v1003
      %v1024 = vpack.c.b16 %v1006, %v1005
      %v1025 = vpack.c.b16 %v1008, %v1007
      %v1026 = vpack.c.b16 %v1010, %v1009
      %v1059 = vunpack.c.l.b16 %v254
      %v1060 = vunpack.c.l.b16 %v255
      %v1061 = vunpack.c.l.b16 %v256
      %v1062 = vunpack.c.l.b16 %v257
      %v1063 = vunpack.c.l.b16 %v258
      %v1064 = vunpack.c.l.b16 %v259
      %v1065 = vunpack.c.l.b16 %v260
      %v1066 = vunpack.c.l.b16 %v261
      %v1067 = vunpack.c.l.b16 %v262
      %v1068 = vunpack.c.l.b16 %v263
      %v1069 = vunpack.c.l.b16 %v264
      %v1070 = vunpack.c.l.b16 %v265
      %v1071 = vunpack.c.l.b16 %v266
      %v1072 = vunpack.c.l.b16 %v267
      %v1073 = vunpack.c.l.b16 %v268
      %v1074 = vunpack.c.l.b16 %v269
      %v1075 = vpack.c.b16 %v1060, %v1059
      %v1076 = vpack.c.b16 %v1062, %v1061
      %v1077 = vpack.c.b16 %v1064, %v1063
      %v1078 = vpack.c.b16 %v1066, %v1065
      %v1079 = vpack.c.b16 %v1068, %v1067
      %v1080 = vpack.c.b16 %v1070, %v1069
      %v1081 = vpack.c.b16 %v1072, %v1071
      %v1082 = vpack.c.b16 %v1074, %v1073
      %1091 = vmatprep.subr.bf16.mxu0 0
      %1092 = vmatpush1.bf16.msra.mxu0 %v1075
      %1093 = vmatprep.subr.bf16.mxu0 0
      %1094 = vmatpush1.bf16.msra.mxu0 %v1076
      %1095 = vmatprep.subr.bf16.mxu0 0
      %1096 = vmatpush1.bf16.msra.mxu0 %v1077
      %1097 = vmatprep.subr.bf16.mxu0 0
      %1098 = vmatpush1.bf16.msra.mxu0 %v1078
      %1099 = vmatprep.subr.bf16.mxu0 0
      %1100 = vmatpush1.bf16.msra.mxu0 %v1079
      %1101 = vmatprep.subr.bf16.mxu0 0
      %1102 = vmatpush1.bf16.msra.mxu0 %v1080
      %1103 = vmatprep.subr.bf16.mxu0 0
      %1104 = vmatpush1.bf16.msra.mxu0 %v1081
      %1105 = vmatprep.subr.bf16.mxu0 0
      %1106 = vmatpush1.bf16.msra.mxu0 %v1082
      %1107 = vmatprep.subr.bf16.mxu0 0
      %1108 = vmatpush1.bf16.msra.mxu0 0
      %1109 = vmatprep.subr.bf16.mxu0 0
      %1110 = vmatpush1.bf16.msra.mxu0 0
      %1111 = vmatprep.subr.bf16.mxu0 0
      %1112 = vmatpush1.bf16.msra.mxu0 0
      %1113 = vmatprep.subr.bf16.mxu0 0
      %1114 = vmatpush1.bf16.msra.mxu0 0
      %1115 = vmatprep.subr.bf16.mxu0 0
      %1116 = vmatpush1.bf16.msra.mxu0 0
      %1117 = vmatprep.subr.bf16.mxu0 0
      %1118 = vmatpush1.bf16.msra.mxu0 0
      %1119 = vmatprep.subr.bf16.mxu0 0
      %1120 = vmatpush1.bf16.msra.mxu0 0
      %1121 = vmatprep.subr.bf16.mxu0 0
      %1122 = vmatpush1.bf16.msra.mxu0 0
      %1123 = vmatprep.mubr.bf16.mxu0 0
      %1124 = vmatmul.mubr.bf16.gmra.mrb[0].mxu0 %v1011
      %v1125 = vpop.f32.mrb[0].mxu0
      %v1126 = vadd.f32 %v821, %v1125
      %v1127 = vpop.f32.mrb[0].mxu0
      %v1128 = vpop.f32.mrb[0].mxu0
      %v1129 = vadd.f32 %v824, %v1128
      %v1130 = vpop.f32.mrb[0].mxu0
      %1131 = vmatprep.mubr.bf16.mxu0 0
      %1132 = vmatmul.mubr.bf16.gmra.mrb[0].mxu0 %v1012
      %v1133 = vpop.f32.mrb[0].mxu0
      %v1134 = vadd.f32 %v829, %v1133
      %v1135 = vpop.f32.mrb[0].mxu0
      %v1136 = vpop.f32.mrb[0].mxu0
      %v1137 = vadd.f32 %v832, %v1136
      %v1138 = vpop.f32.mrb[0].mxu0
      %1139 = vmatprep.mubr.bf16.mxu0 0
      %1140 = vmatmul.mubr.bf16.gmra.mrb[0].mxu0 %v1013
      %v1141 = vpop.f32.mrb[0].mxu0
      %v1142 = vadd.f32 %v837, %v1141
      %v1143 = vpop.f32.mrb[0].mxu0
      %v1144 = vpop.f32.mrb[0].mxu0
      %v1145 = vadd.f32 %v840, %v1144
      %v1146 = vpop.f32.mrb[0].mxu0
      %1147 = vmatprep.mubr.bf16.mxu0 0
      %1148 = vmatmul.mubr.bf16.gmra.mrb[0].mxu0 %v1014
      %v1149 = vpop.f32.mrb[0].mxu0
      %v1150 = vadd.f32 %v845, %v1149
      %v1151 = vpop.f32.mrb[0].mxu0
      %v1152 = vpop.f32.mrb[0].mxu0
      %v1153 = vadd.f32 %v848, %v1152
      %v1154 = vpop.f32.mrb[0].mxu0
      %1155 = vmatprep.mubr.bf16.mxu0 0
      %1156 = vmatmul.mubr.bf16.gmra.mrb[0].mxu0 %v1015
      %v1157 = vpop.f32.mrb[0].mxu0
      %v1158 = vadd.f32 %v853, %v1157
      %v1159 = vpop.f32.mrb[0].mxu0
      %v1160 = vpop.f32.mrb[0].mxu0
      %v1161 = vadd.f32 %v856, %v1160
      %v1162 = vpop.f32.mrb[0].mxu0
      %1163 = vmatprep.mubr.bf16.mxu0 0
      %1164 = vmatmul.mubr.bf16.gmra.mrb[0].mxu0 %v1016
      %v1165 = vpop.f32.mrb[0].mxu0
      %v1166 = vadd.f32 %v861, %v1165
      %v1167 = vpop.f32.mrb[0].mxu0
      %v1168 = vpop.f32.mrb[0].mxu0
      %v1169 = vadd.f32 %v864, %v1168
      %v1170 = vpop.f32.mrb[0].mxu0
      %1171 = vmatprep.mubr.bf16.mxu0 0
      %1172 = vmatmul.mubr.bf16.gmra.mrb[0].mxu0 %v1017
      %v1173 = vpop.f32.mrb[0].mxu0
      %v1174 = vadd.f32 %v869, %v1173
      %v1175 = vpop.f32.mrb[0].mxu0
      %v1176 = vpop.f32.mrb[0].mxu0
      %v1177 = vadd.f32 %v872, %v1176
      %v1178 = vpop.f32.mrb[0].mxu0
      %1179 = vmatprep.mubr.bf16.mxu0 0
      %1180 = vmatmul.mubr.bf16.gmra.mrb[0].mxu0 %v1018
      %v1181 = vpop.f32.mrb[0].mxu0
      %v1182 = vadd.f32 %v877, %v1181
      %v1183 = vpop.f32.mrb[0].mxu0
      %v1184 = vpop.f32.mrb[0].mxu0
      %v1185 = vadd.f32 %v880, %v1184
      %v1186 = vpop.f32.mrb[0].mxu0
      %1187 = vmatprep.mubr.bf16.mxu0 0
      %1188 = vmatmul.mubr.bf16.gmra.mrb[0].mxu0 %v1019
      %v1189 = vpop.f32.mrb[0].mxu0
      %v1190 = vadd.f32 %v885, %v1189
      %v1191 = vpop.f32.mrb[0].mxu0
      %v1192 = vpop.f32.mrb[0].mxu0
      %v1193 = vadd.f32 %v888, %v1192
      %v1194 = vpop.f32.mrb[0].mxu0
      %1195 = vmatprep.mubr.bf16.mxu0 0
      %1196 = vmatmul.mubr.bf16.gmra.mrb[0].mxu0 %v1020
      %v1197 = vpop.f32.mrb[0].mxu0
      %v1198 = vadd.f32 %v893, %v1197
      %v1199 = vpop.f32.mrb[0].mxu0
      %v1200 = vpop.f32.mrb[0].mxu0
      %v1201 = vadd.f32 %v896, %v1200
      %v1202 = vpop.f32.mrb[0].mxu0
      %1203 = vmatprep.mubr.bf16.mxu0 0
      %1204 = vmatmul.mubr.bf16.gmra.mrb[0].mxu0 %v1021
      %v1205 = vpop.f32.mrb[0].mxu0
      %v1206 = vadd.f32 %v901, %v1205
      %v1207 = vpop.f32.mrb[0].mxu0
      %v1208 = vpop.f32.mrb[0].mxu0
      %v1209 = vadd.f32 %v904, %v1208
      %v1210 = vpop.f32.mrb[0].mxu0
      %1211 = vmatprep.mubr.bf16.mxu0 0
      %1212 = vmatmul.mubr.bf16.gmra.mrb[0].mxu0 %v1022
      %v1213 = vpop.f32.mrb[0].mxu0
      %v1214 = vadd.f32 %v909, %v1213
      %v1215 = vpop.f32.mrb[0].mxu0
      %v1216 = vpop.f32.mrb[0].mxu0
      %v1217 = vadd.f32 %v912, %v1216
      %v1218 = vpop.f32.mrb[0].mxu0
      %1219 = vmatprep.mubr.bf16.mxu0 0
      %1220 = vmatmul.mubr.bf16.gmra.mrb[0].mxu0 %v1023
      %v1221 = vpop.f32.mrb[0].mxu0
      %v1222 = vadd.f32 %v917, %v1221
      %v1223 = vpop.f32.mrb[0].mxu0
      %v1224 = vpop.f32.mrb[0].mxu0
      %v1225 = vadd.f32 %v920, %v1224
      %v1226 = vpop.f32.mrb[0].mxu0
      %1227 = vmatprep.mubr.bf16.mxu0 0
      %1228 = vmatmul.mubr.bf16.gmra.mrb[0].mxu0 %v1024
      %v1229 = vpop.f32.mrb[0].mxu0
      %v1230 = vadd.f32 %v925, %v1229
      %v1231 = vpop.f32.mrb[0].mxu0
      %v1232 = vpop.f32.mrb[0].mxu0
      %v1233 = vadd.f32 %v928, %v1232
      %v1234 = vpop.f32.mrb[0].mxu0
      %1235 = vmatprep.mubr.bf16.mxu0 0
      %1236 = vmatmul.mubr.bf16.gmra.mrb[0].mxu0 %v1025
      %v1237 = vpop.f32.mrb[0].mxu0
      %v1238 = vadd.f32 %v933, %v1237
      %v1239 = vpop.f32.mrb[0].mxu0
      %v1240 = vpop.f32.mrb[0].mxu0
      %v1241 = vadd.f32 %v936, %v1240
      %v1242 = vpop.f32.mrb[0].mxu0
      %1243 = vmatprep.mubr.bf16.mxu0 0
      %1244 = vmatmul.mubr.bf16.gmra.mrb[0].mxu0 %v1026
      %v1245 = vpop.f32.mrb[0].mxu0
      %v1246 = vadd.f32 %v941, %v1245
      %v1247 = vpop.f32.mrb[0].mxu0
      %v1248 = vpop.f32.mrb[0].mxu0
      %v1249 = vadd.f32 %v944, %v1248
      %v1250 = vpop.f32.mrb[0].mxu0
      %1251 = vdwg.mxu0
      %vm1268 = vcmask 1042432
      %vm1269 = vcmask 1046532
      %vm1270 = vmor %vm1268, %vm1269
      %v1271 = vrot.slane %v200, 5
      %v1272 = vrot.slane %v1271, 4
      %v1273 = vrot.slane %v201, 5
      %v1274 = vsel %vm1270, %v1272, %v1273
      %v1275 = vrot.slane %v1273, 4
      %v1276 = vrot.slane %v202, 5
      %v1277 = vsel %vm1270, %v1275, %v1276
      %v1278 = vrot.slane %v203, 5
      %v1279 = vrot.slane %v1278, 4
      %v1280 = vrot.slane %v204, 5
      %v1281 = vsel %vm1270, %v1279, %v1280
      %v1282 = vrot.slane %v1280, 4
      %v1283 = vrot.slane %v205, 5
      %v1284 = vsel %vm1270, %v1282, %v1283
      %v1285 = vrot.slane %v206, 5
      %v1286 = vrot.slane %v1285, 4
      %v1287 = vrot.slane %v207, 5
      %v1288 = vsel %vm1270, %v1286, %v1287
      %v1289 = vrot.slane %v1287, 4
      %v1290 = vrot.slane %v208, 5
      %v1291 = vsel %vm1270, %v1289, %v1290
      %v1292 = vrot.slane %v209, 5
      %v1293 = vrot.slane %v1292, 4
      %v1294 = vrot.slane %v210, 5
      %v1295 = vsel %vm1270, %v1293, %v1294
      %v1296 = vrot.slane %v1294, 4
      %v1297 = vrot.slane %v211, 5
      %v1298 = vsel %vm1270, %v1296, %v1297
      %v1299 = vrot.slane %v212, 5
      %v1300 = vrot.slane %v1299, 4
      %v1301 = vrot.slane %v213, 5
      %v1302 = vsel %vm1270, %v1300, %v1301
      %v1303 = vrot.slane %v1301, 4
      %v1304 = vrot.slane %v214, 5
      %v1305 = vsel %vm1270, %v1303, %v1304
      %v1306 = vrot.slane %v215, 5
      %v1307 = vrot.slane %v1306, 4
      %v1308 = vrot.slane %v216, 5
      %v1309 = vsel %vm1270, %v1307, %v1308
      %v1310 = vrot.slane %v1308, 4
      %v1311 = vrot.slane %v217, 5
      %v1312 = vsel %vm1270, %v1310, %v1311
      %v1313 = vrot.slane %v218, 5
      %v1314 = vrot.slane %v1313, 4
      %v1315 = vrot.slane %v219, 5
      %v1316 = vsel %vm1270, %v1314, %v1315
      %v1317 = vrot.slane %v1315, 4
      %v1318 = vrot.slane %v220, 5
      %v1319 = vsel %vm1270, %v1317, %v1318
      %v1320 = vrot.slane %v221, 5
      %v1321 = vrot.slane %v1320, 4
      %v1322 = vrot.slane %v222, 5
      %v1323 = vsel %vm1270, %v1321, %v1322
      %v1324 = vrot.slane %v1322, 4
      %v1325 = vrot.slane %v223, 5
      %v1326 = vsel %vm1270, %v1324, %v1325
      %v1327 = vrot.slane %v224, 5
      %v1328 = vrot.slane %v1327, 4
      %v1329 = vrot.slane %v225, 5
      %v1330 = vsel %vm1270, %v1328, %v1329
      %v1331 = vrot.slane %v1329, 4
      %v1332 = vrot.slane %v226, 5
      %v1333 = vsel %vm1270, %v1331, %v1332
      %v1334 = vrot.slane %v227, 5
      %v1335 = vrot.slane %v1334, 4
      %v1336 = vrot.slane %v228, 5
      %v1337 = vsel %vm1270, %v1335, %v1336
      %v1338 = vrot.slane %v1336, 4
      %v1339 = vrot.slane %v229, 5
      %v1340 = vsel %vm1270, %v1338, %v1339
      %v1341 = vrot.slane %v230, 5
      %v1342 = vrot.slane %v1341, 4
      %v1343 = vrot.slane %v231, 5
      %v1344 = vsel %vm1270, %v1342, %v1343
      %v1345 = vrot.slane %v1343, 4
      %v1346 = vrot.slane %v232, 5
      %v1347 = vsel %vm1270, %v1345, %v1346
      %v1348 = vrot.slane %v233, 5
      %v1349 = vrot.slane %v1348, 4
      %v1350 = vrot.slane %v234, 5
      %v1351 = vsel %vm1270, %v1349, %v1350
      %v1352 = vrot.slane %v1350, 4
      %v1353 = vrot.slane %v235, 5
      %v1354 = vsel %vm1270, %v1352, %v1353
      %v1355 = vrot.slane %v236, 5
      %v1356 = vrot.slane %v1355, 4
      %v1357 = vrot.slane %v237, 5
      %v1358 = vsel %vm1270, %v1356, %v1357
      %v1359 = vrot.slane %v1357, 4
      %v1360 = vrot.slane %v238, 5
      %v1361 = vsel %vm1270, %v1359, %v1360
      %v1362 = vrot.slane %v239, 5
      %v1363 = vrot.slane %v1362, 4
      %v1364 = vrot.slane %v240, 5
      %v1365 = vsel %vm1270, %v1363, %v1364
      %v1366 = vrot.slane %v1364, 4
      %v1367 = vrot.slane %v241, 5
      %v1368 = vsel %vm1270, %v1366, %v1367
      %v1369 = vrot.slane %v242, 5
      %v1370 = vrot.slane %v1369, 4
      %v1371 = vrot.slane %v243, 5
      %v1372 = vsel %vm1270, %v1370, %v1371
      %v1373 = vrot.slane %v1371, 4
      %v1374 = vrot.slane %v244, 5
      %v1375 = vsel %vm1270, %v1373, %v1374
      %v1376 = vrot.slane %v245, 5
      %v1377 = vrot.slane %v1376, 4
      %v1378 = vrot.slane %v246, 5
      %v1379 = vsel %vm1270, %v1377, %v1378
      %v1380 = vrot.slane %v1378, 4
      %v1381 = vrot.slane %v247, 5
      %v1382 = vsel %vm1270, %v1380, %v1381
      %s1383 = scalar_lea.vmem %s1, 128
      %v1384 = vld [vmem:[%s1383] sm:$0xf]
      %v1385 = vld [vmem:[%s1383 + $0x4] sm:$0xf]
      %v1386 = vld [vmem:[%s1383 + $0x8] sm:$0xf]
      %v1387 = vld [vmem:[%s1383 + $0xc] sm:$0xf]
      %v1388 = vld [vmem:[%s1383 + $0x10] sm:$0xf]
      %v1389 = vld [vmem:[%s1383 + $0x14] sm:$0xf]
      %v1390 = vld [vmem:[%s1383 + $0x18] sm:$0xf]
      %v1391 = vld [vmem:[%s1383 + $0x1c] sm:$0xf]
      %v1392 = vld [vmem:[%s1383 + $0x20] sm:$0xf]
      %v1393 = vld [vmem:[%s1383 + $0x24] sm:$0xf]
      %v1394 = vld [vmem:[%s1383 + $0x28] sm:$0xf]
      %v1395 = vld [vmem:[%s1383 + $0x2c] sm:$0xf]
      %v1396 = vld [vmem:[%s1383 + $0x30] sm:$0xf]
      %v1397 = vld [vmem:[%s1383 + $0x34] sm:$0xf]
      %v1398 = vld [vmem:[%s1383 + $0x38] sm:$0xf]
      %v1399 = vld [vmem:[%s1383 + $0x3c] sm:$0xf]
      %v1400 = vunpack.c.l.b16 %v1274
      %v1401 = vunpack.c.l.b16 %v1277
      %v1402 = vunpack.c.l.b16 %v1281
      %v1403 = vunpack.c.l.b16 %v1284
      %v1404 = vunpack.c.l.b16 %v1288
      %v1405 = vunpack.c.l.b16 %v1291
      %v1406 = vunpack.c.l.b16 %v1295
      %v1407 = vunpack.c.l.b16 %v1298
      %v1408 = vunpack.c.l.b16 %v1302
      %v1409 = vunpack.c.l.b16 %v1305
      %v1410 = vunpack.c.l.b16 %v1309
      %v1411 = vunpack.c.l.b16 %v1312
      %v1412 = vunpack.c.l.b16 %v1316
      %v1413 = vunpack.c.l.b16 %v1319
      %v1414 = vunpack.c.l.b16 %v1323
      %v1415 = vunpack.c.l.b16 %v1326
      %v1416 = vunpack.c.l.b16 %v1330
      %v1417 = vunpack.c.l.b16 %v1333
      %v1418 = vunpack.c.l.b16 %v1337
      %v1419 = vunpack.c.l.b16 %v1340
      %v1420 = vunpack.c.l.b16 %v1344
      %v1421 = vunpack.c.l.b16 %v1347
      %v1422 = vunpack.c.l.b16 %v1351
      %v1423 = vunpack.c.l.b16 %v1354
      %v1424 = vunpack.c.l.b16 %v1358
      %v1425 = vunpack.c.l.b16 %v1361
      %v1426 = vunpack.c.l.b16 %v1365
      %v1427 = vunpack.c.l.b16 %v1368
      %v1428 = vunpack.c.l.b16 %v1372
      %v1429 = vunpack.c.l.b16 %v1375
      %v1430 = vunpack.c.l.b16 %v1379
      %v1431 = vunpack.c.l.b16 %v1382
      %v1432 = vpack.c.b16 %v1401, %v1400
      %v1433 = vpack.c.b16 %v1403, %v1402
      %v1434 = vpack.c.b16 %v1405, %v1404
      %v1435 = vpack.c.b16 %v1407, %v1406
      %v1436 = vpack.c.b16 %v1409, %v1408
      %v1437 = vpack.c.b16 %v1411, %v1410
      %v1438 = vpack.c.b16 %v1413, %v1412
      %v1439 = vpack.c.b16 %v1415, %v1414
      %v1440 = vpack.c.b16 %v1417, %v1416
      %v1441 = vpack.c.b16 %v1419, %v1418
      %v1442 = vpack.c.b16 %v1421, %v1420
      %v1443 = vpack.c.b16 %v1423, %v1422
      %v1444 = vpack.c.b16 %v1425, %v1424
      %v1445 = vpack.c.b16 %v1427, %v1426
      %v1446 = vpack.c.b16 %v1429, %v1428
      %v1447 = vpack.c.b16 %v1431, %v1430
      %v1480 = vunpack.c.l.b16 %v1384
      %v1481 = vunpack.c.l.b16 %v1385
      %v1482 = vunpack.c.l.b16 %v1386
      %v1483 = vunpack.c.l.b16 %v1387
      %v1484 = vunpack.c.l.b16 %v1388
      %v1485 = vunpack.c.l.b16 %v1389
      %v1486 = vunpack.c.l.b16 %v1390
      %v1487 = vunpack.c.l.b16 %v1391
      %v1488 = vunpack.c.l.b16 %v1392
      %v1489 = vunpack.c.l.b16 %v1393
      %v1490 = vunpack.c.l.b16 %v1394
      %v1491 = vunpack.c.l.b16 %v1395
      %v1492 = vunpack.c.l.b16 %v1396
      %v1493 = vunpack.c.l.b16 %v1397
      %v1494 = vunpack.c.l.b16 %v1398
      %v1495 = vunpack.c.l.b16 %v1399
      %v1496 = vpack.c.b16 %v1481, %v1480
      %v1497 = vpack.c.b16 %v1483, %v1482
      %v1498 = vpack.c.b16 %v1485, %v1484
      %v1499 = vpack.c.b16 %v1487, %v1486
      %v1500 = vpack.c.b16 %v1489, %v1488
      %v1501 = vpack.c.b16 %v1491, %v1490
      %v1502 = vpack.c.b16 %v1493, %v1492
      %v1503 = vpack.c.b16 %v1495, %v1494
      %1512 = vmatprep.subr.bf16.mxu0 0
      %1513 = vmatpush1.bf16.msra.mxu0 %v1496
      %1514 = vmatprep.subr.bf16.mxu0 0
      %1515 = vmatpush1.bf16.msra.mxu0 %v1497
      %1516 = vmatprep.subr.bf16.mxu0 0
      %1517 = vmatpush1.bf16.msra.mxu0 %v1498
      %1518 = vmatprep.subr.bf16.mxu0 0
      %1519 = vmatpush1.bf16.msra.mxu0 %v1499
      %1520 = vmatprep.subr.bf16.mxu0 0
      %1521 = vmatpush1.bf16.msra.mxu0 %v1500
      %1522 = vmatprep.subr.bf16.mxu0 0
      %1523 = vmatpush1.bf16.msra.mxu0 %v1501
      %1524 = vmatprep.subr.bf16.mxu0 0
      %1525 = vmatpush1.bf16.msra.mxu0 %v1502
      %1526 = vmatprep.subr.bf16.mxu0 0
      %1527 = vmatpush1.bf16.msra.mxu0 %v1503
      %1528 = vmatprep.subr.bf16.mxu0 0
      %1529 = vmatpush1.bf16.msra.mxu0 0
      %1530 = vmatprep.subr.bf16.mxu0 0
      %1531 = vmatpush1.bf16.msra.mxu0 0
      %1532 = vmatprep.subr.bf16.mxu0 0
      %1533 = vmatpush1.bf16.msra.mxu0 0
      %1534 = vmatprep.subr.bf16.mxu0 0
      %1535 = vmatpush1.bf16.msra.mxu0 0
      %1536 = vmatprep.subr.bf16.mxu0 0
      %1537 = vmatpush1.bf16.msra.mxu0 0
      %1538 = vmatprep.subr.bf16.mxu0 0
      %1539 = vmatpush1.bf16.msra.mxu0 0
      %1540 = vmatprep.subr.bf16.mxu0 0
      %1541 = vmatpush1.bf16.msra.mxu0 0
      %1542 = vmatprep.subr.bf16.mxu0 0
      %1543 = vmatpush1.bf16.msra.mxu0 0
      %1544 = vmatprep.mubr.bf16.mxu0 0
      %1545 = vmatmul.mubr.bf16.gmra.mrb[0].mxu0 %v1432
      %v1546 = vpop.f32.mrb[0].mxu0
      %v1547 = vadd.f32 0.0, %v1546
      %v1548 = vpop.f32.mrb[0].mxu0
      %v1549 = vpop.f32.mrb[0].mxu0
      %v1550 = vadd.f32 0.0, %v1549
      %v1551 = vpop.f32.mrb[0].mxu0
      %1552 = vmatprep.mubr.bf16.mxu0 0
      %1553 = vmatmul.mubr.bf16.gmra.mrb[0].mxu0 %v1433
      %v1554 = vpop.f32.mrb[0].mxu0
      %v1555 = vadd.f32 0.0, %v1554
      %v1556 = vpop.f32.mrb[0].mxu0
      %v1557 = vpop.f32.mrb[0].mxu0
      %v1558 = vadd.f32 0.0, %v1557
      %v1559 = vpop.f32.mrb[0].mxu0
      %1560 = vmatprep.mubr.bf16.mxu0 0
      %1561 = vmatmul.mubr.bf16.gmra.mrb[0].mxu0 %v1434
      %v1562 = vpop.f32.mrb[0].mxu0
      %v1563 = vadd.f32 0.0, %v1562
      %v1564 = vpop.f32.mrb[0].mxu0
      %v1565 = vpop.f32.mrb[0].mxu0
      %v1566 = vadd.f32 0.0, %v1565
      %v1567 = vpop.f32.mrb[0].mxu0
      %1568 = vmatprep.mubr.bf16.mxu0 0
      %1569 = vmatmul.mubr.bf16.gmra.mrb[0].mxu0 %v1435
      %v1570 = vpop.f32.mrb[0].mxu0
      %v1571 = vadd.f32 0.0, %v1570
      %v1572 = vpop.f32.mrb[0].mxu0
      %v1573 = vpop.f32.mrb[0].mxu0
      %v1574 = vadd.f32 0.0, %v1573
      %v1575 = vpop.f32.mrb[0].mxu0
      %1576 = vmatprep.mubr.bf16.mxu0 0
      %1577 = vmatmul.mubr.bf16.gmra.mrb[0].mxu0 %v1436
      %v1578 = vpop.f32.mrb[0].mxu0
      %v1579 = vadd.f32 0.0, %v1578
      %v1580 = vpop.f32.mrb[0].mxu0
      %v1581 = vpop.f32.mrb[0].mxu0
      %v1582 = vadd.f32 0.0, %v1581
      %v1583 = vpop.f32.mrb[0].mxu0
      %1584 = vmatprep.mubr.bf16.mxu0 0
      %1585 = vmatmul.mubr.bf16.gmra.mrb[0].mxu0 %v1437
      %v1586 = vpop.f32.mrb[0].mxu0
      %v1587 = vadd.f32 0.0, %v1586
      %v1588 = vpop.f32.mrb[0].mxu0
      %v1589 = vpop.f32.mrb[0].mxu0
      %v1590 = vadd.f32 0.0, %v1589
      %v1591 = vpop.f32.mrb[0].mxu0
      %1592 = vmatprep.mubr.bf16.mxu0 0
      %1593 = vmatmul.mubr.bf16.gmra.mrb[0].mxu0 %v1438
      %v1594 = vpop.f32.mrb[0].mxu0
      %v1595 = vadd.f32 0.0, %v1594
      %v1596 = vpop.f32.mrb[0].mxu0
      %v1597 = vpop.f32.mrb[0].mxu0
      %v1598 = vadd.f32 0.0, %v1597
      %v1599 = vpop.f32.mrb[0].mxu0
      %1600 = vmatprep.mubr.bf16.mxu0 0
      %1601 = vmatmul.mubr.bf16.gmra.mrb[0].mxu0 %v1439
      %v1602 = vpop.f32.mrb[0].mxu0
      %v1603 = vadd.f32 0.0, %v1602
      %v1604 = vpop.f32.mrb[0].mxu0
      %v1605 = vpop.f32.mrb[0].mxu0
      %v1606 = vadd.f32 0.0, %v1605
      %v1607 = vpop.f32.mrb[0].mxu0
      %1608 = vmatprep.mubr.bf16.mxu0 0
      %1609 = vmatmul.mubr.bf16.gmra.mrb[0].mxu0 %v1440
      %v1610 = vpop.f32.mrb[0].mxu0
      %v1611 = vadd.f32 0.0, %v1610
      %v1612 = vpop.f32.mrb[0].mxu0
      %v1613 = vpop.f32.mrb[0].mxu0
      %v1614 = vadd.f32 0.0, %v1613
      %v1615 = vpop.f32.mrb[0].mxu0
      %1616 = vmatprep.mubr.bf16.mxu0 0
      %1617 = vmatmul.mubr.bf16.gmra.mrb[0].mxu0 %v1441
      %v1618 = vpop.f32.mrb[0].mxu0
      %v1619 = vadd.f32 0.0, %v1618
      %v1620 = vpop.f32.mrb[0].mxu0
      %v1621 = vpop.f32.mrb[0].mxu0
      %v1622 = vadd.f32 0.0, %v1621
      %v1623 = vpop.f32.mrb[0].mxu0
      %1624 = vmatprep.mubr.bf16.mxu0 0
      %1625 = vmatmul.mubr.bf16.gmra.mrb[0].mxu0 %v1442
      %v1626 = vpop.f32.mrb[0].mxu0
      %v1627 = vadd.f32 0.0, %v1626
      %v1628 = vpop.f32.mrb[0].mxu0
      %v1629 = vpop.f32.mrb[0].mxu0
      %v1630 = vadd.f32 0.0, %v1629
      %v1631 = vpop.f32.mrb[0].mxu0
      %1632 = vmatprep.mubr.bf16.mxu0 0
      %1633 = vmatmul.mubr.bf16.gmra.mrb[0].mxu0 %v1443
      %v1634 = vpop.f32.mrb[0].mxu0
      %v1635 = vadd.f32 0.0, %v1634
      %v1636 = vpop.f32.mrb[0].mxu0
      %v1637 = vpop.f32.mrb[0].mxu0
      %v1638 = vadd.f32 0.0, %v1637
      %v1639 = vpop.f32.mrb[0].mxu0
      %1640 = vmatprep.mubr.bf16.mxu0 0
      %1641 = vmatmul.mubr.bf16.gmra.mrb[0].mxu0 %v1444
      %v1642 = vpop.f32.mrb[0].mxu0
      %v1643 = vadd.f32 0.0, %v1642
      %v1644 = vpop.f32.mrb[0].mxu0
      %v1645 = vpop.f32.mrb[0].mxu0
      %v1646 = vadd.f32 0.0, %v1645
      %v1647 = vpop.f32.mrb[0].mxu0
      %1648 = vmatprep.mubr.bf16.mxu0 0
      %1649 = vmatmul.mubr.bf16.gmra.mrb[0].mxu0 %v1445
      %v1650 = vpop.f32.mrb[0].mxu0
      %v1651 = vadd.f32 0.0, %v1650
      %v1652 = vpop.f32.mrb[0].mxu0
      %v1653 = vpop.f32.mrb[0].mxu0
      %v1654 = vadd.f32 0.0, %v1653
      %v1655 = vpop.f32.mrb[0].mxu0
      %1656 = vmatprep.mubr.bf16.mxu0 0
      %1657 = vmatmul.mubr.bf16.gmra.mrb[0].mxu0 %v1446
      %v1658 = vpop.f32.mrb[0].mxu0
      %v1659 = vadd.f32 0.0, %v1658
      %v1660 = vpop.f32.mrb[0].mxu0
      %v1661 = vpop.f32.mrb[0].mxu0
      %v1662 = vadd.f32 0.0, %v1661
      %v1663 = vpop.f32.mrb[0].mxu0
      %1664 = vmatprep.mubr.bf16.mxu0 0
      %1665 = vmatmul.mubr.bf16.gmra.mrb[0].mxu0 %v1447
      %v1666 = vpop.f32.mrb[0].mxu0
      %v1667 = vadd.f32 0.0, %v1666
      %v1668 = vpop.f32.mrb[0].mxu0
      %v1669 = vpop.f32.mrb[0].mxu0
      %v1670 = vadd.f32 0.0, %v1669
      %v1671 = vpop.f32.mrb[0].mxu0
      %1672 = vdwg.mxu0
      %v1673 = vadd.f32 %v1126, %v1547
      %v1674 = vadd.f32 %v1129, %v1550
      %v1675 = vadd.f32 %v1134, %v1555
      %v1676 = vadd.f32 %v1137, %v1558
      %v1677 = vadd.f32 %v1142, %v1563
      %v1678 = vadd.f32 %v1145, %v1566
      %v1679 = vadd.f32 %v1150, %v1571
      %v1680 = vadd.f32 %v1153, %v1574
      %v1681 = vadd.f32 %v1158, %v1579
      %v1682 = vadd.f32 %v1161, %v1582
      %v1683 = vadd.f32 %v1166, %v1587
      %v1684 = vadd.f32 %v1169, %v1590
      %v1685 = vadd.f32 %v1174, %v1595
      %v1686 = vadd.f32 %v1177, %v1598
      %v1687 = vadd.f32 %v1182, %v1603
      %v1688 = vadd.f32 %v1185, %v1606
      %v1689 = vadd.f32 %v1190, %v1611
      %v1690 = vadd.f32 %v1193, %v1614
      %v1691 = vadd.f32 %v1198, %v1619
      %v1692 = vadd.f32 %v1201, %v1622
      %v1693 = vadd.f32 %v1206, %v1627
      %v1694 = vadd.f32 %v1209, %v1630
      %v1695 = vadd.f32 %v1214, %v1635
      %v1696 = vadd.f32 %v1217, %v1638
      %v1697 = vadd.f32 %v1222, %v1643
      %v1698 = vadd.f32 %v1225, %v1646
      %v1699 = vadd.f32 %v1230, %v1651
      %v1700 = vadd.f32 %v1233, %v1654
      %v1701 = vadd.f32 %v1238, %v1659
      %v1702 = vadd.f32 %v1241, %v1662
      %v1703 = vadd.f32 %v1246, %v1667
      %v1704 = vadd.f32 %v1249, %v1670
      %s1705 = scalar_lea.vmem %s1, 192
      %v1706 = vld [vmem:[%s1705] sm:$0xf]
      %v1707 = vld [vmem:[%s1705 + $0x4] sm:$0xf]
      %v1708 = vld [vmem:[%s1705 + $0x8] sm:$0xf]
      %v1709 = vld [vmem:[%s1705 + $0xc] sm:$0xf]
      %v1710 = vld [vmem:[%s1705 + $0x10] sm:$0xf]
      %v1711 = vld [vmem:[%s1705 + $0x14] sm:$0xf]
      %v1712 = vld [vmem:[%s1705 + $0x18] sm:$0xf]
      %v1713 = vld [vmem:[%s1705 + $0x1c] sm:$0xf]
      %v1714 = vld [vmem:[%s1705 + $0x20] sm:$0xf]
      %v1715 = vld [vmem:[%s1705 + $0x24] sm:$0xf]
      %v1716 = vld [vmem:[%s1705 + $0x28] sm:$0xf]
      %v1717 = vld [vmem:[%s1705 + $0x2c] sm:$0xf]
      %v1718 = vld [vmem:[%s1705 + $0x30] sm:$0xf]
      %v1719 = vld [vmem:[%s1705 + $0x34] sm:$0xf]
      %v1720 = vld [vmem:[%s1705 + $0x38] sm:$0xf]
      %v1721 = vld [vmem:[%s1705 + $0x3c] sm:$0xf]
      %v1724 = vunpack.c.l.b16 %v248
      %v1725 = vunpack.c.l.b16 %v249
      %v1726 = vpack.c.b16 %v1725, %v1724
      %v1744 = vunpack.c.l.b16 %v1706
      %v1745 = vunpack.c.l.b16 %v1707
      %v1746 = vunpack.c.l.b16 %v1708
      %v1747 = vunpack.c.l.b16 %v1709
      %v1748 = vunpack.c.l.b16 %v1710
      %v1749 = vunpack.c.l.b16 %v1711
      %v1750 = vunpack.c.l.b16 %v1712
      %v1751 = vunpack.c.l.b16 %v1713
      %v1752 = vunpack.c.l.b16 %v1714
      %v1753 = vunpack.c.l.b16 %v1715
      %v1754 = vunpack.c.l.b16 %v1716
      %v1755 = vunpack.c.l.b16 %v1717
      %v1756 = vunpack.c.l.b16 %v1718
      %v1757 = vunpack.c.l.b16 %v1719
      %v1758 = vunpack.c.l.b16 %v1720
      %v1759 = vunpack.c.l.b16 %v1721
      %v1760 = vpack.c.b16 %v1745, %v1744
      %v1761 = vpack.c.b16 %v1747, %v1746
      %v1762 = vpack.c.b16 %v1749, %v1748
      %v1763 = vpack.c.b16 %v1751, %v1750
      %v1764 = vpack.c.b16 %v1753, %v1752
      %v1765 = vpack.c.b16 %v1755, %v1754
      %v1766 = vpack.c.b16 %v1757, %v1756
      %v1767 = vpack.c.b16 %v1759, %v1758
      %1776 = vmatprep.subr.bf16.mxu0 0
      %1777 = vmatpush1.bf16.msra.mxu0 %v1760
      %1778 = vmatprep.subr.bf16.mxu0 0
      %1779 = vmatpush1.bf16.msra.mxu0 %v1761
      %1780 = vmatprep.subr.bf16.mxu0 0
      %1781 = vmatpush1.bf16.msra.mxu0 %v1762
      %1782 = vmatprep.subr.bf16.mxu0 0
      %1783 = vmatpush1.bf16.msra.mxu0 %v1763
      %1784 = vmatprep.subr.bf16.mxu0 0
      %1785 = vmatpush1.bf16.msra.mxu0 %v1764
      %1786 = vmatprep.subr.bf16.mxu0 0
      %1787 = vmatpush1.bf16.msra.mxu0 %v1765
      %1788 = vmatprep.subr.bf16.mxu0 0
      %1789 = vmatpush1.bf16.msra.mxu0 %v1766
      %1790 = vmatprep.subr.bf16.mxu0 0
      %1791 = vmatpush1.bf16.msra.mxu0 %v1767
      %1792 = vmatprep.subr.bf16.mxu0 0
      %1793 = vmatpush1.bf16.msra.mxu0 0
      %1794 = vmatprep.subr.bf16.mxu0 0
      %1795 = vmatpush1.bf16.msra.mxu0 0
      %1796 = vmatprep.subr.bf16.mxu0 0
      %1797 = vmatpush1.bf16.msra.mxu0 0
      %1798 = vmatprep.subr.bf16.mxu0 0
      %1799 = vmatpush1.bf16.msra.mxu0 0
      %1800 = vmatprep.subr.bf16.mxu0 0
      %1801 = vmatpush1.bf16.msra.mxu0 0
      %1802 = vmatprep.subr.bf16.mxu0 0
      %1803 = vmatpush1.bf16.msra.mxu0 0
      %1804 = vmatprep.subr.bf16.mxu0 0
      %1805 = vmatpush1.bf16.msra.mxu0 0
      %1806 = vmatprep.subr.bf16.mxu0 0
      %1807 = vmatpush1.bf16.msra.mxu0 0
      %1808 = vmatprep.mubr.bf16.mxu0 0
      %1809 = vmatmul.mubr.bf16.gmra.mrb[0].mxu0 %v1012
      %v1810 = vpop.f32.mrb[0].mxu0
      %v1811 = vadd.f32 0.0, %v1810
      %v1812 = vpop.f32.mrb[0].mxu0
      %v1813 = vpop.f32.mrb[0].mxu0
      %v1814 = vadd.f32 0.0, %v1813
      %v1815 = vpop.f32.mrb[0].mxu0
      %1816 = vmatprep.mubr.bf16.mxu0 0
      %1817 = vmatmul.mubr.bf16.gmra.mrb[0].mxu0 %v1013
      %v1818 = vpop.f32.mrb[0].mxu0
      %v1819 = vadd.f32 0.0, %v1818
      %v1820 = vpop.f32.mrb[0].mxu0
      %v1821 = vpop.f32.mrb[0].mxu0
      %v1822 = vadd.f32 0.0, %v1821
      %v1823 = vpop.f32.mrb[0].mxu0
      %1824 = vmatprep.mubr.bf16.mxu0 0
      %1825 = vmatmul.mubr.bf16.gmra.mrb[0].mxu0 %v1014
      %v1826 = vpop.f32.mrb[0].mxu0
      %v1827 = vadd.f32 0.0, %v1826
      %v1828 = vpop.f32.mrb[0].mxu0
      %v1829 = vpop.f32.mrb[0].mxu0
      %v1830 = vadd.f32 0.0, %v1829
      %v1831 = vpop.f32.mrb[0].mxu0
      %1832 = vmatprep.mubr.bf16.mxu0 0
      %1833 = vmatmul.mubr.bf16.gmra.mrb[0].mxu0 %v1015
      %v1834 = vpop.f32.mrb[0].mxu0
      %v1835 = vadd.f32 0.0, %v1834
      %v1836 = vpop.f32.mrb[0].mxu0
      %v1837 = vpop.f32.mrb[0].mxu0
      %v1838 = vadd.f32 0.0, %v1837
      %v1839 = vpop.f32.mrb[0].mxu0
      %1840 = vmatprep.mubr.bf16.mxu0 0
      %1841 = vmatmul.mubr.bf16.gmra.mrb[0].mxu0 %v1016
      %v1842 = vpop.f32.mrb[0].mxu0
      %v1843 = vadd.f32 0.0, %v1842
      %v1844 = vpop.f32.mrb[0].mxu0
      %v1845 = vpop.f32.mrb[0].mxu0
      %v1846 = vadd.f32 0.0, %v1845
      %v1847 = vpop.f32.mrb[0].mxu0
      %1848 = vmatprep.mubr.bf16.mxu0 0
      %1849 = vmatmul.mubr.bf16.gmra.mrb[0].mxu0 %v1017
      %v1850 = vpop.f32.mrb[0].mxu0
      %v1851 = vadd.f32 0.0, %v1850
      %v1852 = vpop.f32.mrb[0].mxu0
      %v1853 = vpop.f32.mrb[0].mxu0
      %v1854 = vadd.f32 0.0, %v1853
      %v1855 = vpop.f32.mrb[0].mxu0
      %1856 = vmatprep.mubr.bf16.mxu0 0
      %1857 = vmatmul.mubr.bf16.gmra.mrb[0].mxu0 %v1018
      %v1858 = vpop.f32.mrb[0].mxu0
      %v1859 = vadd.f32 0.0, %v1858
      %v1860 = vpop.f32.mrb[0].mxu0
      %v1861 = vpop.f32.mrb[0].mxu0
      %v1862 = vadd.f32 0.0, %v1861
      %v1863 = vpop.f32.mrb[0].mxu0
      %1864 = vmatprep.mubr.bf16.mxu0 0
      %1865 = vmatmul.mubr.bf16.gmra.mrb[0].mxu0 %v1019
      %v1866 = vpop.f32.mrb[0].mxu0
      %v1867 = vadd.f32 0.0, %v1866
      %v1868 = vpop.f32.mrb[0].mxu0
      %v1869 = vpop.f32.mrb[0].mxu0
      %v1870 = vadd.f32 0.0, %v1869
      %v1871 = vpop.f32.mrb[0].mxu0
      %1872 = vmatprep.mubr.bf16.mxu0 0
      %1873 = vmatmul.mubr.bf16.gmra.mrb[0].mxu0 %v1020
      %v1874 = vpop.f32.mrb[0].mxu0
      %v1875 = vadd.f32 0.0, %v1874
      %v1876 = vpop.f32.mrb[0].mxu0
      %v1877 = vpop.f32.mrb[0].mxu0
      %v1878 = vadd.f32 0.0, %v1877
      %v1879 = vpop.f32.mrb[0].mxu0
      %1880 = vmatprep.mubr.bf16.mxu0 0
      %1881 = vmatmul.mubr.bf16.gmra.mrb[0].mxu0 %v1021
      %v1882 = vpop.f32.mrb[0].mxu0
      %v1883 = vadd.f32 0.0, %v1882
      %v1884 = vpop.f32.mrb[0].mxu0
      %v1885 = vpop.f32.mrb[0].mxu0
      %v1886 = vadd.f32 0.0, %v1885
      %v1887 = vpop.f32.mrb[0].mxu0
      %1888 = vmatprep.mubr.bf16.mxu0 0
      %1889 = vmatmul.mubr.bf16.gmra.mrb[0].mxu0 %v1022
      %v1890 = vpop.f32.mrb[0].mxu0
      %v1891 = vadd.f32 0.0, %v1890
      %v1892 = vpop.f32.mrb[0].mxu0
      %v1893 = vpop.f32.mrb[0].mxu0
      %v1894 = vadd.f32 0.0, %v1893
      %v1895 = vpop.f32.mrb[0].mxu0
      %1896 = vmatprep.mubr.bf16.mxu0 0
      %1897 = vmatmul.mubr.bf16.gmra.mrb[0].mxu0 %v1023
      %v1898 = vpop.f32.mrb[0].mxu0
      %v1899 = vadd.f32 0.0, %v1898
      %v1900 = vpop.f32.mrb[0].mxu0
      %v1901 = vpop.f32.mrb[0].mxu0
      %v1902 = vadd.f32 0.0, %v1901
      %v1903 = vpop.f32.mrb[0].mxu0
      %1904 = vmatprep.mubr.bf16.mxu0 0
      %1905 = vmatmul.mubr.bf16.gmra.mrb[0].mxu0 %v1024
      %v1906 = vpop.f32.mrb[0].mxu0
      %v1907 = vadd.f32 0.0, %v1906
      %v1908 = vpop.f32.mrb[0].mxu0
      %v1909 = vpop.f32.mrb[0].mxu0
      %v1910 = vadd.f32 0.0, %v1909
      %v1911 = vpop.f32.mrb[0].mxu0
      %1912 = vmatprep.mubr.bf16.mxu0 0
      %1913 = vmatmul.mubr.bf16.gmra.mrb[0].mxu0 %v1025
      %v1914 = vpop.f32.mrb[0].mxu0
      %v1915 = vadd.f32 0.0, %v1914
      %v1916 = vpop.f32.mrb[0].mxu0
      %v1917 = vpop.f32.mrb[0].mxu0
      %v1918 = vadd.f32 0.0, %v1917
      %v1919 = vpop.f32.mrb[0].mxu0
      %1920 = vmatprep.mubr.bf16.mxu0 0
      %1921 = vmatmul.mubr.bf16.gmra.mrb[0].mxu0 %v1026
      %v1922 = vpop.f32.mrb[0].mxu0
      %v1923 = vadd.f32 0.0, %v1922
      %v1924 = vpop.f32.mrb[0].mxu0
      %v1925 = vpop.f32.mrb[0].mxu0
      %v1926 = vadd.f32 0.0, %v1925
      %v1927 = vpop.f32.mrb[0].mxu0
      %1928 = vmatprep.mubr.bf16.mxu0 0
      %1929 = vmatmul.mubr.bf16.gmra.mrb[0].mxu0 %v1726
      %v1930 = vpop.f32.mrb[0].mxu0
      %v1931 = vadd.f32 0.0, %v1930
      %v1932 = vpop.f32.mrb[0].mxu0
      %v1933 = vpop.f32.mrb[0].mxu0
      %v1934 = vadd.f32 0.0, %v1933
      %v1935 = vpop.f32.mrb[0].mxu0
      %1936 = vdwg.mxu0
      %v1937 = vadd.f32 %v1673, %v1811
      %v1938 = vadd.f32 %v1674, %v1814
      %v1939 = vadd.f32 %v1675, %v1819
      %v1940 = vadd.f32 %v1676, %v1822
      %v1941 = vadd.f32 %v1677, %v1827
      %v1942 = vadd.f32 %v1678, %v1830
      %v1943 = vadd.f32 %v1679, %v1835
      %v1944 = vadd.f32 %v1680, %v1838
      %v1945 = vadd.f32 %v1681, %v1843
      %v1946 = vadd.f32 %v1682, %v1846
      %v1947 = vadd.f32 %v1683, %v1851
      %v1948 = vadd.f32 %v1684, %v1854
      %v1949 = vadd.f32 %v1685, %v1859
      %v1950 = vadd.f32 %v1686, %v1862
      %v1951 = vadd.f32 %v1687, %v1867
      %v1952 = vadd.f32 %v1688, %v1870
      %v1953 = vadd.f32 %v1689, %v1875
      %v1954 = vadd.f32 %v1690, %v1878
      %v1955 = vadd.f32 %v1691, %v1883
      %v1956 = vadd.f32 %v1692, %v1886
      %v1957 = vadd.f32 %v1693, %v1891
      %v1958 = vadd.f32 %v1694, %v1894
      %v1959 = vadd.f32 %v1695, %v1899
      %v1960 = vadd.f32 %v1696, %v1902
      %v1961 = vadd.f32 %v1697, %v1907
      %v1962 = vadd.f32 %v1698, %v1910
      %v1963 = vadd.f32 %v1699, %v1915
      %v1964 = vadd.f32 %v1700, %v1918
      %v1965 = vadd.f32 %v1701, %v1923
      %v1966 = vadd.f32 %v1702, %v1926
      %v1967 = vadd.f32 %v1703, %v1931
      %v1968 = vadd.f32 %v1704, %v1934
      %v1970 = vshrl.u32 %v248, 16
      %v1972 = vrot.slane %v1970, 4
      %v1973 = vshll.u32 %v248, 16
      %v1975 = vrot.slane %v1973, 5
      %v1976 = vor.u32 %v1972, %v1975
      %v1977 = vrot.slane %v1976, 4
      %v1979 = vshll.u32 %v249, 16
      %v1981 = vrot.slane %v1979, 5
      %v1982 = vsel %vm272, %v1977, %v1981
      %v1983 = vshrl.u32 %v249, 16
      %v1985 = vrot.slane %v1983, 4
      %v1986 = vor.u32 %v1985, %v1981
      %v1987 = vrot.slane %v1986, 4
      %v1989 = vshll.u32 %v250, 16
      %v1991 = vrot.slane %v1989, 5
      %v1992 = vsel %vm272, %v1987, %v1991
      %s1993 = scalar_lea.vmem %s1, 256
      %v1994 = vld [vmem:[%s1993] sm:$0xf]
      %v1995 = vld [vmem:[%s1993 + $0x4] sm:$0xf]
      %v1996 = vld [vmem:[%s1993 + $0x8] sm:$0xf]
      %v1997 = vld [vmem:[%s1993 + $0xc] sm:$0xf]
      %v1998 = vld [vmem:[%s1993 + $0x10] sm:$0xf]
      %v1999 = vld [vmem:[%s1993 + $0x14] sm:$0xf]
      %v2000 = vld [vmem:[%s1993 + $0x18] sm:$0xf]
      %v2001 = vld [vmem:[%s1993 + $0x1c] sm:$0xf]
      %v2002 = vld [vmem:[%s1993 + $0x20] sm:$0xf]
      %v2003 = vld [vmem:[%s1993 + $0x24] sm:$0xf]
      %v2004 = vld [vmem:[%s1993 + $0x28] sm:$0xf]
      %v2005 = vld [vmem:[%s1993 + $0x2c] sm:$0xf]
      %v2006 = vld [vmem:[%s1993 + $0x30] sm:$0xf]
      %v2007 = vld [vmem:[%s1993 + $0x34] sm:$0xf]
      %v2008 = vld [vmem:[%s1993 + $0x38] sm:$0xf]
      %v2009 = vld [vmem:[%s1993 + $0x3c] sm:$0xf]
      %v2010 = vunpack.c.l.b16 %v1982
      %v2011 = vunpack.c.l.b16 %v1992
      %v2012 = vpack.c.b16 %v2011, %v2010
      %v2030 = vunpack.c.l.b16 %v1994
      %v2031 = vunpack.c.l.b16 %v1995
      %v2032 = vunpack.c.l.b16 %v1996
      %v2033 = vunpack.c.l.b16 %v1997
      %v2034 = vunpack.c.l.b16 %v1998
      %v2035 = vunpack.c.l.b16 %v1999
      %v2036 = vunpack.c.l.b16 %v2000
      %v2037 = vunpack.c.l.b16 %v2001
      %v2038 = vunpack.c.l.b16 %v2002
      %v2039 = vunpack.c.l.b16 %v2003
      %v2040 = vunpack.c.l.b16 %v2004
      %v2041 = vunpack.c.l.b16 %v2005
      %v2042 = vunpack.c.l.b16 %v2006
      %v2043 = vunpack.c.l.b16 %v2007
      %v2044 = vunpack.c.l.b16 %v2008
      %v2045 = vunpack.c.l.b16 %v2009
      %v2046 = vpack.c.b16 %v2031, %v2030
      %v2047 = vpack.c.b16 %v2033, %v2032
      %v2048 = vpack.c.b16 %v2035, %v2034
      %v2049 = vpack.c.b16 %v2037, %v2036
      %v2050 = vpack.c.b16 %v2039, %v2038
      %v2051 = vpack.c.b16 %v2041, %v2040
      %v2052 = vpack.c.b16 %v2043, %v2042
      %v2053 = vpack.c.b16 %v2045, %v2044
      %2062 = vmatprep.subr.bf16.mxu0 0
      %2063 = vmatpush1.bf16.msra.mxu0 %v2046
      %2064 = vmatprep.subr.bf16.mxu0 0
      %2065 = vmatpush1.bf16.msra.mxu0 %v2047
      %2066 = vmatprep.subr.bf16.mxu0 0
      %2067 = vmatpush1.bf16.msra.mxu0 %v2048
      %2068 = vmatprep.subr.bf16.mxu0 0
      %2069 = vmatpush1.bf16.msra.mxu0 %v2049
      %2070 = vmatprep.subr.bf16.mxu0 0
      %2071 = vmatpush1.bf16.msra.mxu0 %v2050
      %2072 = vmatprep.subr.bf16.mxu0 0
      %2073 = vmatpush1.bf16.msra.mxu0 %v2051
      %2074 = vmatprep.subr.bf16.mxu0 0
      %2075 = vmatpush1.bf16.msra.mxu0 %v2052
      %2076 = vmatprep.subr.bf16.mxu0 0
      %2077 = vmatpush1.bf16.msra.mxu0 %v2053
      %2078 = vmatprep.subr.bf16.mxu0 0
      %2079 = vmatpush1.bf16.msra.mxu0 0
      %2080 = vmatprep.subr.bf16.mxu0 0
      %2081 = vmatpush1.bf16.msra.mxu0 0
      %2082 = vmatprep.subr.bf16.mxu0 0
      %2083 = vmatpush1.bf16.msra.mxu0 0
      %2084 = vmatprep.subr.bf16.mxu0 0
      %2085 = vmatpush1.bf16.msra.mxu0 0
      %2086 = vmatprep.subr.bf16.mxu0 0
      %2087 = vmatpush1.bf16.msra.mxu0 0
      %2088 = vmatprep.subr.bf16.mxu0 0
      %2089 = vmatpush1.bf16.msra.mxu0 0
      %2090 = vmatprep.subr.bf16.mxu0 0
      %2091 = vmatpush1.bf16.msra.mxu0 0
      %2092 = vmatprep.subr.bf16.mxu0 0
      %2093 = vmatpush1.bf16.msra.mxu0 0
      %2094 = vmatprep.mubr.bf16.mxu0 0
      %2095 = vmatmul.mubr.bf16.gmra.mrb[0].mxu0 %v707
      %v2096 = vpop.f32.mrb[0].mxu0
      %v2097 = vadd.f32 0.0, %v2096
      %v2098 = vpop.f32.mrb[0].mxu0
      %v2099 = vpop.f32.mrb[0].mxu0
      %v2100 = vadd.f32 0.0, %v2099
      %v2101 = vpop.f32.mrb[0].mxu0
      %2102 = vmatprep.mubr.bf16.mxu0 0
      %2103 = vmatmul.mubr.bf16.gmra.mrb[0].mxu0 %v708
      %v2104 = vpop.f32.mrb[0].mxu0
      %v2105 = vadd.f32 0.0, %v2104
      %v2106 = vpop.f32.mrb[0].mxu0
      %v2107 = vpop.f32.mrb[0].mxu0
      %v2108 = vadd.f32 0.0, %v2107
      %v2109 = vpop.f32.mrb[0].mxu0
      %2110 = vmatprep.mubr.bf16.mxu0 0
      %2111 = vmatmul.mubr.bf16.gmra.mrb[0].mxu0 %v709
      %v2112 = vpop.f32.mrb[0].mxu0
      %v2113 = vadd.f32 0.0, %v2112
      %v2114 = vpop.f32.mrb[0].mxu0
      %v2115 = vpop.f32.mrb[0].mxu0
      %v2116 = vadd.f32 0.0, %v2115
      %v2117 = vpop.f32.mrb[0].mxu0
      %2118 = vmatprep.mubr.bf16.mxu0 0
      %2119 = vmatmul.mubr.bf16.gmra.mrb[0].mxu0 %v710
      %v2120 = vpop.f32.mrb[0].mxu0
      %v2121 = vadd.f32 0.0, %v2120
      %v2122 = vpop.f32.mrb[0].mxu0
      %v2123 = vpop.f32.mrb[0].mxu0
      %v2124 = vadd.f32 0.0, %v2123
      %v2125 = vpop.f32.mrb[0].mxu0
      %2126 = vmatprep.mubr.bf16.mxu0 0
      %2127 = vmatmul.mubr.bf16.gmra.mrb[0].mxu0 %v711
      %v2128 = vpop.f32.mrb[0].mxu0
      %v2129 = vadd.f32 0.0, %v2128
      %v2130 = vpop.f32.mrb[0].mxu0
      %v2131 = vpop.f32.mrb[0].mxu0
      %v2132 = vadd.f32 0.0, %v2131
      %v2133 = vpop.f32.mrb[0].mxu0
      %2134 = vmatprep.mubr.bf16.mxu0 0
      %2135 = vmatmul.mubr.bf16.gmra.mrb[0].mxu0 %v712
      %v2136 = vpop.f32.mrb[0].mxu0
      %v2137 = vadd.f32 0.0, %v2136
      %v2138 = vpop.f32.mrb[0].mxu0
      %v2139 = vpop.f32.mrb[0].mxu0
      %v2140 = vadd.f32 0.0, %v2139
      %v2141 = vpop.f32.mrb[0].mxu0
      %2142 = vmatprep.mubr.bf16.mxu0 0
      %2143 = vmatmul.mubr.bf16.gmra.mrb[0].mxu0 %v713
      %v2144 = vpop.f32.mrb[0].mxu0
      %v2145 = vadd.f32 0.0, %v2144
      %v2146 = vpop.f32.mrb[0].mxu0
      %v2147 = vpop.f32.mrb[0].mxu0
      %v2148 = vadd.f32 0.0, %v2147
      %v2149 = vpop.f32.mrb[0].mxu0
      %2150 = vmatprep.mubr.bf16.mxu0 0
      %2151 = vmatmul.mubr.bf16.gmra.mrb[0].mxu0 %v714
      %v2152 = vpop.f32.mrb[0].mxu0
      %v2153 = vadd.f32 0.0, %v2152
      %v2154 = vpop.f32.mrb[0].mxu0
      %v2155 = vpop.f32.mrb[0].mxu0
      %v2156 = vadd.f32 0.0, %v2155
      %v2157 = vpop.f32.mrb[0].mxu0
      %2158 = vmatprep.mubr.bf16.mxu0 0
      %2159 = vmatmul.mubr.bf16.gmra.mrb[0].mxu0 %v715
      %v2160 = vpop.f32.mrb[0].mxu0
      %v2161 = vadd.f32 0.0, %v2160
      %v2162 = vpop.f32.mrb[0].mxu0
      %v2163 = vpop.f32.mrb[0].mxu0
      %v2164 = vadd.f32 0.0, %v2163
      %v2165 = vpop.f32.mrb[0].mxu0
      %2166 = vmatprep.mubr.bf16.mxu0 0
      %2167 = vmatmul.mubr.bf16.gmra.mrb[0].mxu0 %v716
      %v2168 = vpop.f32.mrb[0].mxu0
      %v2169 = vadd.f32 0.0, %v2168
      %v2170 = vpop.f32.mrb[0].mxu0
      %v2171 = vpop.f32.mrb[0].mxu0
      %v2172 = vadd.f32 0.0, %v2171
      %v2173 = vpop.f32.mrb[0].mxu0
      %2174 = vmatprep.mubr.bf16.mxu0 0
      %2175 = vmatmul.mubr.bf16.gmra.mrb[0].mxu0 %v717
      %v2176 = vpop.f32.mrb[0].mxu0
      %v2177 = vadd.f32 0.0, %v2176
      %v2178 = vpop.f32.mrb[0].mxu0
      %v2179 = vpop.f32.mrb[0].mxu0
      %v2180 = vadd.f32 0.0, %v2179
      %v2181 = vpop.f32.mrb[0].mxu0
      %2182 = vmatprep.mubr.bf16.mxu0 0
      %2183 = vmatmul.mubr.bf16.gmra.mrb[0].mxu0 %v718
      %v2184 = vpop.f32.mrb[0].mxu0
      %v2185 = vadd.f32 0.0, %v2184
      %v2186 = vpop.f32.mrb[0].mxu0
      %v2187 = vpop.f32.mrb[0].mxu0
      %v2188 = vadd.f32 0.0, %v2187
      %v2189 = vpop.f32.mrb[0].mxu0
      %2190 = vmatprep.mubr.bf16.mxu0 0
      %2191 = vmatmul.mubr.bf16.gmra.mrb[0].mxu0 %v719
      %v2192 = vpop.f32.mrb[0].mxu0
      %v2193 = vadd.f32 0.0, %v2192
      %v2194 = vpop.f32.mrb[0].mxu0
      %v2195 = vpop.f32.mrb[0].mxu0
      %v2196 = vadd.f32 0.0, %v2195
      %v2197 = vpop.f32.mrb[0].mxu0
      %2198 = vmatprep.mubr.bf16.mxu0 0
      %2199 = vmatmul.mubr.bf16.gmra.mrb[0].mxu0 %v720
      %v2200 = vpop.f32.mrb[0].mxu0
      %v2201 = vadd.f32 0.0, %v2200
      %v2202 = vpop.f32.mrb[0].mxu0
      %v2203 = vpop.f32.mrb[0].mxu0
      %v2204 = vadd.f32 0.0, %v2203
      %v2205 = vpop.f32.mrb[0].mxu0
      %2206 = vmatprep.mubr.bf16.mxu0 0
      %2207 = vmatmul.mubr.bf16.gmra.mrb[0].mxu0 %v721
      %v2208 = vpop.f32.mrb[0].mxu0
      %v2209 = vadd.f32 0.0, %v2208
      %v2210 = vpop.f32.mrb[0].mxu0
      %v2211 = vpop.f32.mrb[0].mxu0
      %v2212 = vadd.f32 0.0, %v2211
      %v2213 = vpop.f32.mrb[0].mxu0
      %2214 = vmatprep.mubr.bf16.mxu0 0
      %2215 = vmatmul.mubr.bf16.gmra.mrb[0].mxu0 %v2012
      %v2216 = vpop.f32.mrb[0].mxu0
      %v2217 = vadd.f32 0.0, %v2216
      %v2218 = vpop.f32.mrb[0].mxu0
      %v2219 = vpop.f32.mrb[0].mxu0
      %v2220 = vadd.f32 0.0, %v2219
      %v2221 = vpop.f32.mrb[0].mxu0
      %2222 = vdwg.mxu0
      %v2223 = vadd.f32 %v1937, %v2097
      %v2224 = vadd.f32 %v1938, %v2100
      %v2225 = vadd.f32 %v1939, %v2105
      %v2226 = vadd.f32 %v1940, %v2108
      %v2227 = vadd.f32 %v1941, %v2113
      %v2228 = vadd.f32 %v1942, %v2116
      %v2229 = vadd.f32 %v1943, %v2121
      %v2230 = vadd.f32 %v1944, %v2124
      %v2231 = vadd.f32 %v1945, %v2129
      %v2232 = vadd.f32 %v1946, %v2132
      %v2233 = vadd.f32 %v1947, %v2137
      %v2234 = vadd.f32 %v1948, %v2140
      %v2235 = vadd.f32 %v1949, %v2145
      %v2236 = vadd.f32 %v1950, %v2148
      %v2237 = vadd.f32 %v1951, %v2153
      %v2238 = vadd.f32 %v1952, %v2156
      %v2239 = vadd.f32 %v1953, %v2161
      %v2240 = vadd.f32 %v1954, %v2164
      %v2241 = vadd.f32 %v1955, %v2169
      %v2242 = vadd.f32 %v1956, %v2172
      %v2243 = vadd.f32 %v1957, %v2177
      %v2244 = vadd.f32 %v1958, %v2180
      %v2245 = vadd.f32 %v1959, %v2185
      %v2246 = vadd.f32 %v1960, %v2188
      %v2247 = vadd.f32 %v1961, %v2193
      %v2248 = vadd.f32 %v1962, %v2196
      %v2249 = vadd.f32 %v1963, %v2201
      %v2250 = vadd.f32 %v1964, %v2204
      %v2251 = vadd.f32 %v1965, %v2209
      %v2252 = vadd.f32 %v1966, %v2212
      %v2253 = vadd.f32 %v1967, %v2217
      %v2254 = vadd.f32 %v1968, %v2220
      %v2256 = vrot.slane %v248, 5
      %v2257 = vrot.slane %v2256, 4
      %v2258 = vrot.slane %v249, 5
      %v2259 = vsel %vm1270, %v2257, %v2258
      %v2260 = vrot.slane %v2258, 4
      %v2261 = vrot.slane %v250, 5
      %v2262 = vsel %vm1270, %v2260, %v2261
      %s2263 = scalar_lea.vmem %s1, 320
      %v2264 = vld [vmem:[%s2263] sm:$0xf]
      %v2265 = vld [vmem:[%s2263 + $0x4] sm:$0xf]
      %v2266 = vld [vmem:[%s2263 + $0x8] sm:$0xf]
      %v2267 = vld [vmem:[%s2263 + $0xc] sm:$0xf]
      %v2268 = vld [vmem:[%s2263 + $0x10] sm:$0xf]
      %v2269 = vld [vmem:[%s2263 + $0x14] sm:$0xf]
      %v2270 = vld [vmem:[%s2263 + $0x18] sm:$0xf]
      %v2271 = vld [vmem:[%s2263 + $0x1c] sm:$0xf]
      %v2272 = vld [vmem:[%s2263 + $0x20] sm:$0xf]
      %v2273 = vld [vmem:[%s2263 + $0x24] sm:$0xf]
      %v2274 = vld [vmem:[%s2263 + $0x28] sm:$0xf]
      %v2275 = vld [vmem:[%s2263 + $0x2c] sm:$0xf]
      %v2276 = vld [vmem:[%s2263 + $0x30] sm:$0xf]
      %v2277 = vld [vmem:[%s2263 + $0x34] sm:$0xf]
      %v2278 = vld [vmem:[%s2263 + $0x38] sm:$0xf]
      %v2279 = vld [vmem:[%s2263 + $0x3c] sm:$0xf]
      %v2280 = vunpack.c.l.b16 %v2259
      %v2281 = vunpack.c.l.b16 %v2262
      %v2282 = vpack.c.b16 %v2281, %v2280
      %v2300 = vunpack.c.l.b16 %v2264
      %v2301 = vunpack.c.l.b16 %v2265
      %v2302 = vunpack.c.l.b16 %v2266
      %v2303 = vunpack.c.l.b16 %v2267
      %v2304 = vunpack.c.l.b16 %v2268
      %v2305 = vunpack.c.l.b16 %v2269
      %v2306 = vunpack.c.l.b16 %v2270
      %v2307 = vunpack.c.l.b16 %v2271
      %v2308 = vunpack.c.l.b16 %v2272
      %v2309 = vunpack.c.l.b16 %v2273
      %v2310 = vunpack.c.l.b16 %v2274
      %v2311 = vunpack.c.l.b16 %v2275
      %v2312 = vunpack.c.l.b16 %v2276
      %v2313 = vunpack.c.l.b16 %v2277
      %v2314 = vunpack.c.l.b16 %v2278
      %v2315 = vunpack.c.l.b16 %v2279
      %v2316 = vpack.c.b16 %v2301, %v2300
      %v2317 = vpack.c.b16 %v2303, %v2302
      %v2318 = vpack.c.b16 %v2305, %v2304
      %v2319 = vpack.c.b16 %v2307, %v2306
      %v2320 = vpack.c.b16 %v2309, %v2308
      %v2321 = vpack.c.b16 %v2311, %v2310
      %v2322 = vpack.c.b16 %v2313, %v2312
      %v2323 = vpack.c.b16 %v2315, %v2314
      %2332 = vmatprep.subr.bf16.mxu0 0
      %2333 = vmatpush1.bf16.msra.mxu0 %v2316
      %2334 = vmatprep.subr.bf16.mxu0 0
      %2335 = vmatpush1.bf16.msra.mxu0 %v2317
      %2336 = vmatprep.subr.bf16.mxu0 0
      %2337 = vmatpush1.bf16.msra.mxu0 %v2318
      %2338 = vmatprep.subr.bf16.mxu0 0
      %2339 = vmatpush1.bf16.msra.mxu0 %v2319
      %2340 = vmatprep.subr.bf16.mxu0 0
      %2341 = vmatpush1.bf16.msra.mxu0 %v2320
      %2342 = vmatprep.subr.bf16.mxu0 0
      %2343 = vmatpush1.bf16.msra.mxu0 %v2321
      %2344 = vmatprep.subr.bf16.mxu0 0
      %2345 = vmatpush1.bf16.msra.mxu0 %v2322
      %2346 = vmatprep.subr.bf16.mxu0 0
      %2347 = vmatpush1.bf16.msra.mxu0 %v2323
      %2348 = vmatprep.subr.bf16.mxu0 0
      %2349 = vmatpush1.bf16.msra.mxu0 0
      %2350 = vmatprep.subr.bf16.mxu0 0
      %2351 = vmatpush1.bf16.msra.mxu0 0
      %2352 = vmatprep.subr.bf16.mxu0 0
      %2353 = vmatpush1.bf16.msra.mxu0 0
      %2354 = vmatprep.subr.bf16.mxu0 0
      %2355 = vmatpush1.bf16.msra.mxu0 0
      %2356 = vmatprep.subr.bf16.mxu0 0
      %2357 = vmatpush1.bf16.msra.mxu0 0
      %2358 = vmatprep.subr.bf16.mxu0 0
      %2359 = vmatpush1.bf16.msra.mxu0 0
      %2360 = vmatprep.subr.bf16.mxu0 0
      %2361 = vmatpush1.bf16.msra.mxu0 0
      %2362 = vmatprep.subr.bf16.mxu0 0
      %2363 = vmatpush1.bf16.msra.mxu0 0
      %2364 = vmatprep.mubr.bf16.mxu0 0
      %2365 = vmatmul.mubr.bf16.gmra.mrb[0].mxu0 %v1433
      %v2366 = vpop.f32.mrb[0].mxu0
      %v2367 = vadd.f32 0.0, %v2366
      %v2368 = vpop.f32.mrb[0].mxu0
      %v2369 = vpop.f32.mrb[0].mxu0
      %v2370 = vadd.f32 0.0, %v2369
      %v2371 = vpop.f32.mrb[0].mxu0
      %2372 = vmatprep.mubr.bf16.mxu0 0
      %2373 = vmatmul.mubr.bf16.gmra.mrb[0].mxu0 %v1434
      %v2374 = vpop.f32.mrb[0].mxu0
      %v2375 = vadd.f32 0.0, %v2374
      %v2376 = vpop.f32.mrb[0].mxu0
      %v2377 = vpop.f32.mrb[0].mxu0
      %v2378 = vadd.f32 0.0, %v2377
      %v2379 = vpop.f32.mrb[0].mxu0
      %2380 = vmatprep.mubr.bf16.mxu0 0
      %2381 = vmatmul.mubr.bf16.gmra.mrb[0].mxu0 %v1435
      %v2382 = vpop.f32.mrb[0].mxu0
      %v2383 = vadd.f32 0.0, %v2382
      %v2384 = vpop.f32.mrb[0].mxu0
      %v2385 = vpop.f32.mrb[0].mxu0
      %v2386 = vadd.f32 0.0, %v2385
      %v2387 = vpop.f32.mrb[0].mxu0
      %2388 = vmatprep.mubr.bf16.mxu0 0
      %2389 = vmatmul.mubr.bf16.gmra.mrb[0].mxu0 %v1436
      %v2390 = vpop.f32.mrb[0].mxu0
      %v2391 = vadd.f32 0.0, %v2390
      %v2392 = vpop.f32.mrb[0].mxu0
      %v2393 = vpop.f32.mrb[0].mxu0
      %v2394 = vadd.f32 0.0, %v2393
      %v2395 = vpop.f32.mrb[0].mxu0
      %2396 = vmatprep.mubr.bf16.mxu0 0
      %2397 = vmatmul.mubr.bf16.gmra.mrb[0].mxu0 %v1437
      %v2398 = vpop.f32.mrb[0].mxu0
      %v2399 = vadd.f32 0.0, %v2398
      %v2400 = vpop.f32.mrb[0].mxu0
      %v2401 = vpop.f32.mrb[0].mxu0
      %v2402 = vadd.f32 0.0, %v2401
      %v2403 = vpop.f32.mrb[0].mxu0
      %2404 = vmatprep.mubr.bf16.mxu0 0
      %2405 = vmatmul.mubr.bf16.gmra.mrb[0].mxu0 %v1438
      %v2406 = vpop.f32.mrb[0].mxu0
      %v2407 = vadd.f32 0.0, %v2406
      %v2408 = vpop.f32.mrb[0].mxu0
      %v2409 = vpop.f32.mrb[0].mxu0
      %v2410 = vadd.f32 0.0, %v2409
      %v2411 = vpop.f32.mrb[0].mxu0
      %2412 = vmatprep.mubr.bf16.mxu0 0
      %2413 = vmatmul.mubr.bf16.gmra.mrb[0].mxu0 %v1439
      %v2414 = vpop.f32.mrb[0].mxu0
      %v2415 = vadd.f32 0.0, %v2414
      %v2416 = vpop.f32.mrb[0].mxu0
      %v2417 = vpop.f32.mrb[0].mxu0
      %v2418 = vadd.f32 0.0, %v2417
      %v2419 = vpop.f32.mrb[0].mxu0
      %2420 = vmatprep.mubr.bf16.mxu0 0
      %2421 = vmatmul.mubr.bf16.gmra.mrb[0].mxu0 %v1440
      %v2422 = vpop.f32.mrb[0].mxu0
      %v2423 = vadd.f32 0.0, %v2422
      %v2424 = vpop.f32.mrb[0].mxu0
      %v2425 = vpop.f32.mrb[0].mxu0
      %v2426 = vadd.f32 0.0, %v2425
      %v2427 = vpop.f32.mrb[0].mxu0
      %2428 = vmatprep.mubr.bf16.mxu0 0
      %2429 = vmatmul.mubr.bf16.gmra.mrb[0].mxu0 %v1441
      %v2430 = vpop.f32.mrb[0].mxu0
      %v2431 = vadd.f32 0.0, %v2430
      %v2432 = vpop.f32.mrb[0].mxu0
      %v2433 = vpop.f32.mrb[0].mxu0
      %v2434 = vadd.f32 0.0, %v2433
      %v2435 = vpop.f32.mrb[0].mxu0
      %2436 = vmatprep.mubr.bf16.mxu0 0
      %2437 = vmatmul.mubr.bf16.gmra.mrb[0].mxu0 %v1442
      %v2438 = vpop.f32.mrb[0].mxu0
      %v2439 = vadd.f32 0.0, %v2438
      %v2440 = vpop.f32.mrb[0].mxu0
      %v2441 = vpop.f32.mrb[0].mxu0
      %v2442 = vadd.f32 0.0, %v2441
      %v2443 = vpop.f32.mrb[0].mxu0
      %2444 = vmatprep.mubr.bf16.mxu0 0
      %2445 = vmatmul.mubr.bf16.gmra.mrb[0].mxu0 %v1443
      %v2446 = vpop.f32.mrb[0].mxu0
      %v2447 = vadd.f32 0.0, %v2446
      %v2448 = vpop.f32.mrb[0].mxu0
      %v2449 = vpop.f32.mrb[0].mxu0
      %v2450 = vadd.f32 0.0, %v2449
      %v2451 = vpop.f32.mrb[0].mxu0
      %2452 = vmatprep.mubr.bf16.mxu0 0
      %2453 = vmatmul.mubr.bf16.gmra.mrb[0].mxu0 %v1444
      %v2454 = vpop.f32.mrb[0].mxu0
      %v2455 = vadd.f32 0.0, %v2454
      %v2456 = vpop.f32.mrb[0].mxu0
      %v2457 = vpop.f32.mrb[0].mxu0
      %v2458 = vadd.f32 0.0, %v2457
      %v2459 = vpop.f32.mrb[0].mxu0
      %2460 = vmatprep.mubr.bf16.mxu0 0
      %2461 = vmatmul.mubr.bf16.gmra.mrb[0].mxu0 %v1445
      %v2462 = vpop.f32.mrb[0].mxu0
      %v2463 = vadd.f32 0.0, %v2462
      %v2464 = vpop.f32.mrb[0].mxu0
      %v2465 = vpop.f32.mrb[0].mxu0
      %v2466 = vadd.f32 0.0, %v2465
      %v2467 = vpop.f32.mrb[0].mxu0
      %2468 = vmatprep.mubr.bf16.mxu0 0
      %2469 = vmatmul.mubr.bf16.gmra.mrb[0].mxu0 %v1446
      %v2470 = vpop.f32.mrb[0].mxu0
      %v2471 = vadd.f32 0.0, %v2470
      %v2472 = vpop.f32.mrb[0].mxu0
      %v2473 = vpop.f32.mrb[0].mxu0
      %v2474 = vadd.f32 0.0, %v2473
      %v2475 = vpop.f32.mrb[0].mxu0
      %2476 = vmatprep.mubr.bf16.mxu0 0
      %2477 = vmatmul.mubr.bf16.gmra.mrb[0].mxu0 %v1447
      %v2478 = vpop.f32.mrb[0].mxu0
      %v2479 = vadd.f32 0.0, %v2478
      %v2480 = vpop.f32.mrb[0].mxu0
      %v2481 = vpop.f32.mrb[0].mxu0
      %v2482 = vadd.f32 0.0, %v2481
      %v2483 = vpop.f32.mrb[0].mxu0
      %2484 = vmatprep.mubr.bf16.mxu0 0
      %2485 = vmatmul.mubr.bf16.gmra.mrb[0].mxu0 %v2282
      %v2486 = vpop.f32.mrb[0].mxu0
      %v2487 = vadd.f32 0.0, %v2486
      %v2488 = vpop.f32.mrb[0].mxu0
      %v2489 = vpop.f32.mrb[0].mxu0
      %v2490 = vadd.f32 0.0, %v2489
      %v2491 = vpop.f32.mrb[0].mxu0
      %2492 = vdwg.mxu0
      %v2493 = vadd.f32 %v2223, %v2367
      %v2494 = vadd.f32 %v2224, %v2370
      %v2495 = vadd.f32 %v2225, %v2375
      %v2496 = vadd.f32 %v2226, %v2378
      %v2497 = vadd.f32 %v2227, %v2383
      %v2498 = vadd.f32 %v2228, %v2386
      %v2499 = vadd.f32 %v2229, %v2391
      %v2500 = vadd.f32 %v2230, %v2394
      %v2501 = vadd.f32 %v2231, %v2399
      %v2502 = vadd.f32 %v2232, %v2402
      %v2503 = vadd.f32 %v2233, %v2407
      %v2504 = vadd.f32 %v2234, %v2410
      %v2505 = vadd.f32 %v2235, %v2415
      %v2506 = vadd.f32 %v2236, %v2418
      %v2507 = vadd.f32 %v2237, %v2423
      %v2508 = vadd.f32 %v2238, %v2426
      %v2509 = vadd.f32 %v2239, %v2431
      %v2510 = vadd.f32 %v2240, %v2434
      %v2511 = vadd.f32 %v2241, %v2439
      %v2512 = vadd.f32 %v2242, %v2442
      %v2513 = vadd.f32 %v2243, %v2447
      %v2514 = vadd.f32 %v2244, %v2450
      %v2515 = vadd.f32 %v2245, %v2455
      %v2516 = vadd.f32 %v2246, %v2458
      %v2517 = vadd.f32 %v2247, %v2463
      %v2518 = vadd.f32 %v2248, %v2466
      %v2519 = vadd.f32 %v2249, %v2471
      %v2520 = vadd.f32 %v2250, %v2474
      %v2521 = vadd.f32 %v2251, %v2479
      %v2522 = vadd.f32 %v2252, %v2482
      %v2523 = vadd.f32 %v2253, %v2487
      %v2524 = vadd.f32 %v2254, %v2490
      %s2525 = scalar_lea.vmem %s1, 384
      %v2526 = vld [vmem:[%s2525] sm:$0xf]
      %v2527 = vld [vmem:[%s2525 + $0x4] sm:$0xf]
      %v2528 = vld [vmem:[%s2525 + $0x8] sm:$0xf]
      %v2529 = vld [vmem:[%s2525 + $0xc] sm:$0xf]
      %v2530 = vld [vmem:[%s2525 + $0x10] sm:$0xf]
      %v2531 = vld [vmem:[%s2525 + $0x14] sm:$0xf]
      %v2532 = vld [vmem:[%s2525 + $0x18] sm:$0xf]
      %v2533 = vld [vmem:[%s2525 + $0x1c] sm:$0xf]
      %v2534 = vld [vmem:[%s2525 + $0x20] sm:$0xf]
      %v2535 = vld [vmem:[%s2525 + $0x24] sm:$0xf]
      %v2536 = vld [vmem:[%s2525 + $0x28] sm:$0xf]
      %v2537 = vld [vmem:[%s2525 + $0x2c] sm:$0xf]
      %v2538 = vld [vmem:[%s2525 + $0x30] sm:$0xf]
      %v2539 = vld [vmem:[%s2525 + $0x34] sm:$0xf]
      %v2540 = vld [vmem:[%s2525 + $0x38] sm:$0xf]
      %v2541 = vld [vmem:[%s2525 + $0x3c] sm:$0xf]
      %v2544 = vunpack.c.l.b16 %v251
      %v2545 = vunpack.c.l.b16 %v252
      %v2546 = vpack.c.b16 %v2545, %v2544
      %v2564 = vunpack.c.l.b16 %v2526
      %v2565 = vunpack.c.l.b16 %v2527
      %v2566 = vunpack.c.l.b16 %v2528
      %v2567 = vunpack.c.l.b16 %v2529
      %v2568 = vunpack.c.l.b16 %v2530
      %v2569 = vunpack.c.l.b16 %v2531
      %v2570 = vunpack.c.l.b16 %v2532
      %v2571 = vunpack.c.l.b16 %v2533
      %v2572 = vunpack.c.l.b16 %v2534
      %v2573 = vunpack.c.l.b16 %v2535
      %v2574 = vunpack.c.l.b16 %v2536
      %v2575 = vunpack.c.l.b16 %v2537
      %v2576 = vunpack.c.l.b16 %v2538
      %v2577 = vunpack.c.l.b16 %v2539
      %v2578 = vunpack.c.l.b16 %v2540
      %v2579 = vunpack.c.l.b16 %v2541
      %v2580 = vpack.c.b16 %v2565, %v2564
      %v2581 = vpack.c.b16 %v2567, %v2566
      %v2582 = vpack.c.b16 %v2569, %v2568
      %v2583 = vpack.c.b16 %v2571, %v2570
      %v2584 = vpack.c.b16 %v2573, %v2572
      %v2585 = vpack.c.b16 %v2575, %v2574
      %v2586 = vpack.c.b16 %v2577, %v2576
      %v2587 = vpack.c.b16 %v2579, %v2578
      %2596 = vmatprep.subr.bf16.mxu0 0
      %2597 = vmatpush1.bf16.msra.mxu0 %v2580
      %2598 = vmatprep.subr.bf16.mxu0 0
      %2599 = vmatpush1.bf16.msra.mxu0 %v2581
      %2600 = vmatprep.subr.bf16.mxu0 0
      %2601 = vmatpush1.bf16.msra.mxu0 %v2582
      %2602 = vmatprep.subr.bf16.mxu0 0
      %2603 = vmatpush1.bf16.msra.mxu0 %v2583
      %2604 = vmatprep.subr.bf16.mxu0 0
      %2605 = vmatpush1.bf16.msra.mxu0 %v2584
      %2606 = vmatprep.subr.bf16.mxu0 0
      %2607 = vmatpush1.bf16.msra.mxu0 %v2585
      %2608 = vmatprep.subr.bf16.mxu0 0
      %2609 = vmatpush1.bf16.msra.mxu0 %v2586
      %2610 = vmatprep.subr.bf16.mxu0 0
      %2611 = vmatpush1.bf16.msra.mxu0 %v2587
      %2612 = vmatprep.subr.bf16.mxu0 0
      %2613 = vmatpush1.bf16.msra.mxu0 0
      %2614 = vmatprep.subr.bf16.mxu0 0
      %2615 = vmatpush1.bf16.msra.mxu0 0
      %2616 = vmatprep.subr.bf16.mxu0 0
      %2617 = vmatpush1.bf16.msra.mxu0 0
      %2618 = vmatprep.subr.bf16.mxu0 0
      %2619 = vmatpush1.bf16.msra.mxu0 0
      %2620 = vmatprep.subr.bf16.mxu0 0
      %2621 = vmatpush1.bf16.msra.mxu0 0
      %2622 = vmatprep.subr.bf16.mxu0 0
      %2623 = vmatpush1.bf16.msra.mxu0 0
      %2624 = vmatprep.subr.bf16.mxu0 0
      %2625 = vmatpush1.bf16.msra.mxu0 0
      %2626 = vmatprep.subr.bf16.mxu0 0
      %2627 = vmatpush1.bf16.msra.mxu0 0
      %2628 = vmatprep.mubr.bf16.mxu0 0
      %2629 = vmatmul.mubr.bf16.gmra.mrb[0].mxu0 %v1013
      %v2630 = vpop.f32.mrb[0].mxu0
      %v2631 = vadd.f32 0.0, %v2630
      %v2632 = vpop.f32.mrb[0].mxu0
      %v2633 = vpop.f32.mrb[0].mxu0
      %v2634 = vadd.f32 0.0, %v2633
      %v2635 = vpop.f32.mrb[0].mxu0
      %2636 = vmatprep.mubr.bf16.mxu0 0
      %2637 = vmatmul.mubr.bf16.gmra.mrb[0].mxu0 %v1014
      %v2638 = vpop.f32.mrb[0].mxu0
      %v2639 = vadd.f32 0.0, %v2638
      %v2640 = vpop.f32.mrb[0].mxu0
      %v2641 = vpop.f32.mrb[0].mxu0
      %v2642 = vadd.f32 0.0, %v2641
      %v2643 = vpop.f32.mrb[0].mxu0
      %2644 = vmatprep.mubr.bf16.mxu0 0
      %2645 = vmatmul.mubr.bf16.gmra.mrb[0].mxu0 %v1015
      %v2646 = vpop.f32.mrb[0].mxu0
      %v2647 = vadd.f32 0.0, %v2646
      %v2648 = vpop.f32.mrb[0].mxu0
      %v2649 = vpop.f32.mrb[0].mxu0
      %v2650 = vadd.f32 0.0, %v2649
      %v2651 = vpop.f32.mrb[0].mxu0
      %2652 = vmatprep.mubr.bf16.mxu0 0
      %2653 = vmatmul.mubr.bf16.gmra.mrb[0].mxu0 %v1016
      %v2654 = vpop.f32.mrb[0].mxu0
      %v2655 = vadd.f32 0.0, %v2654
      %v2656 = vpop.f32.mrb[0].mxu0
      %v2657 = vpop.f32.mrb[0].mxu0
      %v2658 = vadd.f32 0.0, %v2657
      %v2659 = vpop.f32.mrb[0].mxu0
      %2660 = vmatprep.mubr.bf16.mxu0 0
      %2661 = vmatmul.mubr.bf16.gmra.mrb[0].mxu0 %v1017
      %v2662 = vpop.f32.mrb[0].mxu0
      %v2663 = vadd.f32 0.0, %v2662
      %v2664 = vpop.f32.mrb[0].mxu0
      %v2665 = vpop.f32.mrb[0].mxu0
      %v2666 = vadd.f32 0.0, %v2665
      %v2667 = vpop.f32.mrb[0].mxu0
      %2668 = vmatprep.mubr.bf16.mxu0 0
      %2669 = vmatmul.mubr.bf16.gmra.mrb[0].mxu0 %v1018
      %v2670 = vpop.f32.mrb[0].mxu0
      %v2671 = vadd.f32 0.0, %v2670
      %v2672 = vpop.f32.mrb[0].mxu0
      %v2673 = vpop.f32.mrb[0].mxu0
      %v2674 = vadd.f32 0.0, %v2673
      %v2675 = vpop.f32.mrb[0].mxu0
      %2676 = vmatprep.mubr.bf16.mxu0 0
      %2677 = vmatmul.mubr.bf16.gmra.mrb[0].mxu0 %v1019
      %v2678 = vpop.f32.mrb[0].mxu0
      %v2679 = vadd.f32 0.0, %v2678
      %v2680 = vpop.f32.mrb[0].mxu0
      %v2681 = vpop.f32.mrb[0].mxu0
      %v2682 = vadd.f32 0.0, %v2681
      %v2683 = vpop.f32.mrb[0].mxu0
      %2684 = vmatprep.mubr.bf16.mxu0 0
      %2685 = vmatmul.mubr.bf16.gmra.mrb[0].mxu0 %v1020
      %v2686 = vpop.f32.mrb[0].mxu0
      %v2687 = vadd.f32 0.0, %v2686
      %v2688 = vpop.f32.mrb[0].mxu0
      %v2689 = vpop.f32.mrb[0].mxu0
      %v2690 = vadd.f32 0.0, %v2689
      %v2691 = vpop.f32.mrb[0].mxu0
      %2692 = vmatprep.mubr.bf16.mxu0 0
      %2693 = vmatmul.mubr.bf16.gmra.mrb[0].mxu0 %v1021
      %v2694 = vpop.f32.mrb[0].mxu0
      %v2695 = vadd.f32 0.0, %v2694
      %v2696 = vpop.f32.mrb[0].mxu0
      %v2697 = vpop.f32.mrb[0].mxu0
      %v2698 = vadd.f32 0.0, %v2697
      %v2699 = vpop.f32.mrb[0].mxu0
      %2700 = vmatprep.mubr.bf16.mxu0 0
      %2701 = vmatmul.mubr.bf16.gmra.mrb[0].mxu0 %v1022
      %v2702 = vpop.f32.mrb[0].mxu0
      %v2703 = vadd.f32 0.0, %v2702
      %v2704 = vpop.f32.mrb[0].mxu0
      %v2705 = vpop.f32.mrb[0].mxu0
      %v2706 = vadd.f32 0.0, %v2705
      %v2707 = vpop.f32.mrb[0].mxu0
      %2708 = vmatprep.mubr.bf16.mxu0 0
      %2709 = vmatmul.mubr.bf16.gmra.mrb[0].mxu0 %v1023
      %v2710 = vpop.f32.mrb[0].mxu0
      %v2711 = vadd.f32 0.0, %v2710
      %v2712 = vpop.f32.mrb[0].mxu0
      %v2713 = vpop.f32.mrb[0].mxu0
      %v2714 = vadd.f32 0.0, %v2713
      %v2715 = vpop.f32.mrb[0].mxu0
      %2716 = vmatprep.mubr.bf16.mxu0 0
      %2717 = vmatmul.mubr.bf16.gmra.mrb[0].mxu0 %v1024
      %v2718 = vpop.f32.mrb[0].mxu0
      %v2719 = vadd.f32 0.0, %v2718
      %v2720 = vpop.f32.mrb[0].mxu0
      %v2721 = vpop.f32.mrb[0].mxu0
      %v2722 = vadd.f32 0.0, %v2721
      %v2723 = vpop.f32.mrb[0].mxu0
      %2724 = vmatprep.mubr.bf16.mxu0 0
      %2725 = vmatmul.mubr.bf16.gmra.mrb[0].mxu0 %v1025
      %v2726 = vpop.f32.mrb[0].mxu0
      %v2727 = vadd.f32 0.0, %v2726
      %v2728 = vpop.f32.mrb[0].mxu0
      %v2729 = vpop.f32.mrb[0].mxu0
      %v2730 = vadd.f32 0.0, %v2729
      %v2731 = vpop.f32.mrb[0].mxu0
      %2732 = vmatprep.mubr.bf16.mxu0 0
      %2733 = vmatmul.mubr.bf16.gmra.mrb[0].mxu0 %v1026
      %v2734 = vpop.f32.mrb[0].mxu0
      %v2735 = vadd.f32 0.0, %v2734
      %v2736 = vpop.f32.mrb[0].mxu0
      %v2737 = vpop.f32.mrb[0].mxu0
      %v2738 = vadd.f32 0.0, %v2737
      %v2739 = vpop.f32.mrb[0].mxu0
      %2740 = vmatprep.mubr.bf16.mxu0 0
      %2741 = vmatmul.mubr.bf16.gmra.mrb[0].mxu0 %v1726
      %v2742 = vpop.f32.mrb[0].mxu0
      %v2743 = vadd.f32 0.0, %v2742
      %v2744 = vpop.f32.mrb[0].mxu0
      %v2745 = vpop.f32.mrb[0].mxu0
      %v2746 = vadd.f32 0.0, %v2745
      %v2747 = vpop.f32.mrb[0].mxu0
      %2748 = vmatprep.mubr.bf16.mxu0 0
      %2749 = vmatmul.mubr.bf16.gmra.mrb[0].mxu0 %v2546
      %v2750 = vpop.f32.mrb[0].mxu0
      %v2751 = vadd.f32 0.0, %v2750
      %v2752 = vpop.f32.mrb[0].mxu0
      %v2753 = vpop.f32.mrb[0].mxu0
      %v2754 = vadd.f32 0.0, %v2753
      %v2755 = vpop.f32.mrb[0].mxu0
      %2756 = vdwg.mxu0
      %v2757 = vadd.f32 %v2493, %v2631
      %v2758 = vadd.f32 %v2494, %v2634
      %v2759 = vadd.f32 %v2495, %v2639
      %v2760 = vadd.f32 %v2496, %v2642
      %v2761 = vadd.f32 %v2497, %v2647
      %v2762 = vadd.f32 %v2498, %v2650
      %v2763 = vadd.f32 %v2499, %v2655
      %v2764 = vadd.f32 %v2500, %v2658
      %v2765 = vadd.f32 %v2501, %v2663
      %v2766 = vadd.f32 %v2502, %v2666
      %v2767 = vadd.f32 %v2503, %v2671
      %v2768 = vadd.f32 %v2504, %v2674
      %v2769 = vadd.f32 %v2505, %v2679
      %v2770 = vadd.f32 %v2506, %v2682
      %v2771 = vadd.f32 %v2507, %v2687
      %v2772 = vadd.f32 %v2508, %v2690
      %v2773 = vadd.f32 %v2509, %v2695
      %v2774 = vadd.f32 %v2510, %v2698
      %v2775 = vadd.f32 %v2511, %v2703
      %v2776 = vadd.f32 %v2512, %v2706
      %v2777 = vadd.f32 %v2513, %v2711
      %v2778 = vadd.f32 %v2514, %v2714
      %v2779 = vadd.f32 %v2515, %v2719
      %v2780 = vadd.f32 %v2516, %v2722
      %v2781 = vadd.f32 %v2517, %v2727
      %v2782 = vadd.f32 %v2518, %v2730
      %v2783 = vadd.f32 %v2519, %v2735
      %v2784 = vadd.f32 %v2520, %v2738
      %v2785 = vadd.f32 %v2521, %v2743
      %v2786 = vadd.f32 %v2522, %v2746
      %v2787 = vadd.f32 %v2523, %v2751
      %v2788 = vadd.f32 %v2524, %v2754
      %v2790 = vshrl.u32 %v251, 16
      %v2792 = vrot.slane %v2790, 4
      %v2793 = vshll.u32 %v251, 16
      %v2795 = vrot.slane %v2793, 5
      %v2796 = vor.u32 %v2792, %v2795
      %v2797 = vrot.slane %v2796, 4
      %v2799 = vshll.u32 %v252, 16
      %v2801 = vrot.slane %v2799, 5
      %v2802 = vsel %vm272, %v2797, %v2801
      %v2803 = vshrl.u32 %v252, 16
      %v2805 = vrot.slane %v2803, 4
      %v2806 = vor.u32 %v2805, %v2801
      %v2807 = vrot.slane %v2806, 4
      %v2809 = vshll.u32 %v253, 16
      %v2811 = vrot.slane %v2809, 5
      %v2812 = vsel %vm272, %v2807, %v2811
      %s2813 = scalar_lea.vmem %s1, 448
      %v2814 = vld [vmem:[%s2813] sm:$0xf]
      %v2815 = vld [vmem:[%s2813 + $0x4] sm:$0xf]
      %v2816 = vld [vmem:[%s2813 + $0x8] sm:$0xf]
      %v2817 = vld [vmem:[%s2813 + $0xc] sm:$0xf]
      %v2818 = vld [vmem:[%s2813 + $0x10] sm:$0xf]
      %v2819 = vld [vmem:[%s2813 + $0x14] sm:$0xf]
      %v2820 = vld [vmem:[%s2813 + $0x18] sm:$0xf]
      %v2821 = vld [vmem:[%s2813 + $0x1c] sm:$0xf]
      %v2822 = vld [vmem:[%s2813 + $0x20] sm:$0xf]
      %v2823 = vld [vmem:[%s2813 + $0x24] sm:$0xf]
      %v2824 = vld [vmem:[%s2813 + $0x28] sm:$0xf]
      %v2825 = vld [vmem:[%s2813 + $0x2c] sm:$0xf]
      %v2826 = vld [vmem:[%s2813 + $0x30] sm:$0xf]
      %v2827 = vld [vmem:[%s2813 + $0x34] sm:$0xf]
      %v2828 = vld [vmem:[%s2813 + $0x38] sm:$0xf]
      %v2829 = vld [vmem:[%s2813 + $0x3c] sm:$0xf]
      %v2830 = vunpack.c.l.b16 %v2802
      %v2831 = vunpack.c.l.b16 %v2812
      %v2832 = vpack.c.b16 %v2831, %v2830
      %v2850 = vunpack.c.l.b16 %v2814
      %v2851 = vunpack.c.l.b16 %v2815
      %v2852 = vunpack.c.l.b16 %v2816
      %v2853 = vunpack.c.l.b16 %v2817
      %v2854 = vunpack.c.l.b16 %v2818
      %v2855 = vunpack.c.l.b16 %v2819
      %v2856 = vunpack.c.l.b16 %v2820
      %v2857 = vunpack.c.l.b16 %v2821
      %v2858 = vunpack.c.l.b16 %v2822
      %v2859 = vunpack.c.l.b16 %v2823
      %v2860 = vunpack.c.l.b16 %v2824
      %v2861 = vunpack.c.l.b16 %v2825
      %v2862 = vunpack.c.l.b16 %v2826
      %v2863 = vunpack.c.l.b16 %v2827
      %v2864 = vunpack.c.l.b16 %v2828
      %v2865 = vunpack.c.l.b16 %v2829
      %v2866 = vpack.c.b16 %v2851, %v2850
      %v2867 = vpack.c.b16 %v2853, %v2852
      %v2868 = vpack.c.b16 %v2855, %v2854
      %v2869 = vpack.c.b16 %v2857, %v2856
      %v2870 = vpack.c.b16 %v2859, %v2858
      %v2871 = vpack.c.b16 %v2861, %v2860
      %v2872 = vpack.c.b16 %v2863, %v2862
      %v2873 = vpack.c.b16 %v2865, %v2864
      %2882 = vmatprep.subr.bf16.mxu0 0
      %2883 = vmatpush1.bf16.msra.mxu0 %v2866
      %2884 = vmatprep.subr.bf16.mxu0 0
      %2885 = vmatpush1.bf16.msra.mxu0 %v2867
      %2886 = vmatprep.subr.bf16.mxu0 0
      %2887 = vmatpush1.bf16.msra.mxu0 %v2868
      %2888 = vmatprep.subr.bf16.mxu0 0
      %2889 = vmatpush1.bf16.msra.mxu0 %v2869
      %2890 = vmatprep.subr.bf16.mxu0 0
      %2891 = vmatpush1.bf16.msra.mxu0 %v2870
      %2892 = vmatprep.subr.bf16.mxu0 0
      %2893 = vmatpush1.bf16.msra.mxu0 %v2871
      %2894 = vmatprep.subr.bf16.mxu0 0
      %2895 = vmatpush1.bf16.msra.mxu0 %v2872
      %2896 = vmatprep.subr.bf16.mxu0 0
      %2897 = vmatpush1.bf16.msra.mxu0 %v2873
      %2898 = vmatprep.subr.bf16.mxu0 0
      %2899 = vmatpush1.bf16.msra.mxu0 0
      %2900 = vmatprep.subr.bf16.mxu0 0
      %2901 = vmatpush1.bf16.msra.mxu0 0
      %2902 = vmatprep.subr.bf16.mxu0 0
      %2903 = vmatpush1.bf16.msra.mxu0 0
      %2904 = vmatprep.subr.bf16.mxu0 0
      %2905 = vmatpush1.bf16.msra.mxu0 0
      %2906 = vmatprep.subr.bf16.mxu0 0
      %2907 = vmatpush1.bf16.msra.mxu0 0
      %2908 = vmatprep.subr.bf16.mxu0 0
      %2909 = vmatpush1.bf16.msra.mxu0 0
      %2910 = vmatprep.subr.bf16.mxu0 0
      %2911 = vmatpush1.bf16.msra.mxu0 0
      %2912 = vmatprep.subr.bf16.mxu0 0
      %2913 = vmatpush1.bf16.msra.mxu0 0
      %2914 = vmatprep.mubr.bf16.mxu0 0
      %2915 = vmatmul.mubr.bf16.gmra.mrb[0].mxu0 %v708
      %v2916 = vpop.f32.mrb[0].mxu0
      %v2917 = vadd.f32 0.0, %v2916
      %v2918 = vpop.f32.mrb[0].mxu0
      %v2919 = vpop.f32.mrb[0].mxu0
      %v2920 = vadd.f32 0.0, %v2919
      %v2921 = vpop.f32.mrb[0].mxu0
      %2922 = vmatprep.mubr.bf16.mxu0 0
      %2923 = vmatmul.mubr.bf16.gmra.mrb[0].mxu0 %v709
      %v2924 = vpop.f32.mrb[0].mxu0
      %v2925 = vadd.f32 0.0, %v2924
      %v2926 = vpop.f32.mrb[0].mxu0
      %v2927 = vpop.f32.mrb[0].mxu0
      %v2928 = vadd.f32 0.0, %v2927
      %v2929 = vpop.f32.mrb[0].mxu0
      %2930 = vmatprep.mubr.bf16.mxu0 0
      %2931 = vmatmul.mubr.bf16.gmra.mrb[0].mxu0 %v710
      %v2932 = vpop.f32.mrb[0].mxu0
      %v2933 = vadd.f32 0.0, %v2932
      %v2934 = vpop.f32.mrb[0].mxu0
      %v2935 = vpop.f32.mrb[0].mxu0
      %v2936 = vadd.f32 0.0, %v2935
      %v2937 = vpop.f32.mrb[0].mxu0
      %2938 = vmatprep.mubr.bf16.mxu0 0
      %2939 = vmatmul.mubr.bf16.gmra.mrb[0].mxu0 %v711
      %v2940 = vpop.f32.mrb[0].mxu0
      %v2941 = vadd.f32 0.0, %v2940
      %v2942 = vpop.f32.mrb[0].mxu0
      %v2943 = vpop.f32.mrb[0].mxu0
      %v2944 = vadd.f32 0.0, %v2943
      %v2945 = vpop.f32.mrb[0].mxu0
      %2946 = vmatprep.mubr.bf16.mxu0 0
      %2947 = vmatmul.mubr.bf16.gmra.mrb[0].mxu0 %v712
      %v2948 = vpop.f32.mrb[0].mxu0
      %v2949 = vadd.f32 0.0, %v2948
      %v2950 = vpop.f32.mrb[0].mxu0
      %v2951 = vpop.f32.mrb[0].mxu0
      %v2952 = vadd.f32 0.0, %v2951
      %v2953 = vpop.f32.mrb[0].mxu0
      %2954 = vmatprep.mubr.bf16.mxu0 0
      %2955 = vmatmul.mubr.bf16.gmra.mrb[0].mxu0 %v713
      %v2956 = vpop.f32.mrb[0].mxu0
      %v2957 = vadd.f32 0.0, %v2956
      %v2958 = vpop.f32.mrb[0].mxu0
      %v2959 = vpop.f32.mrb[0].mxu0
      %v2960 = vadd.f32 0.0, %v2959
      %v2961 = vpop.f32.mrb[0].mxu0
      %2962 = vmatprep.mubr.bf16.mxu0 0
      %2963 = vmatmul.mubr.bf16.gmra.mrb[0].mxu0 %v714
      %v2964 = vpop.f32.mrb[0].mxu0
      %v2965 = vadd.f32 0.0, %v2964
      %v2966 = vpop.f32.mrb[0].mxu0
      %v2967 = vpop.f32.mrb[0].mxu0
      %v2968 = vadd.f32 0.0, %v2967
      %v2969 = vpop.f32.mrb[0].mxu0
      %2970 = vmatprep.mubr.bf16.mxu0 0
      %2971 = vmatmul.mubr.bf16.gmra.mrb[0].mxu0 %v715
      %v2972 = vpop.f32.mrb[0].mxu0
      %v2973 = vadd.f32 0.0, %v2972
      %v2974 = vpop.f32.mrb[0].mxu0
      %v2975 = vpop.f32.mrb[0].mxu0
      %v2976 = vadd.f32 0.0, %v2975
      %v2977 = vpop.f32.mrb[0].mxu0
      %2978 = vmatprep.mubr.bf16.mxu0 0
      %2979 = vmatmul.mubr.bf16.gmra.mrb[0].mxu0 %v716
      %v2980 = vpop.f32.mrb[0].mxu0
      %v2981 = vadd.f32 0.0, %v2980
      %v2982 = vpop.f32.mrb[0].mxu0
      %v2983 = vpop.f32.mrb[0].mxu0
      %v2984 = vadd.f32 0.0, %v2983
      %v2985 = vpop.f32.mrb[0].mxu0
      %2986 = vmatprep.mubr.bf16.mxu0 0
      %2987 = vmatmul.mubr.bf16.gmra.mrb[0].mxu0 %v717
      %v2988 = vpop.f32.mrb[0].mxu0
      %v2989 = vadd.f32 0.0, %v2988
      %v2990 = vpop.f32.mrb[0].mxu0
      %v2991 = vpop.f32.mrb[0].mxu0
      %v2992 = vadd.f32 0.0, %v2991
      %v2993 = vpop.f32.mrb[0].mxu0
      %2994 = vmatprep.mubr.bf16.mxu0 0
      %2995 = vmatmul.mubr.bf16.gmra.mrb[0].mxu0 %v718
      %v2996 = vpop.f32.mrb[0].mxu0
      %v2997 = vadd.f32 0.0, %v2996
      %v2998 = vpop.f32.mrb[0].mxu0
      %v2999 = vpop.f32.mrb[0].mxu0
      %v3000 = vadd.f32 0.0, %v2999
      %v3001 = vpop.f32.mrb[0].mxu0
      %3002 = vmatprep.mubr.bf16.mxu0 0
      %3003 = vmatmul.mubr.bf16.gmra.mrb[0].mxu0 %v719
      %v3004 = vpop.f32.mrb[0].mxu0
      %v3005 = vadd.f32 0.0, %v3004
      %v3006 = vpop.f32.mrb[0].mxu0
      %v3007 = vpop.f32.mrb[0].mxu0
      %v3008 = vadd.f32 0.0, %v3007
      %v3009 = vpop.f32.mrb[0].mxu0
      %3010 = vmatprep.mubr.bf16.mxu0 0
      %3011 = vmatmul.mubr.bf16.gmra.mrb[0].mxu0 %v720
      %v3012 = vpop.f32.mrb[0].mxu0
      %v3013 = vadd.f32 0.0, %v3012
      %v3014 = vpop.f32.mrb[0].mxu0
      %v3015 = vpop.f32.mrb[0].mxu0
      %v3016 = vadd.f32 0.0, %v3015
      %v3017 = vpop.f32.mrb[0].mxu0
      %3018 = vmatprep.mubr.bf16.mxu0 0
      %3019 = vmatmul.mubr.bf16.gmra.mrb[0].mxu0 %v721
      %v3020 = vpop.f32.mrb[0].mxu0
      %v3021 = vadd.f32 0.0, %v3020
      %v3022 = vpop.f32.mrb[0].mxu0
      %v3023 = vpop.f32.mrb[0].mxu0
      %v3024 = vadd.f32 0.0, %v3023
      %v3025 = vpop.f32.mrb[0].mxu0
      %3026 = vmatprep.mubr.bf16.mxu0 0
      %3027 = vmatmul.mubr.bf16.gmra.mrb[0].mxu0 %v2012
      %v3028 = vpop.f32.mrb[0].mxu0
      %v3029 = vadd.f32 0.0, %v3028
      %v3030 = vpop.f32.mrb[0].mxu0
      %v3031 = vpop.f32.mrb[0].mxu0
      %v3032 = vadd.f32 0.0, %v3031
      %v3033 = vpop.f32.mrb[0].mxu0
      %3034 = vmatprep.mubr.bf16.mxu0 0
      %3035 = vmatmul.mubr.bf16.gmra.mrb[0].mxu0 %v2832
      %v3036 = vpop.f32.mrb[0].mxu0
      %v3037 = vadd.f32 0.0, %v3036
      %v3038 = vpop.f32.mrb[0].mxu0
      %v3039 = vpop.f32.mrb[0].mxu0
      %v3040 = vadd.f32 0.0, %v3039
      %v3041 = vpop.f32.mrb[0].mxu0
      %3042 = vdwg.mxu0
      %v3043 = vadd.f32 %v2757, %v2917
      %v3044 = vadd.f32 %v2758, %v2920
      %v3045 = vadd.f32 %v2759, %v2925
      %v3046 = vadd.f32 %v2760, %v2928
      %v3047 = vadd.f32 %v2761, %v2933
      %v3048 = vadd.f32 %v2762, %v2936
      %v3049 = vadd.f32 %v2763, %v2941
      %v3050 = vadd.f32 %v2764, %v2944
      %v3051 = vadd.f32 %v2765, %v2949
      %v3052 = vadd.f32 %v2766, %v2952
      %v3053 = vadd.f32 %v2767, %v2957
      %v3054 = vadd.f32 %v2768, %v2960
      %v3055 = vadd.f32 %v2769, %v2965
      %v3056 = vadd.f32 %v2770, %v2968
      %v3057 = vadd.f32 %v2771, %v2973
      %v3058 = vadd.f32 %v2772, %v2976
      %v3059 = vadd.f32 %v2773, %v2981
      %v3060 = vadd.f32 %v2774, %v2984
      %v3061 = vadd.f32 %v2775, %v2989
      %v3062 = vadd.f32 %v2776, %v2992
      %v3063 = vadd.f32 %v2777, %v2997
      %v3064 = vadd.f32 %v2778, %v3000
      %v3065 = vadd.f32 %v2779, %v3005
      %v3066 = vadd.f32 %v2780, %v3008
      %v3067 = vadd.f32 %v2781, %v3013
      %v3068 = vadd.f32 %v2782, %v3016
      %v3069 = vadd.f32 %v2783, %v3021
      %v3070 = vadd.f32 %v2784, %v3024
      %v3071 = vadd.f32 %v2785, %v3029
      %v3072 = vadd.f32 %v2786, %v3032
      %v3073 = vadd.f32 %v2787, %v3037
      %v3074 = vadd.f32 %v2788, %v3040
      %v3076 = vrot.slane %v251, 5
      %v3077 = vrot.slane %v3076, 4
      %v3078 = vrot.slane %v252, 5
      %v3079 = vsel %vm1270, %v3077, %v3078
      %v3080 = vrot.slane %v3078, 4
      %v3081 = vrot.slane %v253, 5
      %v3082 = vsel %vm1270, %v3080, %v3081
      %s3083 = scalar_lea.vmem %s1, 512
      %v3084 = vld [vmem:[%s3083] sm:$0xf]
      %v3085 = vld [vmem:[%s3083 + $0x4] sm:$0xf]
      %v3086 = vld [vmem:[%s3083 + $0x8] sm:$0xf]
      %v3087 = vld [vmem:[%s3083 + $0xc] sm:$0xf]
      %v3088 = vld [vmem:[%s3083 + $0x10] sm:$0xf]
      %v3089 = vld [vmem:[%s3083 + $0x14] sm:$0xf]
      %v3090 = vld [vmem:[%s3083 + $0x18] sm:$0xf]
      %v3091 = vld [vmem:[%s3083 + $0x1c] sm:$0xf]
      %v3092 = vld [vmem:[%s3083 + $0x20] sm:$0xf]
      %v3093 = vld [vmem:[%s3083 + $0x24] sm:$0xf]
      %v3094 = vld [vmem:[%s3083 + $0x28] sm:$0xf]
      %v3095 = vld [vmem:[%s3083 + $0x2c] sm:$0xf]
      %v3096 = vld [vmem:[%s3083 + $0x30] sm:$0xf]
      %v3097 = vld [vmem:[%s3083 + $0x34] sm:$0xf]
      %v3098 = vld [vmem:[%s3083 + $0x38] sm:$0xf]
      %v3099 = vld [vmem:[%s3083 + $0x3c] sm:$0xf]
      %v3100 = vunpack.c.l.b16 %v3079
      %v3101 = vunpack.c.l.b16 %v3082
      %v3102 = vpack.c.b16 %v3101, %v3100
      %v3120 = vunpack.c.l.b16 %v3084
      %v3121 = vunpack.c.l.b16 %v3085
      %v3122 = vunpack.c.l.b16 %v3086
      %v3123 = vunpack.c.l.b16 %v3087
      %v3124 = vunpack.c.l.b16 %v3088
      %v3125 = vunpack.c.l.b16 %v3089
      %v3126 = vunpack.c.l.b16 %v3090
      %v3127 = vunpack.c.l.b16 %v3091
      %v3128 = vunpack.c.l.b16 %v3092
      %v3129 = vunpack.c.l.b16 %v3093
      %v3130 = vunpack.c.l.b16 %v3094
      %v3131 = vunpack.c.l.b16 %v3095
      %v3132 = vunpack.c.l.b16 %v3096
      %v3133 = vunpack.c.l.b16 %v3097
      %v3134 = vunpack.c.l.b16 %v3098
      %v3135 = vunpack.c.l.b16 %v3099
      %v3136 = vpack.c.b16 %v3121, %v3120
      %v3137 = vpack.c.b16 %v3123, %v3122
      %v3138 = vpack.c.b16 %v3125, %v3124
      %v3139 = vpack.c.b16 %v3127, %v3126
      %v3140 = vpack.c.b16 %v3129, %v3128
      %v3141 = vpack.c.b16 %v3131, %v3130
      %v3142 = vpack.c.b16 %v3133, %v3132
      %v3143 = vpack.c.b16 %v3135, %v3134
      %3152 = vmatprep.subr.bf16.mxu0 0
      %3153 = vmatpush1.bf16.msra.mxu0 %v3136
      %3154 = vmatprep.subr.bf16.mxu0 0
      %3155 = vmatpush1.bf16.msra.mxu0 %v3137
      %3156 = vmatprep.subr.bf16.mxu0 0
      %3157 = vmatpush1.bf16.msra.mxu0 %v3138
      %3158 = vmatprep.subr.bf16.mxu0 0
      %3159 = vmatpush1.bf16.msra.mxu0 %v3139
      %3160 = vmatprep.subr.bf16.mxu0 0
      %3161 = vmatpush1.bf16.msra.mxu0 %v3140
      %3162 = vmatprep.subr.bf16.mxu0 0
      %3163 = vmatpush1.bf16.msra.mxu0 %v3141
      %3164 = vmatprep.subr.bf16.mxu0 0
      %3165 = vmatpush1.bf16.msra.mxu0 %v3142
      %3166 = vmatprep.subr.bf16.mxu0 0
      %3167 = vmatpush1.bf16.msra.mxu0 %v3143
      %3168 = vmatprep.subr.bf16.mxu0 0
      %3169 = vmatpush1.bf16.msra.mxu0 0
      %3170 = vmatprep.subr.bf16.mxu0 0
      %3171 = vmatpush1.bf16.msra.mxu0 0
      %3172 = vmatprep.subr.bf16.mxu0 0
      %3173 = vmatpush1.bf16.msra.mxu0 0
      %3174 = vmatprep.subr.bf16.mxu0 0
      %3175 = vmatpush1.bf16.msra.mxu0 0
      %3176 = vmatprep.subr.bf16.mxu0 0
      %3177 = vmatpush1.bf16.msra.mxu0 0
      %3178 = vmatprep.subr.bf16.mxu0 0
      %3179 = vmatpush1.bf16.msra.mxu0 0
      %3180 = vmatprep.subr.bf16.mxu0 0
      %3181 = vmatpush1.bf16.msra.mxu0 0
      %3182 = vmatprep.subr.bf16.mxu0 0
      %3183 = vmatpush1.bf16.msra.mxu0 0
      %3184 = vmatprep.mubr.bf16.mxu0 0
      %3185 = vmatmul.mubr.bf16.gmra.mrb[0].mxu0 %v1434
      %v3186 = vpop.f32.mrb[0].mxu0
      %v3187 = vadd.f32 0.0, %v3186
      %v3188 = vpop.f32.mrb[0].mxu0
      %v3189 = vpop.f32.mrb[0].mxu0
      %v3190 = vadd.f32 0.0, %v3189
      %v3191 = vpop.f32.mrb[0].mxu0
      %3192 = vmatprep.mubr.bf16.mxu0 0
      %3193 = vmatmul.mubr.bf16.gmra.mrb[0].mxu0 %v1435
      %v3194 = vpop.f32.mrb[0].mxu0
      %v3195 = vadd.f32 0.0, %v3194
      %v3196 = vpop.f32.mrb[0].mxu0
      %v3197 = vpop.f32.mrb[0].mxu0
      %v3198 = vadd.f32 0.0, %v3197
      %v3199 = vpop.f32.mrb[0].mxu0
      %3200 = vmatprep.mubr.bf16.mxu0 0
      %3201 = vmatmul.mubr.bf16.gmra.mrb[0].mxu0 %v1436
      %v3202 = vpop.f32.mrb[0].mxu0
      %v3203 = vadd.f32 0.0, %v3202
      %v3204 = vpop.f32.mrb[0].mxu0
      %v3205 = vpop.f32.mrb[0].mxu0
      %v3206 = vadd.f32 0.0, %v3205
      %v3207 = vpop.f32.mrb[0].mxu0
      %3208 = vmatprep.mubr.bf16.mxu0 0
      %3209 = vmatmul.mubr.bf16.gmra.mrb[0].mxu0 %v1437
      %v3210 = vpop.f32.mrb[0].mxu0
      %v3211 = vadd.f32 0.0, %v3210
      %v3212 = vpop.f32.mrb[0].mxu0
      %v3213 = vpop.f32.mrb[0].mxu0
      %v3214 = vadd.f32 0.0, %v3213
      %v3215 = vpop.f32.mrb[0].mxu0
      %3216 = vmatprep.mubr.bf16.mxu0 0
      %3217 = vmatmul.mubr.bf16.gmra.mrb[0].mxu0 %v1438
      %v3218 = vpop.f32.mrb[0].mxu0
      %v3219 = vadd.f32 0.0, %v3218
      %v3220 = vpop.f32.mrb[0].mxu0
      %v3221 = vpop.f32.mrb[0].mxu0
      %v3222 = vadd.f32 0.0, %v3221
      %v3223 = vpop.f32.mrb[0].mxu0
      %3224 = vmatprep.mubr.bf16.mxu0 0
      %3225 = vmatmul.mubr.bf16.gmra.mrb[0].mxu0 %v1439
      %v3226 = vpop.f32.mrb[0].mxu0
      %v3227 = vadd.f32 0.0, %v3226
      %v3228 = vpop.f32.mrb[0].mxu0
      %v3229 = vpop.f32.mrb[0].mxu0
      %v3230 = vadd.f32 0.0, %v3229
      %v3231 = vpop.f32.mrb[0].mxu0
      %3232 = vmatprep.mubr.bf16.mxu0 0
      %3233 = vmatmul.mubr.bf16.gmra.mrb[0].mxu0 %v1440
      %v3234 = vpop.f32.mrb[0].mxu0
      %v3235 = vadd.f32 0.0, %v3234
      %v3236 = vpop.f32.mrb[0].mxu0
      %v3237 = vpop.f32.mrb[0].mxu0
      %v3238 = vadd.f32 0.0, %v3237
      %v3239 = vpop.f32.mrb[0].mxu0
      %3240 = vmatprep.mubr.bf16.mxu0 0
      %3241 = vmatmul.mubr.bf16.gmra.mrb[0].mxu0 %v1441
      %v3242 = vpop.f32.mrb[0].mxu0
      %v3243 = vadd.f32 0.0, %v3242
      %v3244 = vpop.f32.mrb[0].mxu0
      %v3245 = vpop.f32.mrb[0].mxu0
      %v3246 = vadd.f32 0.0, %v3245
      %v3247 = vpop.f32.mrb[0].mxu0
      %3248 = vmatprep.mubr.bf16.mxu0 0
      %3249 = vmatmul.mubr.bf16.gmra.mrb[0].mxu0 %v1442
      %v3250 = vpop.f32.mrb[0].mxu0
      %v3251 = vadd.f32 0.0, %v3250
      %v3252 = vpop.f32.mrb[0].mxu0
      %v3253 = vpop.f32.mrb[0].mxu0
      %v3254 = vadd.f32 0.0, %v3253
      %v3255 = vpop.f32.mrb[0].mxu0
      %3256 = vmatprep.mubr.bf16.mxu0 0
      %3257 = vmatmul.mubr.bf16.gmra.mrb[0].mxu0 %v1443
      %v3258 = vpop.f32.mrb[0].mxu0
      %v3259 = vadd.f32 0.0, %v3258
      %v3260 = vpop.f32.mrb[0].mxu0
      %v3261 = vpop.f32.mrb[0].mxu0
      %v3262 = vadd.f32 0.0, %v3261
      %v3263 = vpop.f32.mrb[0].mxu0
      %3264 = vmatprep.mubr.bf16.mxu0 0
      %3265 = vmatmul.mubr.bf16.gmra.mrb[0].mxu0 %v1444
      %v3266 = vpop.f32.mrb[0].mxu0
      %v3267 = vadd.f32 0.0, %v3266
      %v3268 = vpop.f32.mrb[0].mxu0
      %v3269 = vpop.f32.mrb[0].mxu0
      %v3270 = vadd.f32 0.0, %v3269
      %v3271 = vpop.f32.mrb[0].mxu0
      %3272 = vmatprep.mubr.bf16.mxu0 0
      %3273 = vmatmul.mubr.bf16.gmra.mrb[0].mxu0 %v1445
      %v3274 = vpop.f32.mrb[0].mxu0
      %v3275 = vadd.f32 0.0, %v3274
      %v3276 = vpop.f32.mrb[0].mxu0
      %v3277 = vpop.f32.mrb[0].mxu0
      %v3278 = vadd.f32 0.0, %v3277
      %v3279 = vpop.f32.mrb[0].mxu0
      %3280 = vmatprep.mubr.bf16.mxu0 0
      %3281 = vmatmul.mubr.bf16.gmra.mrb[0].mxu0 %v1446
      %v3282 = vpop.f32.mrb[0].mxu0
      %v3283 = vadd.f32 0.0, %v3282
      %v3284 = vpop.f32.mrb[0].mxu0
      %v3285 = vpop.f32.mrb[0].mxu0
      %v3286 = vadd.f32 0.0, %v3285
      %v3287 = vpop.f32.mrb[0].mxu0
      %3288 = vmatprep.mubr.bf16.mxu0 0
      %3289 = vmatmul.mubr.bf16.gmra.mrb[0].mxu0 %v1447
      %v3290 = vpop.f32.mrb[0].mxu0
      %v3291 = vadd.f32 0.0, %v3290
      %v3292 = vpop.f32.mrb[0].mxu0
      %v3293 = vpop.f32.mrb[0].mxu0
      %v3294 = vadd.f32 0.0, %v3293
      %v3295 = vpop.f32.mrb[0].mxu0
      %3296 = vmatprep.mubr.bf16.mxu0 0
      %3297 = vmatmul.mubr.bf16.gmra.mrb[0].mxu0 %v2282
      %v3298 = vpop.f32.mrb[0].mxu0
      %v3299 = vadd.f32 0.0, %v3298
      %v3300 = vpop.f32.mrb[0].mxu0
      %v3301 = vpop.f32.mrb[0].mxu0
      %v3302 = vadd.f32 0.0, %v3301
      %v3303 = vpop.f32.mrb[0].mxu0
      %3304 = vmatprep.mubr.bf16.mxu0 0
      %3305 = vmatmul.mubr.bf16.gmra.mrb[0].mxu0 %v3102
      %v3306 = vpop.f32.mrb[0].mxu0
      %v3307 = vadd.f32 0.0, %v3306
      %v3308 = vpop.f32.mrb[0].mxu0
      %v3309 = vpop.f32.mrb[0].mxu0
      %v3310 = vadd.f32 0.0, %v3309
      %v3311 = vpop.f32.mrb[0].mxu0
      %3312 = vdwg.mxu0
      %v3313 = vadd.f32 %v3043, %v3187
      %v3314 = vadd.f32 %v3044, %v3190
      %v3315 = vadd.f32 %v3045, %v3195
      %v3316 = vadd.f32 %v3046, %v3198
      %v3317 = vadd.f32 %v3047, %v3203
      %v3318 = vadd.f32 %v3048, %v3206
      %v3319 = vadd.f32 %v3049, %v3211
      %v3320 = vadd.f32 %v3050, %v3214
      %v3321 = vadd.f32 %v3051, %v3219
      %v3322 = vadd.f32 %v3052, %v3222
      %v3323 = vadd.f32 %v3053, %v3227
      %v3324 = vadd.f32 %v3054, %v3230
      %v3325 = vadd.f32 %v3055, %v3235
      %v3326 = vadd.f32 %v3056, %v3238
      %v3327 = vadd.f32 %v3057, %v3243
      %v3328 = vadd.f32 %v3058, %v3246
      %v3329 = vadd.f32 %v3059, %v3251
      %v3330 = vadd.f32 %v3060, %v3254
      %v3331 = vadd.f32 %v3061, %v3259
      %v3332 = vadd.f32 %v3062, %v3262
      %v3333 = vadd.f32 %v3063, %v3267
      %v3334 = vadd.f32 %v3064, %v3270
      %v3335 = vadd.f32 %v3065, %v3275
      %v3336 = vadd.f32 %v3066, %v3278
      %v3337 = vadd.f32 %v3067, %v3283
      %v3338 = vadd.f32 %v3068, %v3286
      %v3339 = vadd.f32 %v3069, %v3291
      %v3340 = vadd.f32 %v3070, %v3294
      %v3341 = vadd.f32 %v3071, %v3299
      %v3342 = vadd.f32 %v3072, %v3302
      %v3343 = vadd.f32 %v3073, %v3307
      %v3344 = vadd.f32 %v3074, %v3310
      %3345 = vst [vmem:[%s192] sm:$0xff] %v3313
      %3346 = vst [vmem:[%s192 + $0x8] sm:$0xff] %v3314
      %3347 = vst [vmem:[%s192 + $0x10] sm:$0xff] %v3315
      %3348 = vst [vmem:[%s192 + $0x18] sm:$0xff] %v3316
      %3349 = vst [vmem:[%s192 + $0x20] sm:$0xff] %v3317
      %3350 = vst [vmem:[%s192 + $0x28] sm:$0xff] %v3318
      %3351 = vst [vmem:[%s192 + $0x30] sm:$0xff] %v3319
      %3352 = vst [vmem:[%s192 + $0x38] sm:$0xff] %v3320
      %3353 = vst [vmem:[%s192 + $0x40] sm:$0xff] %v3321
      %3354 = vst [vmem:[%s192 + $0x48] sm:$0xff] %v3322
      %3355 = vst [vmem:[%s192 + $0x50] sm:$0xff] %v3323
      %3356 = vst [vmem:[%s192 + $0x58] sm:$0xff] %v3324
      %3357 = vst [vmem:[%s192 + $0x60] sm:$0xff] %v3325
      %3358 = vst [vmem:[%s192 + $0x68] sm:$0xff] %v3326
      %3359 = vst [vmem:[%s192 + $0x70] sm:$0xff] %v3327
      %3360 = vst [vmem:[%s192 + $0x78] sm:$0xff] %v3328
      %3361 = vst [vmem:[%s192 + $0x80] sm:$0xff] %v3329
      %3362 = vst [vmem:[%s192 + $0x88] sm:$0xff] %v3330
      %3363 = vst [vmem:[%s192 + $0x90] sm:$0xff] %v3331
      %3364 = vst [vmem:[%s192 + $0x98] sm:$0xff] %v3332
      %3365 = vst [vmem:[%s192 + $0xa0] sm:$0xff] %v3333
      %3366 = vst [vmem:[%s192 + $0xa8] sm:$0xff] %v3334
      %3367 = vst [vmem:[%s192 + $0xb0] sm:$0xff] %v3335
      %3368 = vst [vmem:[%s192 + $0xb8] sm:$0xff] %v3336
      %3369 = vst [vmem:[%s192 + $0xc0] sm:$0xff] %v3337
      %3370 = vst [vmem:[%s192 + $0xc8] sm:$0xff] %v3338
      %3371 = vst [vmem:[%s192 + $0xd0] sm:$0xff] %v3339
      %3372 = vst [vmem:[%s192 + $0xd8] sm:$0xff] %v3340
      %3373 = vst [vmem:[%s192 + $0xe0] sm:$0xff] %v3341
      %3374 = vst [vmem:[%s192 + $0xe8] sm:$0xff] %v3342
      %3375 = vst [vmem:[%s192 + $0xf0] sm:$0xff] %v3343
      %3376 = vst [vmem:[%s192 + $0xf8] sm:$0xff] %v3344
      %v3377 = vld [vmem:[%s3] sm:$0x1]
      %v3378 = vadd.f32 %v3313, %v3314
      %v3379 = vadd.f32 %v3378, %v3315
      %v3380 = vadd.f32 %v3379, %v3316
      %v3381 = vadd.f32 %v3380, %v3317
      %v3382 = vadd.f32 %v3381, %v3318
      %v3383 = vadd.f32 %v3382, %v3319
      %v3384 = vadd.f32 %v3383, %v3320
      %v3385 = vadd.f32 %v3384, %v3321
      %v3386 = vadd.f32 %v3385, %v3322
      %v3387 = vadd.f32 %v3386, %v3323
      %v3388 = vadd.f32 %v3387, %v3324
      %v3389 = vadd.f32 %v3388, %v3325
      %v3390 = vadd.f32 %v3389, %v3326
      %v3391 = vadd.f32 %v3390, %v3327
      %v3392 = vadd.f32 %v3391, %v3328
      %v3393 = vadd.f32 %v3392, %v3329
      %v3394 = vadd.f32 %v3393, %v3330
      %v3395 = vadd.f32 %v3394, %v3331
      %v3396 = vadd.f32 %v3395, %v3332
      %v3397 = vadd.f32 %v3396, %v3333
      %v3398 = vadd.f32 %v3397, %v3334
      %v3399 = vadd.f32 %v3398, %v3335
      %v3400 = vadd.f32 %v3399, %v3336
      %v3401 = vadd.f32 %v3400, %v3337
      %v3402 = vadd.f32 %v3401, %v3338
      %v3403 = vadd.f32 %v3402, %v3339
      %v3404 = vadd.f32 %v3403, %v3340
      %v3405 = vadd.f32 %v3404, %v3341
      %v3406 = vadd.f32 %v3405, %v3342
      %v3407 = vadd.f32 %v3406, %v3343
      %v3408 = vadd.f32 %v3407, %v3344
      %v3409 = vrot.slane %v3408, 4
      %v3410 = vadd.f32 %v3408, %v3409
      %v3411 = vrot.slane %v3410, 2
      %v3412 = vadd.f32 %v3410, %v3411
      %v3413 = vrot.slane %v3412, 1
      %v3414 = vadd.f32 %v3412, %v3413
      %v3415 = vadd.f32 %v3377, %v3414
      %3416 = vst [vmem:[%s3] sm:$0x1] %v3415
      %v3417 = vld [vmem:[%s4] sm:$0x1]
      %v3418 = vmul.f32 %v3313, %v3313
      %v3419 = vmul.f32 %v3314, %v3314
      %v3420 = vmul.f32 %v3315, %v3315
      %v3421 = vmul.f32 %v3316, %v3316
      %v3422 = vmul.f32 %v3317, %v3317
      %v3423 = vmul.f32 %v3318, %v3318
      %v3424 = vmul.f32 %v3319, %v3319
      %v3425 = vmul.f32 %v3320, %v3320
      %v3426 = vmul.f32 %v3321, %v3321
      %v3427 = vmul.f32 %v3322, %v3322
      %v3428 = vmul.f32 %v3323, %v3323
      %v3429 = vmul.f32 %v3324, %v3324
      %v3430 = vmul.f32 %v3325, %v3325
      %v3431 = vmul.f32 %v3326, %v3326
      %v3432 = vmul.f32 %v3327, %v3327
      %v3433 = vmul.f32 %v3328, %v3328
      %v3434 = vmul.f32 %v3329, %v3329
      %v3435 = vmul.f32 %v3330, %v3330
      %v3436 = vmul.f32 %v3331, %v3331
      %v3437 = vmul.f32 %v3332, %v3332
      %v3438 = vmul.f32 %v3333, %v3333
      %v3439 = vmul.f32 %v3334, %v3334
      %v3440 = vmul.f32 %v3335, %v3335
      %v3441 = vmul.f32 %v3336, %v3336
      %v3442 = vmul.f32 %v3337, %v3337
      %v3443 = vmul.f32 %v3338, %v3338
      %v3444 = vmul.f32 %v3339, %v3339
      %v3445 = vmul.f32 %v3340, %v3340
      %v3446 = vmul.f32 %v3341, %v3341
      %v3447 = vmul.f32 %v3342, %v3342
      %v3448 = vmul.f32 %v3343, %v3343
      %v3449 = vmul.f32 %v3344, %v3344
      %v3450 = vadd.f32 %v3418, %v3419
      %v3451 = vadd.f32 %v3450, %v3420
      %v3452 = vadd.f32 %v3451, %v3421
      %v3453 = vadd.f32 %v3452, %v3422
      %v3454 = vadd.f32 %v3453, %v3423
      %v3455 = vadd.f32 %v3454, %v3424
      %v3456 = vadd.f32 %v3455, %v3425
      %v3457 = vadd.f32 %v3456, %v3426
      %v3458 = vadd.f32 %v3457, %v3427
      %v3459 = vadd.f32 %v3458, %v3428
      %v3460 = vadd.f32 %v3459, %v3429
      %v3461 = vadd.f32 %v3460, %v3430
      %v3462 = vadd.f32 %v3461, %v3431
      %v3463 = vadd.f32 %v3462, %v3432
      %v3464 = vadd.f32 %v3463, %v3433
      %v3465 = vadd.f32 %v3464, %v3434
      %v3466 = vadd.f32 %v3465, %v3435
      %v3467 = vadd.f32 %v3466, %v3436
      %v3468 = vadd.f32 %v3467, %v3437
      %v3469 = vadd.f32 %v3468, %v3438
      %v3470 = vadd.f32 %v3469, %v3439
      %v3471 = vadd.f32 %v3470, %v3440
      %v3472 = vadd.f32 %v3471, %v3441
      %v3473 = vadd.f32 %v3472, %v3442
      %v3474 = vadd.f32 %v3473, %v3443
      %v3475 = vadd.f32 %v3474, %v3444
      %v3476 = vadd.f32 %v3475, %v3445
      %v3477 = vadd.f32 %v3476, %v3446
      %v3478 = vadd.f32 %v3477, %v3447
      %v3479 = vadd.f32 %v3478, %v3448
      %v3480 = vadd.f32 %v3479, %v3449
      %v3481 = vrot.slane %v3480, 4
      %v3482 = vadd.f32 %v3480, %v3481
      %v3483 = vrot.slane %v3482, 2
      %v3484 = vadd.f32 %v3482, %v3483
      %v3485 = vrot.slane %v3484, 1
      %v3486 = vadd.f32 %v3484, %v3485
      %v3487 = vadd.f32 %v3417, %v3486
      %3488 = vst [vmem:[%s4] sm:$0x1] %v3487
      %p3489 = scmp.lt.s32.totalorder %s16, 1
      %s3490 = scalar_select %p3489, %s16, 1
      %s3491 = smul.addr %s3490, 32
      %s3492 = smul.addr %s3491, 8
      %s3493 = scalar_lea.vmem %s2, %s3492
      // Predicated region
      $region33: #{basic_block_forward.4} parent=27 // pred_check
        %p3494 = pneg %p81
      $region34: #{basic_block_forward.4} parent=27 // pred_check_branch
        %3496 = sbr.rel (%p3494) target = $region36
      $region35: #{basic_block_forward.4} parent=27 // pred_region
        _
      $region36: #{basic_block_forward.4} parent=27 // pred_fallthru
        _
      // Predicated region
      $region37: #{basic_block_forward.4} parent=27 // pred_check
        %p3497 = pneg %p102
      $region38: #{basic_block_forward.4} parent=27 // pred_check_branch
        %3499 = sbr.rel (%p3497) target = $region40
      $region39: #{basic_block_forward.4} parent=27 // pred_region
        _
      $region40: #{basic_block_forward.4} parent=27 // pred_fallthru
        _
      // Predicated region
      $region41: #{basic_block_forward.4} parent=27 // pred_check
        %p3500 = pneg %p123
      $region42: #{basic_block_forward.4} parent=27 // pred_check_branch
        %3502 = sbr.rel (%p3500) target = $region44
      $region43: #{basic_block_forward.4} parent=27 // pred_region
        _
      $region44: #{basic_block_forward.4} parent=27 // pred_fallthru
        _
      // Predicated region
      $region45: #{basic_block_forward.4} parent=27 // pred_check
        %p3503 = pneg %p102
      $region46: #{basic_block_forward.4} parent=27 // pred_check_branch
        %3505 = sbr.rel (%p3503) target = $region48
      $region47: #{basic_block_forward.4} parent=27 // pred_region
        _
      $region48: #{basic_block_forward.4} parent=27 // pred_fallthru
        _
      // Predicated region
      $region49: #{basic_block_forward.4} parent=27 // pred_check
        %p3506 = pneg %p123
      $region50: #{basic_block_forward.4} parent=27 // pred_check_branch
        %3508 = sbr.rel (%p3506) target = $region52
      $region51: #{basic_block_forward.4} parent=27 // pred_region
        _
      $region52: #{basic_block_forward.4} parent=27 // pred_fallthru
        _
    $region28: #{basic_block_forward.4} parent=5 // pred_fallthru
      _
    %p3509 = scmp.le.s32.totalorder 2, %s11
    // Predicated region
    $region53: #{basic_block_forward.4} parent=5 // pred_check
      %p3510 = pneg %p3509
    $region54: #{basic_block_forward.4} parent=5 // pred_check_branch
      %3512 = sbr.rel (%p3510) target = $region56
    $region55: #{basic_block_forward.4} parent=5 // pred_region
      %s3513 = ssub.s32 %s11, 2
      // Predicated region
      $region57: #{basic_block_forward.4} parent=55 // pred_check
        %p3514 = pneg %p87
      $region58: #{basic_block_forward.4} parent=55 // pred_check_branch
        %3516 = sbr.rel (%p3514) target = $region60
      $region59: #{basic_block_forward.4} parent=55 // pred_region
        %p3517 = scmp.lt.s32.totalorder %s17, 1
        %s3518 = scalar_select %p3517, %s17, 1
        %s3519 = smul.addr %s3518, 32
        %s3520 = smul.addr %s3519, 8
        %s3521 = scalar_lea.vmem %s2, %s3520
      $region60: #{basic_block_forward.4} parent=55 // pred_fallthru
        _
    $region56: #{basic_block_forward.4} parent=5 // pred_fallthru
      _
  $region6: #{basic_block_forward.4} parent=0 // loop_footer
    %s15 = sadd.s32 1, %s11
  $region7: #{basic_block_forward.4} parent=0 // loop_footer_branch
    %10 = sbr.rel target = $region3
  $region8: #{basic_block_forward.4} parent=0 // loop_exit
    _

</llo_original>
